<compile_context>
chip_gen: v5e
topology: v5e:2x2
jax: 0.10.0
libtpu: 0.0.40
codegen_flags: <defaults>
</compile_context>

<pallas_src>
import math

import jax
import jax.numpy as jnp
import numpy as np
from jax.experimental import pallas as pl
from jax.experimental.pallas import tpu as pltpu


# ----------------------------------------------------------------------------
# Config (mirrors the PyTorch args object)
# ----------------------------------------------------------------------------
class Args:
    z_dim = 16
    cc_dim = 2
    dc_dim = 10
    # (out_channels, kernel, stride, padding) per ConvTranspose2d
    layer_G = [(32, 4, 1, 0), (16, 4, 2, 1), (1, 4, 2, 1)]
    use_batchnorm = True
    use_relu = True


# ----------------------------------------------------------------------------
# Parameter init (PyTorch layouts: ConvTranspose2d weight is (Cin, Cout, K, K))
# ----------------------------------------------------------------------------
def init_params(args, key):
    params = []
    cin = args.z_dim + args.cc_dim + args.dc_dim
    for (cout, k, s, p) in args.layer_G:
        key, kw, kb, kg, kbe = jax.random.split(key, 5)
        bound = 1.0 / math.sqrt(cin * k * k)      # PyTorch default init bound
        w = jax.random.uniform(kw, (cin, cout, k, k), jnp.float32, -bound, bound)
        # The kernel uses bf16 MXU operands; round the conv weights once here
        # so the pure-JAX reference consumes identical parameter values.
        w = w.astype(jnp.bfloat16).astype(jnp.float32)
        b = jax.random.uniform(kb, (cout,), jnp.float32, -bound, bound)
        gamma = 1.0 + 0.1 * jax.random.normal(kg, (cout,), jnp.float32)
        beta = 0.1 * jax.random.normal(kbe, (cout,), jnp.float32)
        params.append((w, b, gamma, beta))
        cin = cout
    return params


# ----------------------------------------------------------------------------
# Hoisted weight preprocessing (runs once, off the forward hot path)
# ----------------------------------------------------------------------------
def _dense_convtranspose_operator(w, ih, iw, stride, padding):
    """Dense linear operator of ConvTranspose2d on NHWC-flattened activations.

    Rows are (iy, ix, cin); columns are (oy, ox, cout).  Built directly from
    the definition  out[oy,ox,co] += x[iy,ix,ci] * W[ci,co,ky,kx]  with
    oy = iy*s - p + ky,  ox = ix*s - p + kx.
    """
    w = np.asarray(w)
    cin, cout, k, _ = w.shape
    oh = (ih - 1) * stride - 2 * padding + k
    ow = (iw - 1) * stride - 2 * padding + k
    op = np.zeros((ih, iw, cin, oh, ow, cout), np.float32)
    for iy in range(ih):
        for ix in range(iw):
            for ky in range(k):
                for kx in range(k):
                    oy = iy * stride - padding + ky
                    ox = ix * stride - padding + kx
                    if 0 <= oy < oh and 0 <= ox < ow:
                        op[iy, ix, :, oy, ox, :] += w[:, :, ky, kx]
    return op.reshape(ih * iw * cin, oh * ow * cout), oh, ow


def prepare_generator_inputs(params, args):
    """Per layer: dense GEMM operator (bf16, lane-dense columns), lane-tiled
    bias / gamma / beta (f32), and one-hot channel-selector matrices used for
    the in-kernel BatchNorm reduction.  Returns (operand list, static meta)."""
    n_layers = len(args.layer_G)
    ih = iw = 1                           # InfoGAN latent is spatially 1x1
    operands, meta = [], []
    for i, ((cout, k, s, p), (w, b, gamma, beta)) in enumerate(
            zip(args.layer_G, params)):
        op, oh, ow = _dense_convtranspose_operator(w, ih, iw, s, p)
        f_out = oh * ow * cout            # output columns in (oy, ox, co) order
        operands.append(jnp.asarray(op, jnp.bfloat16))
        operands.append(
            jnp.tile(jnp.asarray(b, jnp.float32), oh * ow).reshape(1, f_out))
        last = (i == n_layers - 1)
        bn = args.use_batchnorm and not last
        if bn:
            operands.append(
                jnp.tile(jnp.asarray(gamma, jnp.float32), oh * ow).reshape(1, f_out))
            operands.append(
                jnp.tile(jnp.asarray(beta, jnp.float32), oh * ow).reshape(1, f_out))
            sel = jnp.tile(jnp.eye(cout, dtype=jnp.float32), (oh * ow, 1))
            operands.append(sel)          # [F, Cout]  (col j belongs to ch j%Cout)
            operands.append(sel.T)        # [Cout, F]  broadcast back to lanes
        act = "tanh" if last else ("relu" if args.use_relu else "sigmoid")
        meta.append(dict(bn=bn, act=act, ohw=oh * ow, oh=oh, ow=ow,
                         cout=cout, f_out=f_out))
        ih, iw = oh, ow
    return operands, meta


# ----------------------------------------------------------------------------
# The fused Pallas kernel: 3x (GEMM + bias [+ BN] + activation), all in VMEM.
# ----------------------------------------------------------------------------
def _build_generator_kernel(meta, n_batch, eps=1e-5):
    def kernel(*refs):
        o_ref = refs[-1]
        x = refs[0][...].astype(jnp.float32)          # [N, Cin0]
        idx = 1
        for m in meta:
            w_ref, b_ref = refs[idx], refs[idx + 1]
            idx += 2
            # MXU GEMM: bf16 operands, f32 accumulation; lane-dense output.
            y = jnp.dot(x.astype(jnp.bfloat16), w_ref[...],
                        preferred_element_type=jnp.float32)
            y = y + b_ref[...]                        # f32 epilogue
            if m["bn"]:
                g_ref, be_ref, s_ref, st_ref = refs[idx:idx + 4]
                idx += 4
                sel, selt = s_ref[...], st_ref[...]
                inv_count = 1.0 / float(n_batch * m["ohw"])
                # Per-channel mean via lane-axis (selector matmul) reduction.
                col_sum = jnp.sum(y, axis=0, keepdims=True)              # [1,F]
                mean_c = jnp.dot(col_sum, sel,
                                 preferred_element_type=jnp.float32) * inv_count
                mean_f = jnp.dot(mean_c, selt,
                                 preferred_element_type=jnp.float32)    # [1,F]
                cen = y - mean_f
                # Two-pass (x-mean)^2 variance (avoids E[x^2]-E[x]^2 cancellation).
                sq_sum = jnp.sum(cen * cen, axis=0, keepdims=True)
                var_c = jnp.dot(sq_sum, sel,
                                preferred_element_type=jnp.float32) * inv_count
                var_f = jnp.dot(var_c, selt,
                                preferred_element_type=jnp.float32)
                y = cen * (g_ref[...] * jax.lax.rsqrt(var_f + eps)) + be_ref[...]
            if m["act"] == "relu":
                y = jnp.maximum(y, 0.0)
            elif m["act"] == "sigmoid":
                y = jax.nn.sigmoid(y)
            elif m["act"] == "tanh":
                y = jnp.tanh(y)
            x = y
        o_ref[...] = x.astype(o_ref.dtype)
    return kernel


def make_generator_forward(params, args, n_batch):
    operands, meta = prepare_generator_inputs(params, args)
    kernel = _build_generator_kernel(meta, n_batch)
    last = meta[-1]
    vmem_spec = pl.BlockSpec(memory_space=pltpu.MemorySpace.VMEM)

    fused = pl.pallas_call(
        kernel,
        out_shape=jax.ShapeDtypeStruct((n_batch, last["f_out"]), jnp.float32),
        # Single invocation (no grid): every operand fully resident in VMEM.
        in_specs=[vmem_spec] * (1 + len(operands)),
        out_specs=vmem_spec,
    )

    @jax.jit
    def forward(z_nchw):
        assert z_nchw.ndim == 4 and z_nchw.shape[2] == 1 and z_nchw.shape[3] == 1
        n = z_nchw.shape[0]
        z2d = z_nchw.reshape(n, -1).astype(jnp.float32)   # 1x1 latent -> [N, Cin]
        out2d = fused(z2d, *operands)                     # [N, OH*OW*Cout]
        out = out2d.reshape(n, last["oh"], last["ow"], last["cout"])
        return jnp.transpose(out, (0, 3, 1, 2))           # NHWC -> NCHW
    return forward


# ----------------------------------------------------------------------------
# Pure-JAX reference (same math as the PyTorch forward in training mode)
# ----------------------------------------------------------------------------
def reference_forward(x_nchw, params, args):
    x = x_nchw.astype(jnp.float32)
    n_layers = len(args.layer_G)
    for i, ((cout, k, s, p), (w, b, gamma, beta)) in enumerate(
            zip(args.layer_G, params)):
        w_conv = jnp.transpose(w[:, :, ::-1, ::-1], (1, 0, 2, 3))  # OIHW
        x = jax.lax.conv_general_dilated(
            x, w_conv, window_strides=(1, 1),
            padding=[(k - 1 - p, k - 1 - p)] * 2,
            lhs_dilation=(s, s),
            dimension_numbers=("NCHW", "OIHW", "NCHW"))
        x = x + b.reshape(1, -1, 1, 1)
        last = (i == n_layers - 1)
        if last:
            x = jnp.tanh(x)
        else:
            if args.use_batchnorm:
                mean = jnp.mean(x, axis=(0, 2, 3), keepdims=True)
                var = jnp.mean(jnp.square(x - mean), axis=(0, 2, 3), keepdims=True)
                x = (x - mean) * jax.lax.rsqrt(var + 1e-5)
                x = x * gamma.reshape(1, -1, 1, 1) + beta.reshape(1, -1, 1, 1)
            x = jnp.maximum(x, 0.0) if args.use_relu else jax.nn.sigmoid(x)
    return x


if __name__ == "__main__":
    args = Args()
    key = jax.random.PRNGKey(0)
    key, kz, kp = jax.random.split(key, 3)

    params = init_params(args, kp)

    in_ch = args.z_dim + args.cc_dim + args.dc_dim            # 28
    n_batch = 2
    z = jax.random.normal(kz, (n_batch, in_ch, 1, 1), jnp.float32)  # NCHW latent

    forward = make_generator_forward(params, args, n_batch)
    out = jax.block_until_ready(forward(z))
    assert out.shape == (n_batch, 1, 16, 16), out.shape
    assert bool(jnp.all(jnp.isfinite(out)))

    ref = jax.block_until_ready(reference_forward(z, params, args))
    # Tolerance covers bf16 MXU operands (activations + weights) with f32
    # accumulation / epilogue against the full-f32 reference.
    assert bool(jnp.allclose(out, ref, atol=2e-2, rtol=2e-2)), \
        float(jnp.max(jnp.abs(out - ref)))

    print("KERNEL_OK")
</pallas_src>

<mosaic_0001>
module attributes {stable_mosaic.version = 11 : i64} {
  func.func @kernel(%arg0: memref<2x28xf32, #tpu.memory_space<vmem>>, %arg1: memref<28x512xbf16, #tpu.memory_space<vmem>>, %arg2: memref<1x512xf32, #tpu.memory_space<vmem>>, %arg3: memref<1x512xf32, #tpu.memory_space<vmem>>, %arg4: memref<1x512xf32, #tpu.memory_space<vmem>>, %arg5: memref<512x32xf32, #tpu.memory_space<vmem>>, %arg6: memref<32x512xf32, #tpu.memory_space<vmem>>, %arg7: memref<512x1024xbf16, #tpu.memory_space<vmem>>, %arg8: memref<1x1024xf32, #tpu.memory_space<vmem>>, %arg9: memref<1x1024xf32, #tpu.memory_space<vmem>>, %arg10: memref<1x1024xf32, #tpu.memory_space<vmem>>, %arg11: memref<1024x16xf32, #tpu.memory_space<vmem>>, %arg12: memref<16x1024xf32, #tpu.memory_space<vmem>>, %arg13: memref<1024x256xbf16, #tpu.memory_space<vmem>>, %arg14: memref<1x256xf32, #tpu.memory_space<vmem>>, %arg15: memref<2x256xf32, #tpu.memory_space<vmem>>) attributes {dimension_semantics = [], scalar_prefetch = 0 : i64, scratch_operands = 0 : i64, tpu.core_type = #tpu.core_type<tc>} {
    %c0 = arith.constant 0 : index
    %c0_0 = arith.constant 0 : index
    %0 = vector.load %arg0[%c0, %c0_0] : memref<2x28xf32, #tpu.memory_space<vmem>>, vector<2x28xf32>
    %1 = arith.truncf %0 : vector<2x28xf32> to vector<2x28xbf16>
    %c0_1 = arith.constant 0 : index
    %c0_2 = arith.constant 0 : index
    %2 = vector.load %arg1[%c0_1, %c0_2] : memref<28x512xbf16, #tpu.memory_space<vmem>>, vector<28x512xbf16>
    %cst = arith.constant dense<0.000000e+00> : vector<2x512xf32>
    %3 = tpu.matmul %1, %2, %cst {dimension_numbers = #tpu.dot_dimension_numbers<[1], [0], [0], [1], [0, 0, 1, 1], [], []>} : vector<2x28xbf16>, vector<28x512xbf16>, vector<2x512xf32> -> vector<2x512xf32>
    %c0_3 = arith.constant 0 : index
    %c0_4 = arith.constant 0 : index
    %4 = vector.load %arg2[%c0_3, %c0_4] : memref<1x512xf32, #tpu.memory_space<vmem>>, vector<1x512xf32>
    %5 = vector.broadcast %4 : vector<1x512xf32> to vector<2x512xf32>
    %6 = arith.addf %3, %5 : vector<2x512xf32>
    %c0_5 = arith.constant 0 : index
    %c0_6 = arith.constant 0 : index
    %7 = vector.load %arg5[%c0_5, %c0_6] : memref<512x32xf32, #tpu.memory_space<vmem>>, vector<512x32xf32>
    %c0_7 = arith.constant 0 : index
    %c0_8 = arith.constant 0 : index
    %8 = vector.load %arg6[%c0_7, %c0_8] : memref<32x512xf32, #tpu.memory_space<vmem>>, vector<32x512xf32>
    %cst_9 = arith.constant dense<0.000000e+00> : vector<512xf32>
    %9 = vector.multi_reduction <add>, %6, %cst_9 [0] : vector<2x512xf32> to vector<512xf32>
    %10 = vector.shape_cast %9 : vector<512xf32> to vector<1x512xf32>
    %cst_10 = arith.constant dense<0.000000e+00> : vector<1x32xf32>
    %11 = tpu.matmul %10, %7, %cst_10 {dimension_numbers = #tpu.dot_dimension_numbers<[1], [0], [0], [1], [0, 0, 1, 1], [], []>} : vector<1x512xf32>, vector<512x32xf32>, vector<1x32xf32> -> vector<1x32xf32>
    %cst_11 = arith.constant 3.125000e-02 : f32
    %12 = vector.broadcast %cst_11 : f32 to vector<1x32xf32>
    %13 = arith.mulf %11, %12 : vector<1x32xf32>
    %cst_12 = arith.constant dense<0.000000e+00> : vector<1x512xf32>
    %14 = tpu.matmul %13, %8, %cst_12 {dimension_numbers = #tpu.dot_dimension_numbers<[1], [0], [0], [1], [0, 0, 1, 1], [], []>} : vector<1x32xf32>, vector<32x512xf32>, vector<1x512xf32> -> vector<1x512xf32>
    %15 = vector.broadcast %14 : vector<1x512xf32> to vector<2x512xf32>
    %16 = arith.subf %6, %15 : vector<2x512xf32>
    %17 = arith.mulf %16, %16 : vector<2x512xf32>
    %cst_13 = arith.constant dense<0.000000e+00> : vector<512xf32>
    %18 = vector.multi_reduction <add>, %17, %cst_13 [0] : vector<2x512xf32> to vector<512xf32>
    %19 = vector.shape_cast %18 : vector<512xf32> to vector<1x512xf32>
    %cst_14 = arith.constant dense<0.000000e+00> : vector<1x32xf32>
    %20 = tpu.matmul %19, %7, %cst_14 {dimension_numbers = #tpu.dot_dimension_numbers<[1], [0], [0], [1], [0, 0, 1, 1], [], []>} : vector<1x512xf32>, vector<512x32xf32>, vector<1x32xf32> -> vector<1x32xf32>
    %cst_15 = arith.constant 3.125000e-02 : f32
    %21 = vector.broadcast %cst_15 : f32 to vector<1x32xf32>
    %22 = arith.mulf %20, %21 : vector<1x32xf32>
    %cst_16 = arith.constant dense<0.000000e+00> : vector<1x512xf32>
    %23 = tpu.matmul %22, %8, %cst_16 {dimension_numbers = #tpu.dot_dimension_numbers<[1], [0], [0], [1], [0, 0, 1, 1], [], []>} : vector<1x32xf32>, vector<32x512xf32>, vector<1x512xf32> -> vector<1x512xf32>
    %c0_17 = arith.constant 0 : index
    %c0_18 = arith.constant 0 : index
    %24 = vector.load %arg3[%c0_17, %c0_18] : memref<1x512xf32, #tpu.memory_space<vmem>>, vector<1x512xf32>
    %cst_19 = arith.constant 9.99999974E-6 : f32
    %25 = vector.broadcast %cst_19 : f32 to vector<1x512xf32>
    %26 = arith.addf %23, %25 : vector<1x512xf32>
    %27 = math.rsqrt %26 : vector<1x512xf32>
    %28 = arith.mulf %24, %27 : vector<1x512xf32>
    %29 = vector.broadcast %28 : vector<1x512xf32> to vector<2x512xf32>
    %30 = arith.mulf %16, %29 : vector<2x512xf32>
    %c0_20 = arith.constant 0 : index
    %c0_21 = arith.constant 0 : index
    %31 = vector.load %arg4[%c0_20, %c0_21] : memref<1x512xf32, #tpu.memory_space<vmem>>, vector<1x512xf32>
    %32 = vector.broadcast %31 : vector<1x512xf32> to vector<2x512xf32>
    %33 = arith.addf %30, %32 : vector<2x512xf32>
    %cst_22 = arith.constant 0.000000e+00 : f32
    %34 = vector.broadcast %cst_22 : f32 to vector<2x512xf32>
    %35 = arith.maximumf %33, %34 : vector<2x512xf32>
    %36 = arith.truncf %35 : vector<2x512xf32> to vector<2x512xbf16>
    %c0_23 = arith.constant 0 : index
    %c0_24 = arith.constant 0 : index
    %37 = vector.load %arg7[%c0_23, %c0_24] : memref<512x1024xbf16, #tpu.memory_space<vmem>>, vector<512x1024xbf16>
    %cst_25 = arith.constant dense<0.000000e+00> : vector<2x1024xf32>
    %38 = tpu.matmul %36, %37, %cst_25 {dimension_numbers = #tpu.dot_dimension_numbers<[1], [0], [0], [1], [0, 0, 1, 1], [], []>} : vector<2x512xbf16>, vector<512x1024xbf16>, vector<2x1024xf32> -> vector<2x1024xf32>
    %c0_26 = arith.constant 0 : index
    %c0_27 = arith.constant 0 : index
    %39 = vector.load %arg8[%c0_26, %c0_27] : memref<1x1024xf32, #tpu.memory_space<vmem>>, vector<1x1024xf32>
    %40 = vector.broadcast %39 : vector<1x1024xf32> to vector<2x1024xf32>
    %41 = arith.addf %38, %40 : vector<2x1024xf32>
    %c0_28 = arith.constant 0 : index
    %c0_29 = arith.constant 0 : index
    %42 = vector.load %arg11[%c0_28, %c0_29] : memref<1024x16xf32, #tpu.memory_space<vmem>>, vector<1024x16xf32>
    %c0_30 = arith.constant 0 : index
    %c0_31 = arith.constant 0 : index
    %43 = vector.load %arg12[%c0_30, %c0_31] : memref<16x1024xf32, #tpu.memory_space<vmem>>, vector<16x1024xf32>
    %cst_32 = arith.constant dense<0.000000e+00> : vector<1024xf32>
    %44 = vector.multi_reduction <add>, %41, %cst_32 [0] : vector<2x1024xf32> to vector<1024xf32>
    %45 = vector.shape_cast %44 : vector<1024xf32> to vector<1x1024xf32>
    %cst_33 = arith.constant dense<0.000000e+00> : vector<1x16xf32>
    %46 = tpu.matmul %45, %42, %cst_33 {dimension_numbers = #tpu.dot_dimension_numbers<[1], [0], [0], [1], [0, 0, 1, 1], [], []>} : vector<1x1024xf32>, vector<1024x16xf32>, vector<1x16xf32> -> vector<1x16xf32>
    %cst_34 = arith.constant 7.812500e-03 : f32
    %47 = vector.broadcast %cst_34 : f32 to vector<1x16xf32>
    %48 = arith.mulf %46, %47 : vector<1x16xf32>
    %cst_35 = arith.constant dense<0.000000e+00> : vector<1x1024xf32>
    %49 = tpu.matmul %48, %43, %cst_35 {dimension_numbers = #tpu.dot_dimension_numbers<[1], [0], [0], [1], [0, 0, 1, 1], [], []>} : vector<1x16xf32>, vector<16x1024xf32>, vector<1x1024xf32> -> vector<1x1024xf32>
    %50 = vector.broadcast %49 : vector<1x1024xf32> to vector<2x1024xf32>
    %51 = arith.subf %41, %50 : vector<2x1024xf32>
    %52 = arith.mulf %51, %51 : vector<2x1024xf32>
    %cst_36 = arith.constant dense<0.000000e+00> : vector<1024xf32>
    %53 = vector.multi_reduction <add>, %52, %cst_36 [0] : vector<2x1024xf32> to vector<1024xf32>
    %54 = vector.shape_cast %53 : vector<1024xf32> to vector<1x1024xf32>
    %cst_37 = arith.constant dense<0.000000e+00> : vector<1x16xf32>
    %55 = tpu.matmul %54, %42, %cst_37 {dimension_numbers = #tpu.dot_dimension_numbers<[1], [0], [0], [1], [0, 0, 1, 1], [], []>} : vector<1x1024xf32>, vector<1024x16xf32>, vector<1x16xf32> -> vector<1x16xf32>
    %cst_38 = arith.constant 7.812500e-03 : f32
    %56 = vector.broadcast %cst_38 : f32 to vector<1x16xf32>
    %57 = arith.mulf %55, %56 : vector<1x16xf32>
    %cst_39 = arith.constant dense<0.000000e+00> : vector<1x1024xf32>
    %58 = tpu.matmul %57, %43, %cst_39 {dimension_numbers = #tpu.dot_dimension_numbers<[1], [0], [0], [1], [0, 0, 1, 1], [], []>} : vector<1x16xf32>, vector<16x1024xf32>, vector<1x1024xf32> -> vector<1x1024xf32>
    %c0_40 = arith.constant 0 : index
    %c0_41 = arith.constant 0 : index
    %59 = vector.load %arg9[%c0_40, %c0_41] : memref<1x1024xf32, #tpu.memory_space<vmem>>, vector<1x1024xf32>
    %cst_42 = arith.constant 9.99999974E-6 : f32
    %60 = vector.broadcast %cst_42 : f32 to vector<1x1024xf32>
    %61 = arith.addf %58, %60 : vector<1x1024xf32>
    %62 = math.rsqrt %61 : vector<1x1024xf32>
    %63 = arith.mulf %59, %62 : vector<1x1024xf32>
    %64 = vector.broadcast %63 : vector<1x1024xf32> to vector<2x1024xf32>
    %65 = arith.mulf %51, %64 : vector<2x1024xf32>
    %c0_43 = arith.constant 0 : index
    %c0_44 = arith.constant 0 : index
    %66 = vector.load %arg10[%c0_43, %c0_44] : memref<1x1024xf32, #tpu.memory_space<vmem>>, vector<1x1024xf32>
    %67 = vector.broadcast %66 : vector<1x1024xf32> to vector<2x1024xf32>
    %68 = arith.addf %65, %67 : vector<2x1024xf32>
    %cst_45 = arith.constant 0.000000e+00 : f32
    %69 = vector.broadcast %cst_45 : f32 to vector<2x1024xf32>
    %70 = arith.maximumf %68, %69 : vector<2x1024xf32>
    %71 = arith.truncf %70 : vector<2x1024xf32> to vector<2x1024xbf16>
    %c0_46 = arith.constant 0 : index
    %c0_47 = arith.constant 0 : index
    %72 = vector.load %arg13[%c0_46, %c0_47] : memref<1024x256xbf16, #tpu.memory_space<vmem>>, vector<1024x256xbf16>
    %cst_48 = arith.constant dense<0.000000e+00> : vector<2x256xf32>
    %73 = tpu.matmul %71, %72, %cst_48 {dimension_numbers = #tpu.dot_dimension_numbers<[1], [0], [0], [1], [0, 0, 1, 1], [], []>} : vector<2x1024xbf16>, vector<1024x256xbf16>, vector<2x256xf32> -> vector<2x256xf32>
    %c0_49 = arith.constant 0 : index
    %c0_50 = arith.constant 0 : index
    %74 = vector.load %arg14[%c0_49, %c0_50] : memref<1x256xf32, #tpu.memory_space<vmem>>, vector<1x256xf32>
    %75 = vector.broadcast %74 : vector<1x256xf32> to vector<2x256xf32>
    %76 = arith.addf %73, %75 : vector<2x256xf32>
    %77 = math.tanh %76 : vector<2x256xf32>
    %c0_51 = arith.constant 0 : index
    %c0_52 = arith.constant 0 : index
    %78 = vector.load %arg15[%c0_51, %c0_52] : memref<2x256xf32, #tpu.memory_space<vmem>>, vector<2x256xf32>
    tpu.vector_store %arg15[%c0_51, %c0_52], %77 {strides = array<i32>} : memref<2x256xf32, #tpu.memory_space<vmem>>, vector<2x256xf32>,
    return
  }
}

</mosaic_0001>

<llo_original>
// kernel: forward.1
$region0: #{forward.1}
  #allocation0 [shape = 'u32[]', space=smem, size = 0x4, offset = 0x4, fixed_abs, tag = 'smem constant byte address 0x4 - core index']
  #allocation1 [shape = 'u32[72,128]{1,0:T(1,128)}', space=vmem, size = 0x9000, scoped, tag = 'internal scratch']
  %s0 = inlined_call_operand.vmem [shape: f32[2,28], index: 0, kind: input, shape index: {}]
  %s1 = inlined_call_operand.hbm [shape: bf16[28,512], index: 1, kind: input, shape index: {}]
  %s2 = inlined_call_operand.hbm [shape: f32[1,512], index: 2, kind: input, shape index: {}]
  %s3 = inlined_call_operand.hbm [shape: f32[1,512], index: 3, kind: input, shape index: {}]
  %s4 = inlined_call_operand.vmem [shape: f32[1,512], index: 4, kind: input, shape index: {}]
  %s5 = inlined_call_operand.hbm [shape: f32[512,32], index: 5, kind: input, shape index: {}]
  %s6 = inlined_call_operand.hbm [shape: f32[32,512], index: 6, kind: input, shape index: {}]
  %s7 = inlined_call_operand.hbm [shape: bf16[512,1024], index: 7, kind: input, shape index: {}]
  %s8 = inlined_call_operand.hbm [shape: f32[1,1024], index: 8, kind: input, shape index: {}]
  %s9 = inlined_call_operand.hbm [shape: f32[1,1024], index: 9, kind: input, shape index: {}]
  %s10 = inlined_call_operand.vmem [shape: f32[1,1024], index: 10, kind: input, shape index: {}]
  %s11 = inlined_call_operand.hbm [shape: f32[1024,16], index: 11, kind: input, shape index: {}]
  %s12 = inlined_call_operand.hbm [shape: f32[16,1024], index: 12, kind: input, shape index: {}]
  %s13 = inlined_call_operand.hbm [shape: bf16[1024,256], index: 13, kind: input, shape index: {}]
  %s14 = inlined_call_operand.vmem [shape: f32[1,256], index: 14, kind: input, shape index: {}]
  %s15 = inlined_call_operand.vmem [shape: f32[2,256], index: 15, kind: output, shape index: {}]
  %s16 = sld [smem:[#allocation0]]
  $region114: #{forward.1} parent=0
    _
  %s18 = ssub.s32 1, %s16
  %s19 = scalar_select 0, %s18, %s16
  $region1: #{forward.1} parent=0
    #allocation2 [shape = 'u8[32768]{0}', space=vmem, size = 0x8000, scoped, tag = 'input window, operand 1, single buffered']
    #allocation3 [shape = 's32[1]{0}', space=sflag, size = 0x4, scoped, tag = 'scoped memory for forward.1']
    #allocation4 [shape = 'u8[2048]{0}', space=vmem, size = 0x800, scoped, tag = 'input window, operand 2, single buffered']
    #allocation5 [shape = 's32[1]{0}', space=sflag, size = 0x4, scoped, tag = 'scoped memory for forward.1']
    #allocation6 [shape = 'u8[2048]{0}', space=vmem, size = 0x800, scoped, tag = 'input window, operand 3, single buffered']
    #allocation7 [shape = 'u8[262144]{0}', space=vmem, size = 0x40000, scoped, tag = 'input window, operand 5, single buffered']
    #allocation8 [shape = 's32[1]{0}', space=sflag, size = 0x4, scoped, tag = 'scoped memory for forward.1']
    #allocation9 [shape = 'u8[65536]{0}', space=vmem, size = 0x10000, scoped, tag = 'input window, operand 6, single buffered']
    #allocation10 [shape = 'u8[1048576]{0}', space=vmem, size = 0x100000, scoped, tag = 'input window, operand 7, single buffered']
    #allocation11 [shape = 's32[1]{0}', space=sflag, size = 0x4, scoped, tag = 'scoped memory for forward.1']
    #allocation12 [shape = 'u8[4096]{0}', space=vmem, size = 0x1000, scoped, tag = 'input window, operand 8, single buffered']
    #allocation13 [shape = 'u8[4096]{0}', space=vmem, size = 0x1000, scoped, tag = 'input window, operand 9, single buffered']
    #allocation14 [shape = 's32[1]{0}', space=sflag, size = 0x4, scoped, tag = 'scoped memory for forward.1']
    #allocation15 [shape = 'u8[524288]{0}', space=vmem, size = 0x80000, scoped, tag = 'input window, operand 11, single buffered']
    #allocation16 [shape = 'u8[65536]{0}', space=vmem, size = 0x10000, scoped, tag = 'input window, operand 12, single buffered']
    #allocation17 [shape = 's32[1]{0}', space=sflag, size = 0x4, scoped, tag = 'scoped memory for forward.1']
    #allocation18 [shape = 'u8[524288]{0}', space=vmem, size = 0x80000, scoped, tag = 'input window, operand 13, single buffered']
    %20 = vsyncpa [#allocation3], 0
    %21 = vsyncpa [#allocation5], 0
    %22 = vsyncpa [#allocation8], 0
    %23 = vsyncpa [#allocation11], 0
    %24 = vsyncpa [#allocation14], 0
    %25 = vsyncpa [#allocation17], 0
    // Predicated region
    $region2: #{forward.1} parent=1 // pred_check
      _
    $region3: #{forward.1} parent=1 // pred_check_branch
      %27 = sbr.rel (0) target = $region5
    $region4: #{forward.1} parent=1 // pred_region
      _
    $region5: #{forward.1} parent=1 // pred_fallthru
      _
    // Predicated region
    $region6: #{forward.1} parent=1 // pred_check
      _
    $region7: #{forward.1} parent=1 // pred_check_branch
      %29 = sbr.rel (0) target = $region9
    $region8: #{forward.1} parent=1 // pred_region
      %31 = vsyncadd [#allocation3], 0
      %s32 = sshll.u32 %s1, 4
      %s33 = int_to_ptr.hbm [resolvable:$true] %s32
      %s34 = sshll.u32 [#allocation2], 4
      %s35 = int_to_ptr.vmem [resolvable:$true] %s34
      %40 = dma.hbm_to_vmem [thread:$0]  %s33, 1024, %s35, [#allocation3], 256, 256, 16
    $region9: #{forward.1} parent=1 // pred_fallthru
      _
    // Predicated region
    $region10: #{forward.1} parent=1 // pred_check
      _
    $region11: #{forward.1} parent=1 // pred_check_branch
      %42 = sbr.rel (0) target = $region13
    $region12: #{forward.1} parent=1 // pred_region
      %44 = vsyncadd [#allocation5], 0
      %s46 = sshll.u32 %s2, 4
      %s47 = int_to_ptr.hbm [resolvable:$true] %s46
      %s48 = sshll.u32 [#allocation4], 4
      %s49 = int_to_ptr.vmem [resolvable:$true] %s48
      %51 = dma.hbm_to_vmem [thread:$0]  %s47, 64, %s49, [#allocation5]
    $region13: #{forward.1} parent=1 // pred_fallthru
      _
    // Predicated region
    $region14: #{forward.1} parent=1 // pred_check
      _
    $region15: #{forward.1} parent=1 // pred_check_branch
      %53 = sbr.rel (0) target = $region17
    $region16: #{forward.1} parent=1 // pred_region
      %55 = vsyncadd [#allocation5], 0
      %s57 = sshll.u32 %s3, 4
      %s58 = int_to_ptr.hbm [resolvable:$true] %s57
      %s59 = sshll.u32 [#allocation6], 4
      %s60 = int_to_ptr.vmem [resolvable:$true] %s59
      %62 = dma.hbm_to_vmem [thread:$0]  %s58, 64, %s60, [#allocation5]
    $region17: #{forward.1} parent=1 // pred_fallthru
      _
    // Predicated region
    $region18: #{forward.1} parent=1 // pred_check
      _
    $region19: #{forward.1} parent=1 // pred_check_branch
      %64 = sbr.rel (0) target = $region21
    $region20: #{forward.1} parent=1 // pred_region
      _
    $region21: #{forward.1} parent=1 // pred_fallthru
      _
    // Predicated region
    $region22: #{forward.1} parent=1 // pred_check
      _
    $region23: #{forward.1} parent=1 // pred_check_branch
      %66 = sbr.rel (0) target = $region25
    $region24: #{forward.1} parent=1 // pred_region
      %68 = vsyncadd [#allocation8], 0
      %s69 = sshll.u32 %s5, 4
      %s70 = int_to_ptr.hbm [resolvable:$true] %s69
      %s71 = sshll.u32 [#allocation7], 4
      %s72 = int_to_ptr.vmem [resolvable:$true] %s71
      %77 = dma.hbm_to_vmem [thread:$0]  %s70, 8192, %s72, [#allocation8], 128, 128, 8
    $region25: #{forward.1} parent=1 // pred_fallthru
      _
    // Predicated region
    $region26: #{forward.1} parent=1 // pred_check
      _
    $region27: #{forward.1} parent=1 // pred_check_branch
      %79 = sbr.rel (0) target = $region29
    $region28: #{forward.1} parent=1 // pred_region
      %81 = vsyncadd [#allocation8], 0
      %s82 = sshll.u32 %s6, 4
      %s83 = int_to_ptr.hbm [resolvable:$true] %s82
      %s84 = sshll.u32 [#allocation9], 4
      %s85 = int_to_ptr.vmem [resolvable:$true] %s84
      %90 = dma.hbm_to_vmem [thread:$0]  %s83, 2048, %s85, [#allocation8], 512, 512, 32
    $region29: #{forward.1} parent=1 // pred_fallthru
      _
    // Predicated region
    $region30: #{forward.1} parent=1 // pred_check
      _
    $region31: #{forward.1} parent=1 // pred_check_branch
      %92 = sbr.rel (0) target = $region33
    $region32: #{forward.1} parent=1 // pred_region
      %94 = vsyncadd [#allocation11], 0
      %s95 = sshll.u32 %s7, 4
      %s96 = int_to_ptr.hbm [resolvable:$true] %s95
      %s97 = sshll.u32 [#allocation10], 4
      %s98 = int_to_ptr.vmem [resolvable:$true] %s97
      %103 = dma.hbm_to_vmem [thread:$0]  %s96, 32768, %s98, [#allocation11], 512, 512, 32
    $region33: #{forward.1} parent=1 // pred_fallthru
      _
    // Predicated region
    $region34: #{forward.1} parent=1 // pred_check
      _
    $region35: #{forward.1} parent=1 // pred_check_branch
      %105 = sbr.rel (0) target = $region37
    $region36: #{forward.1} parent=1 // pred_region
      %107 = vsyncadd [#allocation11], 0
      %s109 = sshll.u32 %s8, 4
      %s110 = int_to_ptr.hbm [resolvable:$true] %s109
      %s111 = sshll.u32 [#allocation12], 4
      %s112 = int_to_ptr.vmem [resolvable:$true] %s111
      %114 = dma.hbm_to_vmem [thread:$0]  %s110, 128, %s112, [#allocation11]
    $region37: #{forward.1} parent=1 // pred_fallthru
      _
    // Predicated region
    $region38: #{forward.1} parent=1 // pred_check
      _
    $region39: #{forward.1} parent=1 // pred_check_branch
      %116 = sbr.rel (0) target = $region41
    $region40: #{forward.1} parent=1 // pred_region
      %118 = vsyncadd [#allocation14], 0
      %s120 = sshll.u32 %s9, 4
      %s121 = int_to_ptr.hbm [resolvable:$true] %s120
      %s122 = sshll.u32 [#allocation13], 4
      %s123 = int_to_ptr.vmem [resolvable:$true] %s122
      %125 = dma.hbm_to_vmem [thread:$0]  %s121, 128, %s123, [#allocation14]
    $region41: #{forward.1} parent=1 // pred_fallthru
      _
    // Predicated region
    $region42: #{forward.1} parent=1 // pred_check
      _
    $region43: #{forward.1} parent=1 // pred_check_branch
      %127 = sbr.rel (0) target = $region45
    $region44: #{forward.1} parent=1 // pred_region
      _
    $region45: #{forward.1} parent=1 // pred_fallthru
      _
    // Predicated region
    $region46: #{forward.1} parent=1 // pred_check
      _
    $region47: #{forward.1} parent=1 // pred_check_branch
      %129 = sbr.rel (0) target = $region49
    $region48: #{forward.1} parent=1 // pred_region
      %131 = vsyncadd [#allocation14], 0
      %s132 = sshll.u32 %s11, 4
      %s133 = int_to_ptr.hbm [resolvable:$true] %s132
      %s134 = sshll.u32 [#allocation15], 4
      %s135 = int_to_ptr.vmem [resolvable:$true] %s134
      %140 = dma.hbm_to_vmem [thread:$0]  %s133, 16384, %s135, [#allocation14], 128, 128, 8
    $region49: #{forward.1} parent=1 // pred_fallthru
      _
    // Predicated region
    $region50: #{forward.1} parent=1 // pred_check
      _
    $region51: #{forward.1} parent=1 // pred_check_branch
      %142 = sbr.rel (0) target = $region53
    $region52: #{forward.1} parent=1 // pred_region
      %144 = vsyncadd [#allocation17], 0
      %s145 = sshll.u32 %s12, 4
      %s146 = int_to_ptr.hbm [resolvable:$true] %s145
      %s147 = sshll.u32 [#allocation16], 4
      %s148 = int_to_ptr.vmem [resolvable:$true] %s147
      %153 = dma.hbm_to_vmem [thread:$0]  %s146, 2048, %s148, [#allocation17], 1024, 1024, 64
    $region53: #{forward.1} parent=1 // pred_fallthru
      _
    // Predicated region
    $region54: #{forward.1} parent=1 // pred_check
      _
    $region55: #{forward.1} parent=1 // pred_check_branch
      %155 = sbr.rel (0) target = $region57
    $region56: #{forward.1} parent=1 // pred_region
      %157 = vsyncadd [#allocation17], 0
      %s158 = sshll.u32 %s13, 4
      %s159 = int_to_ptr.hbm [resolvable:$true] %s158
      %s160 = sshll.u32 [#allocation18], 4
      %s161 = int_to_ptr.vmem [resolvable:$true] %s160
      %166 = dma.hbm_to_vmem [thread:$0]  %s159, 16384, %s161, [#allocation17], 128, 128, 8
    $region57: #{forward.1} parent=1 // pred_fallthru
      _
    // Predicated region
    $region58: #{forward.1} parent=1 // pred_check
      _
    $region59: #{forward.1} parent=1 // pred_check_branch
      %168 = sbr.rel (0) target = $region61
    $region60: #{forward.1} parent=1 // pred_region
      _
    $region61: #{forward.1} parent=1 // pred_fallthru
      _
    // Predicated region
    $region62: #{forward.1} parent=1 // pred_check
      _
    $region63: #{forward.1} parent=1 // pred_check_branch
      %170 = sbr.rel (0) target = $region65
    $region64: #{forward.1} parent=1 // pred_region
      %172 = dma.done [#allocation3], 1024
    $region65: #{forward.1} parent=1 // pred_fallthru
      _
    // Predicated region
    $region66: #{forward.1} parent=1 // pred_check
      _
    $region67: #{forward.1} parent=1 // pred_check_branch
      %174 = sbr.rel (0) target = $region69
    $region68: #{forward.1} parent=1 // pred_region
      %176 = dma.done [#allocation5], 64
    $region69: #{forward.1} parent=1 // pred_fallthru
      _
    // Predicated region
    $region70: #{forward.1} parent=1 // pred_check
      _
    $region71: #{forward.1} parent=1 // pred_check_branch
      %178 = sbr.rel (0) target = $region73
    $region72: #{forward.1} parent=1 // pred_region
      %180 = dma.done [#allocation5], 64
    $region73: #{forward.1} parent=1 // pred_fallthru
      _
    // Predicated region
    $region74: #{forward.1} parent=1 // pred_check
      _
    $region75: #{forward.1} parent=1 // pred_check_branch
      %182 = sbr.rel (0) target = $region77
    $region76: #{forward.1} parent=1 // pred_region
      %184 = dma.done [#allocation8], 8192
    $region77: #{forward.1} parent=1 // pred_fallthru
      _
    // Predicated region
    $region78: #{forward.1} parent=1 // pred_check
      _
    $region79: #{forward.1} parent=1 // pred_check_branch
      %186 = sbr.rel (0) target = $region81
    $region80: #{forward.1} parent=1 // pred_region
      %188 = dma.done [#allocation8], 2048
    $region81: #{forward.1} parent=1 // pred_fallthru
      _
    // Predicated region
    $region82: #{forward.1} parent=1 // pred_check
      _
    $region83: #{forward.1} parent=1 // pred_check_branch
      %190 = sbr.rel (0) target = $region85
    $region84: #{forward.1} parent=1 // pred_region
      %192 = dma.done [#allocation11], 32768
    $region85: #{forward.1} parent=1 // pred_fallthru
      _
    // Predicated region
    $region86: #{forward.1} parent=1 // pred_check
      _
    $region87: #{forward.1} parent=1 // pred_check_branch
      %194 = sbr.rel (0) target = $region89
    $region88: #{forward.1} parent=1 // pred_region
      %196 = dma.done [#allocation11], 128
    $region89: #{forward.1} parent=1 // pred_fallthru
      _
    // Predicated region
    $region90: #{forward.1} parent=1 // pred_check
      _
    $region91: #{forward.1} parent=1 // pred_check_branch
      %198 = sbr.rel (0) target = $region93
    $region92: #{forward.1} parent=1 // pred_region
      %200 = dma.done [#allocation14], 128
    $region93: #{forward.1} parent=1 // pred_fallthru
      _
    // Predicated region
    $region94: #{forward.1} parent=1 // pred_check
      _
    $region95: #{forward.1} parent=1 // pred_check_branch
      %202 = sbr.rel (0) target = $region97
    $region96: #{forward.1} parent=1 // pred_region
      %204 = dma.done [#allocation14], 16384
    $region97: #{forward.1} parent=1 // pred_fallthru
      _
    // Predicated region
    $region98: #{forward.1} parent=1 // pred_check
      _
    $region99: #{forward.1} parent=1 // pred_check_branch
      %206 = sbr.rel (0) target = $region101
    $region100: #{forward.1} parent=1 // pred_region
      %208 = dma.done [#allocation17], 2048
    $region101: #{forward.1} parent=1 // pred_fallthru
      _
    // Predicated region
    $region102: #{forward.1} parent=1 // pred_check
      _
    $region103: #{forward.1} parent=1 // pred_check_branch
      %210 = sbr.rel (0) target = $region105
    $region104: #{forward.1} parent=1 // pred_region
      %212 = dma.done [#allocation17], 16384
    $region105: #{forward.1} parent=1 // pred_fallthru
      _
    %v214 = vld [vmem:[%s0] sm:$0x3]
    %v215 = vpack.c.bf16 %v214, %v214
    %v216 = vld [vmem:[#allocation2] sm:$0xff]
    %v217 = vld [vmem:[#allocation2 + $0x8] sm:$0xff]
    %v218 = vld [vmem:[#allocation2 + $0x10] sm:$0xff]
    %v219 = vld [vmem:[#allocation2 + $0x18] sm:$0xff]
    %v220 = vld [vmem:[#allocation2 + $0x20] sm:$0xff]
    %v221 = vld [vmem:[#allocation2 + $0x28] sm:$0xff]
    %v222 = vld [vmem:[#allocation2 + $0x30] sm:$0x33]
    %v223 = vld [vmem:[#allocation2 + $0x38] sm:$0x33]
    %v224 = vld [vmem:[#allocation4] sm:$0xf]
    %v226 = vperm.slane %v224, 0
    %v227 = vperm.slane %v224, 1
    %v228 = vperm.slane %v224, 2
    %v229 = vperm.slane %v224, 3
    %v242 = vunpack.c.l.b16 %v216
    %v243 = vunpack.c.h.b16 %v216
    %v244 = vunpack.c.l.b16 %v217
    %v245 = vunpack.c.h.b16 %v217
    %v246 = vunpack.c.l.b16 %v218
    %v247 = vunpack.c.h.b16 %v218
    %v248 = vunpack.c.l.b16 %v219
    %v249 = vunpack.c.h.b16 %v219
    %v250 = vunpack.c.l.b16 %v220
    %v251 = vunpack.c.h.b16 %v220
    %v252 = vunpack.c.l.b16 %v221
    %v253 = vunpack.c.h.b16 %v221
    %v254 = vunpack.c.l.b16 %v222
    %v255 = vunpack.c.h.b16 %v222
    %v256 = vunpack.c.l.b16 %v223
    %v257 = vunpack.c.h.b16 %v223
    %v258 = vpack.c.b16 %v246, %v242
    %v259 = vpack.c.b16 %v247, %v243
    %v260 = vpack.c.b16 %v248, %v244
    %v261 = vpack.c.b16 %v249, %v245
    %v262 = vpack.c.b16 %v254, %v250
    %v263 = vpack.c.b16 %v255, %v251
    %v264 = vpack.c.b16 %v256, %v252
    %v265 = vpack.c.b16 %v257, %v253
    %vm270 = vcmask 228352
    %v272 = vsel %vm270, %v215, 0
    %vm274 = vcmask 1045504
    %v276 = vsel %vm274, %v262, 0
    %v279 = vsel %vm274, %v263, 0
    %v282 = vsel %vm274, %v264, 0
    %v285 = vsel %vm274, %v265, 0
    %287 = vmatpush.bf16.msra.mxu0 0
    %288 = vmatpush.bf16.msra.mxu0 0
    %289 = vmatpush.bf16.msra.mxu0 0
    %290 = vmatpush.bf16.msra.mxu0 0
    %291 = vmatpush.bf16.msra.mxu0 0
    %292 = vmatpush.bf16.msra.mxu0 0
    %293 = vmatpush.bf16.msra.mxu0 %v276
    %294 = vmatpush.bf16.msra.mxu0 %v258
    %295 = vmatmul.bf16.gmra.mxu0 %v272
    %v296 = vpop.f32.mrf.mxu0
    %v297 = vadd.f32 %v226, %v296
    %v298 = vpop.f32.mrf.mxu0
    %299 = vdwg.mxu0
    %300 = vmatpush.bf16.msra.mxu0 0
    %301 = vmatpush.bf16.msra.mxu0 0
    %302 = vmatpush.bf16.msra.mxu0 0
    %303 = vmatpush.bf16.msra.mxu0 0
    %304 = vmatpush.bf16.msra.mxu0 0
    %305 = vmatpush.bf16.msra.mxu0 0
    %306 = vmatpush.bf16.msra.mxu0 %v279
    %307 = vmatpush.bf16.msra.mxu0 %v259
    %308 = vmatmul.bf16.gmra.mxu0 %v272
    %v309 = vpop.f32.mrf.mxu0
    %v310 = vadd.f32 %v227, %v309
    %v311 = vpop.f32.mrf.mxu0
    %312 = vdwg.mxu0
    %313 = vmatpush.bf16.msra.mxu0 0
    %314 = vmatpush.bf16.msra.mxu0 0
    %315 = vmatpush.bf16.msra.mxu0 0
    %316 = vmatpush.bf16.msra.mxu0 0
    %317 = vmatpush.bf16.msra.mxu0 0
    %318 = vmatpush.bf16.msra.mxu0 0
    %319 = vmatpush.bf16.msra.mxu0 %v282
    %320 = vmatpush.bf16.msra.mxu0 %v260
    %321 = vmatmul.bf16.gmra.mxu0 %v272
    %v322 = vpop.f32.mrf.mxu0
    %v323 = vadd.f32 %v228, %v322
    %v324 = vpop.f32.mrf.mxu0
    %325 = vdwg.mxu0
    %326 = vmatpush.bf16.msra.mxu0 0
    %327 = vmatpush.bf16.msra.mxu0 0
    %328 = vmatpush.bf16.msra.mxu0 0
    %329 = vmatpush.bf16.msra.mxu0 0
    %330 = vmatpush.bf16.msra.mxu0 0
    %331 = vmatpush.bf16.msra.mxu0 0
    %332 = vmatpush.bf16.msra.mxu0 %v285
    %333 = vmatpush.bf16.msra.mxu0 %v261
    %334 = vmatmul.bf16.gmra.mxu0 %v272
    %v335 = vpop.f32.mrf.mxu0
    %v336 = vadd.f32 %v229, %v335
    %v337 = vpop.f32.mrf.mxu0
    %338 = vdwg.mxu0
    %v339 = vld [vmem:[#allocation7] sm:$0xff]
    %v340 = vld [vmem:[#allocation7 + $0x8] sm:$0xff]
    %v341 = vld [vmem:[#allocation7 + $0x10] sm:$0xff]
    %v342 = vld [vmem:[#allocation7 + $0x18] sm:$0xff]
    %v343 = vld [vmem:[#allocation7 + $0x20] sm:$0xff]
    %v344 = vld [vmem:[#allocation7 + $0x28] sm:$0xff]
    %v345 = vld [vmem:[#allocation7 + $0x30] sm:$0xff]
    %v346 = vld [vmem:[#allocation7 + $0x38] sm:$0xff]
    %v347 = vld [vmem:[#allocation7 + $0x40] sm:$0xff]
    %v348 = vld [vmem:[#allocation7 + $0x48] sm:$0xff]
    %v349 = vld [vmem:[#allocation7 + $0x50] sm:$0xff]
    %v350 = vld [vmem:[#allocation7 + $0x58] sm:$0xff]
    %v351 = vld [vmem:[#allocation7 + $0x60] sm:$0xff]
    %v352 = vld [vmem:[#allocation7 + $0x68] sm:$0xff]
    %v353 = vld [vmem:[#allocation7 + $0x70] sm:$0xff]
    %v354 = vld [vmem:[#allocation7 + $0x78] sm:$0xff]
    %v355 = vld [vmem:[#allocation7 + $0x80] sm:$0xff]
    %v356 = vld [vmem:[#allocation7 + $0x88] sm:$0xff]
    %v357 = vld [vmem:[#allocation7 + $0x90] sm:$0xff]
    %v358 = vld [vmem:[#allocation7 + $0x98] sm:$0xff]
    %v359 = vld [vmem:[#allocation7 + $0xa0] sm:$0xff]
    %v360 = vld [vmem:[#allocation7 + $0xa8] sm:$0xff]
    %v361 = vld [vmem:[#allocation7 + $0xb0] sm:$0xff]
    %v362 = vld [vmem:[#allocation7 + $0xb8] sm:$0xff]
    %v363 = vld [vmem:[#allocation7 + $0xc0] sm:$0xff]
    %v364 = vld [vmem:[#allocation7 + $0xc8] sm:$0xff]
    %v365 = vld [vmem:[#allocation7 + $0xd0] sm:$0xff]
    %v366 = vld [vmem:[#allocation7 + $0xd8] sm:$0xff]
    %v367 = vld [vmem:[#allocation7 + $0xe0] sm:$0xff]
    %v368 = vld [vmem:[#allocation7 + $0xe8] sm:$0xff]
    %v369 = vld [vmem:[#allocation7 + $0xf0] sm:$0xff]
    %v370 = vld [vmem:[#allocation7 + $0xf8] sm:$0xff]
    %v371 = vld [vmem:[#allocation7 + $0x100] sm:$0xff]
    %v372 = vld [vmem:[#allocation7 + $0x108] sm:$0xff]
    %v373 = vld [vmem:[#allocation7 + $0x110] sm:$0xff]
    %v374 = vld [vmem:[#allocation7 + $0x118] sm:$0xff]
    %v375 = vld [vmem:[#allocation7 + $0x120] sm:$0xff]
    %v376 = vld [vmem:[#allocation7 + $0x128] sm:$0xff]
    %v377 = vld [vmem:[#allocation7 + $0x130] sm:$0xff]
    %v378 = vld [vmem:[#allocation7 + $0x138] sm:$0xff]
    %v379 = vld [vmem:[#allocation7 + $0x140] sm:$0xff]
    %v380 = vld [vmem:[#allocation7 + $0x148] sm:$0xff]
    %v381 = vld [vmem:[#allocation7 + $0x150] sm:$0xff]
    %v382 = vld [vmem:[#allocation7 + $0x158] sm:$0xff]
    %v383 = vld [vmem:[#allocation7 + $0x160] sm:$0xff]
    %v384 = vld [vmem:[#allocation7 + $0x168] sm:$0xff]
    %v385 = vld [vmem:[#allocation7 + $0x170] sm:$0xff]
    %v386 = vld [vmem:[#allocation7 + $0x178] sm:$0xff]
    %v387 = vld [vmem:[#allocation7 + $0x180] sm:$0xff]
    %v388 = vld [vmem:[#allocation7 + $0x188] sm:$0xff]
    %v389 = vld [vmem:[#allocation7 + $0x190] sm:$0xff]
    %v390 = vld [vmem:[#allocation7 + $0x198] sm:$0xff]
    %v391 = vld [vmem:[#allocation7 + $0x1a0] sm:$0xff]
    %v392 = vld [vmem:[#allocation7 + $0x1a8] sm:$0xff]
    %v393 = vld [vmem:[#allocation7 + $0x1b0] sm:$0xff]
    %v394 = vld [vmem:[#allocation7 + $0x1b8] sm:$0xff]
    %v395 = vld [vmem:[#allocation7 + $0x1c0] sm:$0xff]
    %v396 = vld [vmem:[#allocation7 + $0x1c8] sm:$0xff]
    %v397 = vld [vmem:[#allocation7 + $0x1d0] sm:$0xff]
    %v398 = vld [vmem:[#allocation7 + $0x1d8] sm:$0xff]
    %v399 = vld [vmem:[#allocation7 + $0x1e0] sm:$0xff]
    %v400 = vld [vmem:[#allocation7 + $0x1e8] sm:$0xff]
    %v401 = vld [vmem:[#allocation7 + $0x1f0] sm:$0xff]
    %v402 = vld [vmem:[#allocation7 + $0x1f8] sm:$0xff]
    %v403 = vld [vmem:[#allocation9] sm:$0xff]
    %v404 = vld [vmem:[#allocation9 + $0x8] sm:$0xff]
    %v405 = vld [vmem:[#allocation9 + $0x10] sm:$0xff]
    %v406 = vld [vmem:[#allocation9 + $0x18] sm:$0xff]
    %v407 = vld [vmem:[#allocation9 + $0x20] sm:$0xff]
    %v408 = vld [vmem:[#allocation9 + $0x28] sm:$0xff]
    %v409 = vld [vmem:[#allocation9 + $0x30] sm:$0xff]
    %v410 = vld [vmem:[#allocation9 + $0x38] sm:$0xff]
    %v411 = vld [vmem:[#allocation9 + $0x40] sm:$0xff]
    %v412 = vld [vmem:[#allocation9 + $0x48] sm:$0xff]
    %v413 = vld [vmem:[#allocation9 + $0x50] sm:$0xff]
    %v414 = vld [vmem:[#allocation9 + $0x58] sm:$0xff]
    %v415 = vld [vmem:[#allocation9 + $0x60] sm:$0xff]
    %v416 = vld [vmem:[#allocation9 + $0x68] sm:$0xff]
    %v417 = vld [vmem:[#allocation9 + $0x70] sm:$0xff]
    %v418 = vld [vmem:[#allocation9 + $0x78] sm:$0xff]
    %vm419 = vcmask 1041408
    %v420 = vsel %vm419, %v297, 0.0
    %v421 = vrot.slane %v420, 4
    %v422 = vadd.f32 %v420, %v421
    %v423 = vrot.slane %v422, 2
    %v424 = vadd.f32 %v422, %v423
    %v425 = vrot.slane %v424, 1
    %v426 = vadd.f32 %v424, %v425
    %v427 = vsel %vm419, %v310, 0.0
    %v428 = vrot.slane %v427, 4
    %v429 = vadd.f32 %v427, %v428
    %v430 = vrot.slane %v429, 2
    %v431 = vadd.f32 %v429, %v430
    %v432 = vrot.slane %v431, 1
    %v433 = vadd.f32 %v431, %v432
    %v434 = vsel %vm419, %v323, 0.0
    %v435 = vrot.slane %v434, 4
    %v436 = vadd.f32 %v434, %v435
    %v437 = vrot.slane %v436, 2
    %v438 = vadd.f32 %v436, %v437
    %v439 = vrot.slane %v438, 1
    %v440 = vadd.f32 %v438, %v439
    %v441 = vsel %vm419, %v336, 0.0
    %v442 = vrot.slane %v441, 4
    %v443 = vadd.f32 %v441, %v442
    %v444 = vrot.slane %v443, 2
    %v445 = vadd.f32 %v443, %v444
    %v446 = vrot.slane %v445, 1
    %v447 = vadd.f32 %v445, %v446
    %448 = vmatpush.msra.mxu0 %v354
    %449 = vmatpush.msra.mxu0 %v353
    %450 = vmatpush.msra.mxu0 %v352
    %451 = vmatpush.msra.mxu0 %v351
    %452 = vmatpush.msra.mxu0 %v350
    %453 = vmatpush.msra.mxu0 %v349
    %454 = vmatpush.msra.mxu0 %v348
    %455 = vmatpush.msra.mxu0 %v347
    %456 = vmatpush.msra.mxu0 %v346
    %457 = vmatpush.msra.mxu0 %v345
    %458 = vmatpush.msra.mxu0 %v344
    %459 = vmatpush.msra.mxu0 %v343
    %460 = vmatpush.msra.mxu0 %v342
    %461 = vmatpush.msra.mxu0 %v341
    %462 = vmatpush.msra.mxu0 %v340
    %463 = vmatpush.msra.mxu0 %v339
    %464 = vmatmul.f32.gmra.mxu0 %v426
    %v465 = vpop.f32.mrf.mxu0
    %v466 = vadd.f32 0.0, %v465
    %467 = vdwg.mxu0
    %468 = vmatpush.msra.mxu0 %v370
    %469 = vmatpush.msra.mxu0 %v369
    %470 = vmatpush.msra.mxu0 %v368
    %471 = vmatpush.msra.mxu0 %v367
    %472 = vmatpush.msra.mxu0 %v366
    %473 = vmatpush.msra.mxu0 %v365
    %474 = vmatpush.msra.mxu0 %v364
    %475 = vmatpush.msra.mxu0 %v363
    %476 = vmatpush.msra.mxu0 %v362
    %477 = vmatpush.msra.mxu0 %v361
    %478 = vmatpush.msra.mxu0 %v360
    %479 = vmatpush.msra.mxu0 %v359
    %480 = vmatpush.msra.mxu0 %v358
    %481 = vmatpush.msra.mxu0 %v357
    %482 = vmatpush.msra.mxu0 %v356
    %483 = vmatpush.msra.mxu0 %v355
    %484 = vmatmul.f32.gmra.mxu0 %v433
    %v485 = vpop.f32.mrf.mxu0
    %v486 = vadd.f32 %v466, %v485
    %487 = vdwg.mxu0
    %488 = vmatpush.msra.mxu0 %v386
    %489 = vmatpush.msra.mxu0 %v385
    %490 = vmatpush.msra.mxu0 %v384
    %491 = vmatpush.msra.mxu0 %v383
    %492 = vmatpush.msra.mxu0 %v382
    %493 = vmatpush.msra.mxu0 %v381
    %494 = vmatpush.msra.mxu0 %v380
    %495 = vmatpush.msra.mxu0 %v379
    %496 = vmatpush.msra.mxu0 %v378
    %497 = vmatpush.msra.mxu0 %v377
    %498 = vmatpush.msra.mxu0 %v376
    %499 = vmatpush.msra.mxu0 %v375
    %500 = vmatpush.msra.mxu0 %v374
    %501 = vmatpush.msra.mxu0 %v373
    %502 = vmatpush.msra.mxu0 %v372
    %503 = vmatpush.msra.mxu0 %v371
    %504 = vmatmul.f32.gmra.mxu0 %v440
    %v505 = vpop.f32.mrf.mxu0
    %v506 = vadd.f32 %v486, %v505
    %507 = vdwg.mxu0
    %508 = vmatpush.msra.mxu0 %v402
    %509 = vmatpush.msra.mxu0 %v401
    %510 = vmatpush.msra.mxu0 %v400
    %511 = vmatpush.msra.mxu0 %v399
    %512 = vmatpush.msra.mxu0 %v398
    %513 = vmatpush.msra.mxu0 %v397
    %514 = vmatpush.msra.mxu0 %v396
    %515 = vmatpush.msra.mxu0 %v395
    %516 = vmatpush.msra.mxu0 %v394
    %517 = vmatpush.msra.mxu0 %v393
    %518 = vmatpush.msra.mxu0 %v392
    %519 = vmatpush.msra.mxu0 %v391
    %520 = vmatpush.msra.mxu0 %v390
    %521 = vmatpush.msra.mxu0 %v389
    %522 = vmatpush.msra.mxu0 %v388
    %523 = vmatpush.msra.mxu0 %v387
    %524 = vmatmul.f32.gmra.mxu0 %v447
    %v525 = vpop.f32.mrf.mxu0
    %v526 = vadd.f32 %v506, %v525
    %527 = vdwg.mxu0
    %v528 = vmul.f32 %v526, 0.03125
    %vm529 = vcmask 261120
    %v531 = vsel %vm529, %v528, 0
    %533 = vmatpush.msra.mxu0 0.0
    %534 = vmatpush.msra.mxu0 0.0
    %535 = vmatpush.msra.mxu0 0.0
    %536 = vmatpush.msra.mxu0 0.0
    %537 = vmatpush.msra.mxu0 0.0
    %538 = vmatpush.msra.mxu0 0.0
    %539 = vmatpush.msra.mxu0 0.0
    %540 = vmatpush.msra.mxu0 0.0
    %541 = vmatpush.msra.mxu0 0.0
    %542 = vmatpush.msra.mxu0 0.0
    %543 = vmatpush.msra.mxu0 0.0
    %544 = vmatpush.msra.mxu0 0.0
    %545 = vmatpush.msra.mxu0 %v415
    %546 = vmatpush.msra.mxu0 %v411
    %547 = vmatpush.msra.mxu0 %v407
    %548 = vmatpush.msra.mxu0 %v403
    %549 = vmatmul.f32.gmra.mxu0 %v531
    %v550 = vpop.f32.mrf.mxu0
    %v551 = vadd.f32 0.0, %v550
    %552 = vdwg.mxu0
    %553 = vmatpush.msra.mxu0 0.0
    %554 = vmatpush.msra.mxu0 0.0
    %555 = vmatpush.msra.mxu0 0.0
    %556 = vmatpush.msra.mxu0 0.0
    %557 = vmatpush.msra.mxu0 0.0
    %558 = vmatpush.msra.mxu0 0.0
    %559 = vmatpush.msra.mxu0 0.0
    %560 = vmatpush.msra.mxu0 0.0
    %561 = vmatpush.msra.mxu0 0.0
    %562 = vmatpush.msra.mxu0 0.0
    %563 = vmatpush.msra.mxu0 0.0
    %564 = vmatpush.msra.mxu0 0.0
    %565 = vmatpush.msra.mxu0 %v416
    %566 = vmatpush.msra.mxu0 %v412
    %567 = vmatpush.msra.mxu0 %v408
    %568 = vmatpush.msra.mxu0 %v404
    %569 = vmatmul.f32.gmra.mxu0 %v531
    %v570 = vpop.f32.mrf.mxu0
    %v571 = vadd.f32 0.0, %v570
    %572 = vdwg.mxu0
    %573 = vmatpush.msra.mxu0 0.0
    %574 = vmatpush.msra.mxu0 0.0
    %575 = vmatpush.msra.mxu0 0.0
    %576 = vmatpush.msra.mxu0 0.0
    %577 = vmatpush.msra.mxu0 0.0
    %578 = vmatpush.msra.mxu0 0.0
    %579 = vmatpush.msra.mxu0 0.0
    %580 = vmatpush.msra.mxu0 0.0
    %581 = vmatpush.msra.mxu0 0.0
    %582 = vmatpush.msra.mxu0 0.0
    %583 = vmatpush.msra.mxu0 0.0
    %584 = vmatpush.msra.mxu0 0.0
    %585 = vmatpush.msra.mxu0 %v417
    %586 = vmatpush.msra.mxu0 %v413
    %587 = vmatpush.msra.mxu0 %v409
    %588 = vmatpush.msra.mxu0 %v405
    %589 = vmatmul.f32.gmra.mxu0 %v531
    %v590 = vpop.f32.mrf.mxu0
    %v591 = vadd.f32 0.0, %v590
    %592 = vdwg.mxu0
    %593 = vmatpush.msra.mxu0 0.0
    %594 = vmatpush.msra.mxu0 0.0
    %595 = vmatpush.msra.mxu0 0.0
    %596 = vmatpush.msra.mxu0 0.0
    %597 = vmatpush.msra.mxu0 0.0
    %598 = vmatpush.msra.mxu0 0.0
    %599 = vmatpush.msra.mxu0 0.0
    %600 = vmatpush.msra.mxu0 0.0
    %601 = vmatpush.msra.mxu0 0.0
    %602 = vmatpush.msra.mxu0 0.0
    %603 = vmatpush.msra.mxu0 0.0
    %604 = vmatpush.msra.mxu0 0.0
    %605 = vmatpush.msra.mxu0 %v418
    %606 = vmatpush.msra.mxu0 %v414
    %607 = vmatpush.msra.mxu0 %v410
    %608 = vmatpush.msra.mxu0 %v406
    %609 = vmatmul.f32.gmra.mxu0 %v531
    %v610 = vpop.f32.mrf.mxu0
    %v611 = vadd.f32 0.0, %v610
    %612 = vdwg.mxu0
    %v613 = vperm.slane %v551, 0
    %v614 = vperm.slane %v571, 0
    %v615 = vperm.slane %v591, 0
    %v616 = vperm.slane %v611, 0
    %v617 = vsub.f32 %v297, %v613
    %v618 = vsub.f32 %v310, %v614
    %v619 = vsub.f32 %v323, %v615
    %v620 = vsub.f32 %v336, %v616
    %v621 = vmul.f32 %v617, %v617
    %v622 = vmul.f32 %v618, %v618
    %v623 = vmul.f32 %v619, %v619
    %v624 = vmul.f32 %v620, %v620
    %v625 = vsel %vm419, %v621, 0.0
    %v626 = vrot.slane %v625, 4
    %v627 = vadd.f32 %v625, %v626
    %v628 = vrot.slane %v627, 2
    %v629 = vadd.f32 %v627, %v628
    %v630 = vrot.slane %v629, 1
    %v631 = vadd.f32 %v629, %v630
    %v632 = vsel %vm419, %v622, 0.0
    %v633 = vrot.slane %v632, 4
    %v634 = vadd.f32 %v632, %v633
    %v635 = vrot.slane %v634, 2
    %v636 = vadd.f32 %v634, %v635
    %v637 = vrot.slane %v636, 1
    %v638 = vadd.f32 %v636, %v637
    %v639 = vsel %vm419, %v623, 0.0
    %v640 = vrot.slane %v639, 4
    %v641 = vadd.f32 %v639, %v640
    %v642 = vrot.slane %v641, 2
    %v643 = vadd.f32 %v641, %v642
    %v644 = vrot.slane %v643, 1
    %v645 = vadd.f32 %v643, %v644
    %v646 = vsel %vm419, %v624, 0.0
    %v647 = vrot.slane %v646, 4
    %v648 = vadd.f32 %v646, %v647
    %v649 = vrot.slane %v648, 2
    %v650 = vadd.f32 %v648, %v649
    %v651 = vrot.slane %v650, 1
    %v652 = vadd.f32 %v650, %v651
    %653 = vmatpush.msra.mxu0 %v354
    %654 = vmatpush.msra.mxu0 %v353
    %655 = vmatpush.msra.mxu0 %v352
    %656 = vmatpush.msra.mxu0 %v351
    %657 = vmatpush.msra.mxu0 %v350
    %658 = vmatpush.msra.mxu0 %v349
    %659 = vmatpush.msra.mxu0 %v348
    %660 = vmatpush.msra.mxu0 %v347
    %661 = vmatpush.msra.mxu0 %v346
    %662 = vmatpush.msra.mxu0 %v345
    %663 = vmatpush.msra.mxu0 %v344
    %664 = vmatpush.msra.mxu0 %v343
    %665 = vmatpush.msra.mxu0 %v342
    %666 = vmatpush.msra.mxu0 %v341
    %667 = vmatpush.msra.mxu0 %v340
    %668 = vmatpush.msra.mxu0 %v339
    %669 = vmatmul.f32.gmra.mxu0 %v631
    %v670 = vpop.f32.mrf.mxu0
    %v671 = vadd.f32 0.0, %v670
    %672 = vdwg.mxu0
    %673 = vmatpush.msra.mxu0 %v370
    %674 = vmatpush.msra.mxu0 %v369
    %675 = vmatpush.msra.mxu0 %v368
    %676 = vmatpush.msra.mxu0 %v367
    %677 = vmatpush.msra.mxu0 %v366
    %678 = vmatpush.msra.mxu0 %v365
    %679 = vmatpush.msra.mxu0 %v364
    %680 = vmatpush.msra.mxu0 %v363
    %681 = vmatpush.msra.mxu0 %v362
    %682 = vmatpush.msra.mxu0 %v361
    %683 = vmatpush.msra.mxu0 %v360
    %684 = vmatpush.msra.mxu0 %v359
    %685 = vmatpush.msra.mxu0 %v358
    %686 = vmatpush.msra.mxu0 %v357
    %687 = vmatpush.msra.mxu0 %v356
    %688 = vmatpush.msra.mxu0 %v355
    %689 = vmatmul.f32.gmra.mxu0 %v638
    %v690 = vpop.f32.mrf.mxu0
    %v691 = vadd.f32 %v671, %v690
    %692 = vdwg.mxu0
    %693 = vmatpush.msra.mxu0 %v386
    %694 = vmatpush.msra.mxu0 %v385
    %695 = vmatpush.msra.mxu0 %v384
    %696 = vmatpush.msra.mxu0 %v383
    %697 = vmatpush.msra.mxu0 %v382
    %698 = vmatpush.msra.mxu0 %v381
    %699 = vmatpush.msra.mxu0 %v380
    %700 = vmatpush.msra.mxu0 %v379
    %701 = vmatpush.msra.mxu0 %v378
    %702 = vmatpush.msra.mxu0 %v377
    %703 = vmatpush.msra.mxu0 %v376
    %704 = vmatpush.msra.mxu0 %v375
    %705 = vmatpush.msra.mxu0 %v374
    %706 = vmatpush.msra.mxu0 %v373
    %707 = vmatpush.msra.mxu0 %v372
    %708 = vmatpush.msra.mxu0 %v371
    %709 = vmatmul.f32.gmra.mxu0 %v645
    %v710 = vpop.f32.mrf.mxu0
    %v711 = vadd.f32 %v691, %v710
    %712 = vdwg.mxu0
    %713 = vmatpush.msra.mxu0 %v402
    %714 = vmatpush.msra.mxu0 %v401
    %715 = vmatpush.msra.mxu0 %v400
    %716 = vmatpush.msra.mxu0 %v399
    %717 = vmatpush.msra.mxu0 %v398
    %718 = vmatpush.msra.mxu0 %v397
    %719 = vmatpush.msra.mxu0 %v396
    %720 = vmatpush.msra.mxu0 %v395
    %721 = vmatpush.msra.mxu0 %v394
    %722 = vmatpush.msra.mxu0 %v393
    %723 = vmatpush.msra.mxu0 %v392
    %724 = vmatpush.msra.mxu0 %v391
    %725 = vmatpush.msra.mxu0 %v390
    %726 = vmatpush.msra.mxu0 %v389
    %727 = vmatpush.msra.mxu0 %v388
    %728 = vmatpush.msra.mxu0 %v387
    %729 = vmatmul.f32.gmra.mxu0 %v652
    %v730 = vpop.f32.mrf.mxu0
    %v731 = vadd.f32 %v711, %v730
    %732 = vdwg.mxu0
    %v733 = vmul.f32 %v731, 0.03125
    %v734 = vld [vmem:[#allocation6] sm:$0xf]
    %v736 = vsel %vm529, %v733, 0
    %738 = vmatpush.msra.mxu0 0.0
    %739 = vmatpush.msra.mxu0 0.0
    %740 = vmatpush.msra.mxu0 0.0
    %741 = vmatpush.msra.mxu0 0.0
    %742 = vmatpush.msra.mxu0 0.0
    %743 = vmatpush.msra.mxu0 0.0
    %744 = vmatpush.msra.mxu0 0.0
    %745 = vmatpush.msra.mxu0 0.0
    %746 = vmatpush.msra.mxu0 0.0
    %747 = vmatpush.msra.mxu0 0.0
    %748 = vmatpush.msra.mxu0 0.0
    %749 = vmatpush.msra.mxu0 0.0
    %750 = vmatpush.msra.mxu0 %v415
    %751 = vmatpush.msra.mxu0 %v411
    %752 = vmatpush.msra.mxu0 %v407
    %753 = vmatpush.msra.mxu0 %v403
    %754 = vmatmul.f32.gmra.mxu0 %v736
    %v755 = vpop.f32.mrf.mxu0
    %v756 = vadd.f32 1e-05, %v755
    %757 = vdwg.mxu0
    %758 = vmatpush.msra.mxu0 0.0
    %759 = vmatpush.msra.mxu0 0.0
    %760 = vmatpush.msra.mxu0 0.0
    %761 = vmatpush.msra.mxu0 0.0
    %762 = vmatpush.msra.mxu0 0.0
    %763 = vmatpush.msra.mxu0 0.0
    %764 = vmatpush.msra.mxu0 0.0
    %765 = vmatpush.msra.mxu0 0.0
    %766 = vmatpush.msra.mxu0 0.0
    %767 = vmatpush.msra.mxu0 0.0
    %768 = vmatpush.msra.mxu0 0.0
    %769 = vmatpush.msra.mxu0 0.0
    %770 = vmatpush.msra.mxu0 %v416
    %771 = vmatpush.msra.mxu0 %v412
    %772 = vmatpush.msra.mxu0 %v408
    %773 = vmatpush.msra.mxu0 %v404
    %774 = vmatmul.f32.gmra.mxu0 %v736
    %v775 = vpop.f32.mrf.mxu0
    %v776 = vadd.f32 1e-05, %v775
    %777 = vdwg.mxu0
    %778 = vmatpush.msra.mxu0 0.0
    %779 = vmatpush.msra.mxu0 0.0
    %780 = vmatpush.msra.mxu0 0.0
    %781 = vmatpush.msra.mxu0 0.0
    %782 = vmatpush.msra.mxu0 0.0
    %783 = vmatpush.msra.mxu0 0.0
    %784 = vmatpush.msra.mxu0 0.0
    %785 = vmatpush.msra.mxu0 0.0
    %786 = vmatpush.msra.mxu0 0.0
    %787 = vmatpush.msra.mxu0 0.0
    %788 = vmatpush.msra.mxu0 0.0
    %789 = vmatpush.msra.mxu0 0.0
    %790 = vmatpush.msra.mxu0 %v417
    %791 = vmatpush.msra.mxu0 %v413
    %792 = vmatpush.msra.mxu0 %v409
    %793 = vmatpush.msra.mxu0 %v405
    %794 = vmatmul.f32.gmra.mxu0 %v736
    %v795 = vpop.f32.mrf.mxu0
    %v796 = vadd.f32 1e-05, %v795
    %797 = vdwg.mxu0
    %798 = vmatpush.msra.mxu0 0.0
    %799 = vmatpush.msra.mxu0 0.0
    %800 = vmatpush.msra.mxu0 0.0
    %801 = vmatpush.msra.mxu0 0.0
    %802 = vmatpush.msra.mxu0 0.0
    %803 = vmatpush.msra.mxu0 0.0
    %804 = vmatpush.msra.mxu0 0.0
    %805 = vmatpush.msra.mxu0 0.0
    %806 = vmatpush.msra.mxu0 0.0
    %807 = vmatpush.msra.mxu0 0.0
    %808 = vmatpush.msra.mxu0 0.0
    %809 = vmatpush.msra.mxu0 0.0
    %810 = vmatpush.msra.mxu0 %v418
    %811 = vmatpush.msra.mxu0 %v414
    %812 = vmatpush.msra.mxu0 %v410
    %813 = vmatpush.msra.mxu0 %v406
    %814 = vmatmul.f32.gmra.mxu0 %v736
    %v815 = vpop.f32.mrf.mxu0
    %v816 = vadd.f32 1e-05, %v815
    %817 = vdwg.mxu0
    %v818 = vrsqrt.pop %v756
    %v819 = vmul.f32 %v818, %v756
    %v820 = vmul.f32 %v819, %v818
    %v821 = vmul.f32 0.5, %v820
    %v822 = vsub.f32 1.5, %v821
    %v823 = vmul.f32 %v818, %v822
    %vm824 = vweird.f32 %v756
    %vm825 = vweird.f32 %v818
    %vm826 = vmor %vm824, %vm825
    %v827 = vsel %vm826, %v818, %v823
    %v828 = vrsqrt.pop %v776
    %v829 = vmul.f32 %v828, %v776
    %v830 = vmul.f32 %v829, %v828
    %v831 = vmul.f32 0.5, %v830
    %v832 = vsub.f32 1.5, %v831
    %v833 = vmul.f32 %v828, %v832
    %vm834 = vweird.f32 %v776
    %vm835 = vweird.f32 %v828
    %vm836 = vmor %vm834, %vm835
    %v837 = vsel %vm836, %v828, %v833
    %v838 = vrsqrt.pop %v796
    %v839 = vmul.f32 %v838, %v796
    %v840 = vmul.f32 %v839, %v838
    %v841 = vmul.f32 0.5, %v840
    %v842 = vsub.f32 1.5, %v841
    %v843 = vmul.f32 %v838, %v842
    %vm844 = vweird.f32 %v796
    %vm845 = vweird.f32 %v838
    %vm846 = vmor %vm844, %vm845
    %v847 = vsel %vm846, %v838, %v843
    %v848 = vrsqrt.pop %v816
    %v849 = vmul.f32 %v848, %v816
    %v850 = vmul.f32 %v849, %v848
    %v851 = vmul.f32 0.5, %v850
    %v852 = vsub.f32 1.5, %v851
    %v853 = vmul.f32 %v848, %v852
    %vm854 = vweird.f32 %v816
    %vm855 = vweird.f32 %v848
    %vm856 = vmor %vm854, %vm855
    %v857 = vsel %vm856, %v848, %v853
    %v862 = vrot.slane %v837, 7
    %v863 = vrot.slane %v847, 6
    %v864 = vrot.slane %v857, 5
    %vm865 = vcmask 1040384
    %v866 = vsel %vm865, %v827, %v862
    %vm867 = vcmask 1042434
    %v868 = vsel %vm867, %v863, %v864
    %v869 = vsel %vm419, %v866, %v868
    %v871 = vmul.f32 %v734, %v869
    %v873 = vperm.slane %v871, 0
    %v874 = vperm.slane %v871, 1
    %v875 = vperm.slane %v871, 2
    %v876 = vperm.slane %v871, 3
    %v881 = vmul.f32 %v617, %v873
    %v882 = vmul.f32 %v618, %v874
    %v883 = vmul.f32 %v619, %v875
    %v884 = vmul.f32 %v620, %v876
    %v885 = vld [vmem:[%s4] sm:$0xf]
    %v887 = vperm.slane %v885, 0
    %v888 = vperm.slane %v885, 1
    %v889 = vperm.slane %v885, 2
    %v890 = vperm.slane %v885, 3
    %v895 = vadd.f32 %v881, %v887
    %v896 = vadd.f32 %v882, %v888
    %v897 = vadd.f32 %v883, %v889
    %v898 = vadd.f32 %v884, %v890
    %v899 = vmax.f32 %v895, 0.0
    %v900 = vmax.f32 %v896, 0.0
    %v901 = vmax.f32 %v897, 0.0
    %v902 = vmax.f32 %v898, 0.0
    %v903 = vpack.c.bf16 %v899, %v899
    %v904 = vpack.c.bf16 %v900, %v900
    %v905 = vpack.c.bf16 %v901, %v901
    %v906 = vpack.c.bf16 %v902, %v902
    %v907 = vld [vmem:[#allocation10] sm:$0xff]
    %v908 = vld [vmem:[#allocation10 + $0x8] sm:$0xff]
    %v909 = vld [vmem:[#allocation10 + $0x10] sm:$0xff]
    %v910 = vld [vmem:[#allocation10 + $0x18] sm:$0xff]
    %v911 = vld [vmem:[#allocation10 + $0x20] sm:$0xff]
    %v912 = vld [vmem:[#allocation10 + $0x28] sm:$0xff]
    %v913 = vld [vmem:[#allocation10 + $0x30] sm:$0xff]
    %v914 = vld [vmem:[#allocation10 + $0x38] sm:$0xff]
    %v915 = vld [vmem:[#allocation10 + $0x40] sm:$0xff]
    %v916 = vld [vmem:[#allocation10 + $0x48] sm:$0xff]
    %v917 = vld [vmem:[#allocation10 + $0x50] sm:$0xff]
    %v918 = vld [vmem:[#allocation10 + $0x58] sm:$0xff]
    %v919 = vld [vmem:[#allocation10 + $0x60] sm:$0xff]
    %v920 = vld [vmem:[#allocation10 + $0x68] sm:$0xff]
    %v921 = vld [vmem:[#allocation10 + $0x70] sm:$0xff]
    %v922 = vld [vmem:[#allocation10 + $0x78] sm:$0xff]
    %v923 = vld [vmem:[#allocation10 + $0x80] sm:$0xff]
    %v924 = vld [vmem:[#allocation10 + $0x88] sm:$0xff]
    %v925 = vld [vmem:[#allocation10 + $0x90] sm:$0xff]
    %v926 = vld [vmem:[#allocation10 + $0x98] sm:$0xff]
    %v927 = vld [vmem:[#allocation10 + $0xa0] sm:$0xff]
    %v928 = vld [vmem:[#allocation10 + $0xa8] sm:$0xff]
    %v929 = vld [vmem:[#allocation10 + $0xb0] sm:$0xff]
    %v930 = vld [vmem:[#allocation10 + $0xb8] sm:$0xff]
    %v931 = vld [vmem:[#allocation10 + $0xc0] sm:$0xff]
    %v932 = vld [vmem:[#allocation10 + $0xc8] sm:$0xff]
    %v933 = vld [vmem:[#allocation10 + $0xd0] sm:$0xff]
    %v934 = vld [vmem:[#allocation10 + $0xd8] sm:$0xff]
    %v935 = vld [vmem:[#allocation10 + $0xe0] sm:$0xff]
    %v936 = vld [vmem:[#allocation10 + $0xe8] sm:$0xff]
    %v937 = vld [vmem:[#allocation10 + $0xf0] sm:$0xff]
    %v938 = vld [vmem:[#allocation10 + $0xf8] sm:$0xff]
    %v939 = vld [vmem:[#allocation10 + $0x100] sm:$0xff]
    %v940 = vld [vmem:[#allocation10 + $0x108] sm:$0xff]
    %v941 = vld [vmem:[#allocation10 + $0x110] sm:$0xff]
    %v942 = vld [vmem:[#allocation10 + $0x118] sm:$0xff]
    %v943 = vld [vmem:[#allocation10 + $0x120] sm:$0xff]
    %v944 = vld [vmem:[#allocation10 + $0x128] sm:$0xff]
    %v945 = vld [vmem:[#allocation10 + $0x130] sm:$0xff]
    %v946 = vld [vmem:[#allocation10 + $0x138] sm:$0xff]
    %v947 = vld [vmem:[#allocation10 + $0x140] sm:$0xff]
    %v948 = vld [vmem:[#allocation10 + $0x148] sm:$0xff]
    %v949 = vld [vmem:[#allocation10 + $0x150] sm:$0xff]
    %v950 = vld [vmem:[#allocation10 + $0x158] sm:$0xff]
    %v951 = vld [vmem:[#allocation10 + $0x160] sm:$0xff]
    %v952 = vld [vmem:[#allocation10 + $0x168] sm:$0xff]
    %v953 = vld [vmem:[#allocation10 + $0x170] sm:$0xff]
    %v954 = vld [vmem:[#allocation10 + $0x178] sm:$0xff]
    %v955 = vld [vmem:[#allocation10 + $0x180] sm:$0xff]
    %v956 = vld [vmem:[#allocation10 + $0x188] sm:$0xff]
    %v957 = vld [vmem:[#allocation10 + $0x190] sm:$0xff]
    %v958 = vld [vmem:[#allocation10 + $0x198] sm:$0xff]
    %v959 = vld [vmem:[#allocation10 + $0x1a0] sm:$0xff]
    %v960 = vld [vmem:[#allocation10 + $0x1a8] sm:$0xff]
    %v961 = vld [vmem:[#allocation10 + $0x1b0] sm:$0xff]
    %v962 = vld [vmem:[#allocation10 + $0x1b8] sm:$0xff]
    %v963 = vld [vmem:[#allocation10 + $0x1c0] sm:$0xff]
    %v964 = vld [vmem:[#allocation10 + $0x1c8] sm:$0xff]
    %v965 = vld [vmem:[#allocation10 + $0x1d0] sm:$0xff]
    %v966 = vld [vmem:[#allocation10 + $0x1d8] sm:$0xff]
    %v967 = vld [vmem:[#allocation10 + $0x1e0] sm:$0xff]
    %v968 = vld [vmem:[#allocation10 + $0x1e8] sm:$0xff]
    %v969 = vld [vmem:[#allocation10 + $0x1f0] sm:$0xff]
    %v970 = vld [vmem:[#allocation10 + $0x1f8] sm:$0xff]
    %v971 = vld [vmem:[#allocation10 + $0x200] sm:$0xff]
    %v972 = vld [vmem:[#allocation10 + $0x208] sm:$0xff]
    %v973 = vld [vmem:[#allocation10 + $0x210] sm:$0xff]
    %v974 = vld [vmem:[#allocation10 + $0x218] sm:$0xff]
    %v975 = vld [vmem:[#allocation10 + $0x220] sm:$0xff]
    %v976 = vld [vmem:[#allocation10 + $0x228] sm:$0xff]
    %v977 = vld [vmem:[#allocation10 + $0x230] sm:$0xff]
    %v978 = vld [vmem:[#allocation10 + $0x238] sm:$0xff]
    %v979 = vld [vmem:[#allocation10 + $0x240] sm:$0xff]
    %v980 = vld [vmem:[#allocation10 + $0x248] sm:$0xff]
    %v981 = vld [vmem:[#allocation10 + $0x250] sm:$0xff]
    %v982 = vld [vmem:[#allocation10 + $0x258] sm:$0xff]
    %v983 = vld [vmem:[#allocation10 + $0x260] sm:$0xff]
    %v984 = vld [vmem:[#allocation10 + $0x268] sm:$0xff]
    %v985 = vld [vmem:[#allocation10 + $0x270] sm:$0xff]
    %v986 = vld [vmem:[#allocation10 + $0x278] sm:$0xff]
    %v987 = vld [vmem:[#allocation10 + $0x280] sm:$0xff]
    %v988 = vld [vmem:[#allocation10 + $0x288] sm:$0xff]
    %v989 = vld [vmem:[#allocation10 + $0x290] sm:$0xff]
    %v990 = vld [vmem:[#allocation10 + $0x298] sm:$0xff]
    %v991 = vld [vmem:[#allocation10 + $0x2a0] sm:$0xff]
    %v992 = vld [vmem:[#allocation10 + $0x2a8] sm:$0xff]
    %v993 = vld [vmem:[#allocation10 + $0x2b0] sm:$0xff]
    %v994 = vld [vmem:[#allocation10 + $0x2b8] sm:$0xff]
    %v995 = vld [vmem:[#allocation10 + $0x2c0] sm:$0xff]
    %v996 = vld [vmem:[#allocation10 + $0x2c8] sm:$0xff]
    %v997 = vld [vmem:[#allocation10 + $0x2d0] sm:$0xff]
    %v998 = vld [vmem:[#allocation10 + $0x2d8] sm:$0xff]
    %v999 = vld [vmem:[#allocation10 + $0x2e0] sm:$0xff]
    %v1000 = vld [vmem:[#allocation10 + $0x2e8] sm:$0xff]
    %v1001 = vld [vmem:[#allocation10 + $0x2f0] sm:$0xff]
    %v1002 = vld [vmem:[#allocation10 + $0x2f8] sm:$0xff]
    %v1003 = vld [vmem:[#allocation10 + $0x300] sm:$0xff]
    %v1004 = vld [vmem:[#allocation10 + $0x308] sm:$0xff]
    %v1005 = vld [vmem:[#allocation10 + $0x310] sm:$0xff]
    %v1006 = vld [vmem:[#allocation10 + $0x318] sm:$0xff]
    %v1007 = vld [vmem:[#allocation10 + $0x320] sm:$0xff]
    %v1008 = vld [vmem:[#allocation10 + $0x328] sm:$0xff]
    %v1009 = vld [vmem:[#allocation10 + $0x330] sm:$0xff]
    %v1010 = vld [vmem:[#allocation10 + $0x338] sm:$0xff]
    %v1011 = vld [vmem:[#allocation10 + $0x340] sm:$0xff]
    %v1012 = vld [vmem:[#allocation10 + $0x348] sm:$0xff]
    %v1013 = vld [vmem:[#allocation10 + $0x350] sm:$0xff]
    %v1014 = vld [vmem:[#allocation10 + $0x358] sm:$0xff]
    %v1015 = vld [vmem:[#allocation10 + $0x360] sm:$0xff]
    %v1016 = vld [vmem:[#allocation10 + $0x368] sm:$0xff]
    %v1017 = vld [vmem:[#allocation10 + $0x370] sm:$0xff]
    %v1018 = vld [vmem:[#allocation10 + $0x378] sm:$0xff]
    %v1019 = vld [vmem:[#allocation10 + $0x380] sm:$0xff]
    %v1020 = vld [vmem:[#allocation10 + $0x388] sm:$0xff]
    %v1021 = vld [vmem:[#allocation10 + $0x390] sm:$0xff]
    %v1022 = vld [vmem:[#allocation10 + $0x398] sm:$0xff]
    %v1023 = vld [vmem:[#allocation10 + $0x3a0] sm:$0xff]
    %v1024 = vld [vmem:[#allocation10 + $0x3a8] sm:$0xff]
    %v1025 = vld [vmem:[#allocation10 + $0x3b0] sm:$0xff]
    %v1026 = vld [vmem:[#allocation10 + $0x3b8] sm:$0xff]
    %v1027 = vld [vmem:[#allocation10 + $0x3c0] sm:$0xff]
    %v1028 = vld [vmem:[#allocation10 + $0x3c8] sm:$0xff]
    %v1029 = vld [vmem:[#allocation10 + $0x3d0] sm:$0xff]
    %v1030 = vld [vmem:[#allocation10 + $0x3d8] sm:$0xff]
    %v1031 = vld [vmem:[#allocation10 + $0x3e0] sm:$0xff]
    %v1032 = vld [vmem:[#allocation10 + $0x3e8] sm:$0xff]
    %v1033 = vld [vmem:[#allocation10 + $0x3f0] sm:$0xff]
    %v1034 = vld [vmem:[#allocation10 + $0x3f8] sm:$0xff]
    %v1035 = vld [vmem:[#allocation10 + $0x400] sm:$0xff]
    %v1036 = vld [vmem:[#allocation10 + $0x408] sm:$0xff]
    %v1037 = vld [vmem:[#allocation10 + $0x410] sm:$0xff]
    %v1038 = vld [vmem:[#allocation10 + $0x418] sm:$0xff]
    %v1039 = vld [vmem:[#allocation10 + $0x420] sm:$0xff]
    %v1040 = vld [vmem:[#allocation10 + $0x428] sm:$0xff]
    %v1041 = vld [vmem:[#allocation10 + $0x430] sm:$0xff]
    %v1042 = vld [vmem:[#allocation10 + $0x438] sm:$0xff]
    %v1043 = vld [vmem:[#allocation10 + $0x440] sm:$0xff]
    %v1044 = vld [vmem:[#allocation10 + $0x448] sm:$0xff]
    %v1045 = vld [vmem:[#allocation10 + $0x450] sm:$0xff]
    %v1046 = vld [vmem:[#allocation10 + $0x458] sm:$0xff]
    %v1047 = vld [vmem:[#allocation10 + $0x460] sm:$0xff]
    %v1048 = vld [vmem:[#allocation10 + $0x468] sm:$0xff]
    %v1049 = vld [vmem:[#allocation10 + $0x470] sm:$0xff]
    %v1050 = vld [vmem:[#allocation10 + $0x478] sm:$0xff]
    %v1051 = vld [vmem:[#allocation10 + $0x480] sm:$0xff]
    %v1052 = vld [vmem:[#allocation10 + $0x488] sm:$0xff]
    %v1053 = vld [vmem:[#allocation10 + $0x490] sm:$0xff]
    %v1054 = vld [vmem:[#allocation10 + $0x498] sm:$0xff]
    %v1055 = vld [vmem:[#allocation10 + $0x4a0] sm:$0xff]
    %v1056 = vld [vmem:[#allocation10 + $0x4a8] sm:$0xff]
    %v1057 = vld [vmem:[#allocation10 + $0x4b0] sm:$0xff]
    %v1058 = vld [vmem:[#allocation10 + $0x4b8] sm:$0xff]
    %v1059 = vld [vmem:[#allocation10 + $0x4c0] sm:$0xff]
    %v1060 = vld [vmem:[#allocation10 + $0x4c8] sm:$0xff]
    %v1061 = vld [vmem:[#allocation10 + $0x4d0] sm:$0xff]
    %v1062 = vld [vmem:[#allocation10 + $0x4d8] sm:$0xff]
    %v1063 = vld [vmem:[#allocation10 + $0x4e0] sm:$0xff]
    %v1064 = vld [vmem:[#allocation10 + $0x4e8] sm:$0xff]
    %v1065 = vld [vmem:[#allocation10 + $0x4f0] sm:$0xff]
    %v1066 = vld [vmem:[#allocation10 + $0x4f8] sm:$0xff]
    %v1067 = vld [vmem:[#allocation10 + $0x500] sm:$0xff]
    %v1068 = vld [vmem:[#allocation10 + $0x508] sm:$0xff]
    %v1069 = vld [vmem:[#allocation10 + $0x510] sm:$0xff]
    %v1070 = vld [vmem:[#allocation10 + $0x518] sm:$0xff]
    %v1071 = vld [vmem:[#allocation10 + $0x520] sm:$0xff]
    %v1072 = vld [vmem:[#allocation10 + $0x528] sm:$0xff]
    %v1073 = vld [vmem:[#allocation10 + $0x530] sm:$0xff]
    %v1074 = vld [vmem:[#allocation10 + $0x538] sm:$0xff]
    %v1075 = vld [vmem:[#allocation10 + $0x540] sm:$0xff]
    %v1076 = vld [vmem:[#allocation10 + $0x548] sm:$0xff]
    %v1077 = vld [vmem:[#allocation10 + $0x550] sm:$0xff]
    %v1078 = vld [vmem:[#allocation10 + $0x558] sm:$0xff]
    %v1079 = vld [vmem:[#allocation10 + $0x560] sm:$0xff]
    %v1080 = vld [vmem:[#allocation10 + $0x568] sm:$0xff]
    %v1081 = vld [vmem:[#allocation10 + $0x570] sm:$0xff]
    %v1082 = vld [vmem:[#allocation10 + $0x578] sm:$0xff]
    %v1083 = vld [vmem:[#allocation10 + $0x580] sm:$0xff]
    %v1084 = vld [vmem:[#allocation10 + $0x588] sm:$0xff]
    %v1085 = vld [vmem:[#allocation10 + $0x590] sm:$0xff]
    %v1086 = vld [vmem:[#allocation10 + $0x598] sm:$0xff]
    %v1087 = vld [vmem:[#allocation10 + $0x5a0] sm:$0xff]
    %v1088 = vld [vmem:[#allocation10 + $0x5a8] sm:$0xff]
    %v1089 = vld [vmem:[#allocation10 + $0x5b0] sm:$0xff]
    %v1090 = vld [vmem:[#allocation10 + $0x5b8] sm:$0xff]
    %v1091 = vld [vmem:[#allocation10 + $0x5c0] sm:$0xff]
    %v1092 = vld [vmem:[#allocation10 + $0x5c8] sm:$0xff]
    %v1093 = vld [vmem:[#allocation10 + $0x5d0] sm:$0xff]
    %v1094 = vld [vmem:[#allocation10 + $0x5d8] sm:$0xff]
    %v1095 = vld [vmem:[#allocation10 + $0x5e0] sm:$0xff]
    %v1096 = vld [vmem:[#allocation10 + $0x5e8] sm:$0xff]
    %v1097 = vld [vmem:[#allocation10 + $0x5f0] sm:$0xff]
    %v1098 = vld [vmem:[#allocation10 + $0x5f8] sm:$0xff]
    %v1099 = vld [vmem:[#allocation10 + $0x600] sm:$0xff]
    %v1100 = vld [vmem:[#allocation10 + $0x608] sm:$0xff]
    %v1101 = vld [vmem:[#allocation10 + $0x610] sm:$0xff]
    %v1102 = vld [vmem:[#allocation10 + $0x618] sm:$0xff]
    %v1103 = vld [vmem:[#allocation10 + $0x620] sm:$0xff]
    %v1104 = vld [vmem:[#allocation10 + $0x628] sm:$0xff]
    %v1105 = vld [vmem:[#allocation10 + $0x630] sm:$0xff]
    %v1106 = vld [vmem:[#allocation10 + $0x638] sm:$0xff]
    %v1107 = vld [vmem:[#allocation10 + $0x640] sm:$0xff]
    %v1108 = vld [vmem:[#allocation10 + $0x648] sm:$0xff]
    %v1109 = vld [vmem:[#allocation10 + $0x650] sm:$0xff]
    %v1110 = vld [vmem:[#allocation10 + $0x658] sm:$0xff]
    %v1111 = vld [vmem:[#allocation10 + $0x660] sm:$0xff]
    %v1112 = vld [vmem:[#allocation10 + $0x668] sm:$0xff]
    %v1113 = vld [vmem:[#allocation10 + $0x670] sm:$0xff]
    %v1114 = vld [vmem:[#allocation10 + $0x678] sm:$0xff]
    %v1115 = vld [vmem:[#allocation10 + $0x680] sm:$0xff]
    %v1116 = vld [vmem:[#allocation10 + $0x688] sm:$0xff]
    %v1117 = vld [vmem:[#allocation10 + $0x690] sm:$0xff]
    %v1118 = vld [vmem:[#allocation10 + $0x698] sm:$0xff]
    %v1119 = vld [vmem:[#allocation10 + $0x6a0] sm:$0xff]
    %v1120 = vld [vmem:[#allocation10 + $0x6a8] sm:$0xff]
    %v1121 = vld [vmem:[#allocation10 + $0x6b0] sm:$0xff]
    %v1122 = vld [vmem:[#allocation10 + $0x6b8] sm:$0xff]
    %v1123 = vld [vmem:[#allocation10 + $0x6c0] sm:$0xff]
    %v1124 = vld [vmem:[#allocation10 + $0x6c8] sm:$0xff]
    %v1125 = vld [vmem:[#allocation10 + $0x6d0] sm:$0xff]
    %v1126 = vld [vmem:[#allocation10 + $0x6d8] sm:$0xff]
    %v1127 = vld [vmem:[#allocation10 + $0x6e0] sm:$0xff]
    %v1128 = vld [vmem:[#allocation10 + $0x6e8] sm:$0xff]
    %v1129 = vld [vmem:[#allocation10 + $0x6f0] sm:$0xff]
    %v1130 = vld [vmem:[#allocation10 + $0x6f8] sm:$0xff]
    %v1131 = vld [vmem:[#allocation10 + $0x700] sm:$0xff]
    %v1132 = vld [vmem:[#allocation10 + $0x708] sm:$0xff]
    %v1133 = vld [vmem:[#allocation10 + $0x710] sm:$0xff]
    %v1134 = vld [vmem:[#allocation10 + $0x718] sm:$0xff]
    %v1135 = vld [vmem:[#allocation10 + $0x720] sm:$0xff]
    %v1136 = vld [vmem:[#allocation10 + $0x728] sm:$0xff]
    %v1137 = vld [vmem:[#allocation10 + $0x730] sm:$0xff]
    %v1138 = vld [vmem:[#allocation10 + $0x738] sm:$0xff]
    %v1139 = vld [vmem:[#allocation10 + $0x740] sm:$0xff]
    %v1140 = vld [vmem:[#allocation10 + $0x748] sm:$0xff]
    %v1141 = vld [vmem:[#allocation10 + $0x750] sm:$0xff]
    %v1142 = vld [vmem:[#allocation10 + $0x758] sm:$0xff]
    %v1143 = vld [vmem:[#allocation10 + $0x760] sm:$0xff]
    %v1144 = vld [vmem:[#allocation10 + $0x768] sm:$0xff]
    %v1145 = vld [vmem:[#allocation10 + $0x770] sm:$0xff]
    %v1146 = vld [vmem:[#allocation10 + $0x778] sm:$0xff]
    %v1147 = vld [vmem:[#allocation10 + $0x780] sm:$0xff]
    %v1148 = vld [vmem:[#allocation10 + $0x788] sm:$0xff]
    %v1149 = vld [vmem:[#allocation10 + $0x790] sm:$0xff]
    %v1150 = vld [vmem:[#allocation10 + $0x798] sm:$0xff]
    %v1151 = vld [vmem:[#allocation10 + $0x7a0] sm:$0xff]
    %v1152 = vld [vmem:[#allocation10 + $0x7a8] sm:$0xff]
    %v1153 = vld [vmem:[#allocation10 + $0x7b0] sm:$0xff]
    %v1154 = vld [vmem:[#allocation10 + $0x7b8] sm:$0xff]
    %v1155 = vld [vmem:[#allocation10 + $0x7c0] sm:$0xff]
    %v1156 = vld [vmem:[#allocation10 + $0x7c8] sm:$0xff]
    %v1157 = vld [vmem:[#allocation10 + $0x7d0] sm:$0xff]
    %v1158 = vld [vmem:[#allocation10 + $0x7d8] sm:$0xff]
    %v1159 = vld [vmem:[#allocation10 + $0x7e0] sm:$0xff]
    %v1160 = vld [vmem:[#allocation10 + $0x7e8] sm:$0xff]
    %v1161 = vld [vmem:[#allocation10 + $0x7f0] sm:$0xff]
    %v1162 = vld [vmem:[#allocation10 + $0x7f8] sm:$0xff]
    %v1163 = vld [vmem:[#allocation12] sm:$0xff]
    %v1165 = vperm.slane %v1163, 0
    %v1166 = vperm.slane %v1163, 1
    %v1167 = vperm.slane %v1163, 2
    %v1168 = vperm.slane %v1163, 3
    %v1169 = vperm.slane %v1163, 4
    %v1170 = vperm.slane %v1163, 5
    %v1171 = vperm.slane %v1163, 6
    %v1172 = vperm.slane %v1163, 7
    %v1437 = vunpack.c.l.b16 %v907
    %v1438 = vunpack.c.h.b16 %v907
    %v1439 = vunpack.c.l.b16 %v908
    %v1440 = vunpack.c.h.b16 %v908
    %v1441 = vunpack.c.l.b16 %v909
    %v1442 = vunpack.c.h.b16 %v909
    %v1443 = vunpack.c.l.b16 %v910
    %v1444 = vunpack.c.h.b16 %v910
    %v1445 = vunpack.c.l.b16 %v911
    %v1446 = vunpack.c.h.b16 %v911
    %v1447 = vunpack.c.l.b16 %v912
    %v1448 = vunpack.c.h.b16 %v912
    %v1449 = vunpack.c.l.b16 %v913
    %v1450 = vunpack.c.h.b16 %v913
    %v1451 = vunpack.c.l.b16 %v914
    %v1452 = vunpack.c.h.b16 %v914
    %v1453 = vunpack.c.l.b16 %v915
    %v1454 = vunpack.c.h.b16 %v915
    %v1455 = vunpack.c.l.b16 %v916
    %v1456 = vunpack.c.h.b16 %v916
    %v1457 = vunpack.c.l.b16 %v917
    %v1458 = vunpack.c.h.b16 %v917
    %v1459 = vunpack.c.l.b16 %v918
    %v1460 = vunpack.c.h.b16 %v918
    %v1461 = vunpack.c.l.b16 %v919
    %v1462 = vunpack.c.h.b16 %v919
    %v1463 = vunpack.c.l.b16 %v920
    %v1464 = vunpack.c.h.b16 %v920
    %v1465 = vunpack.c.l.b16 %v921
    %v1466 = vunpack.c.h.b16 %v921
    %v1467 = vunpack.c.l.b16 %v922
    %v1468 = vunpack.c.h.b16 %v922
    %v1469 = vunpack.c.l.b16 %v923
    %v1470 = vunpack.c.h.b16 %v923
    %v1471 = vunpack.c.l.b16 %v924
    %v1472 = vunpack.c.h.b16 %v924
    %v1473 = vunpack.c.l.b16 %v925
    %v1474 = vunpack.c.h.b16 %v925
    %v1475 = vunpack.c.l.b16 %v926
    %v1476 = vunpack.c.h.b16 %v926
    %v1477 = vunpack.c.l.b16 %v927
    %v1478 = vunpack.c.h.b16 %v927
    %v1479 = vunpack.c.l.b16 %v928
    %v1480 = vunpack.c.h.b16 %v928
    %v1481 = vunpack.c.l.b16 %v929
    %v1482 = vunpack.c.h.b16 %v929
    %v1483 = vunpack.c.l.b16 %v930
    %v1484 = vunpack.c.h.b16 %v930
    %v1485 = vunpack.c.l.b16 %v931
    %v1486 = vunpack.c.h.b16 %v931
    %v1487 = vunpack.c.l.b16 %v932
    %v1488 = vunpack.c.h.b16 %v932
    %v1489 = vunpack.c.l.b16 %v933
    %v1490 = vunpack.c.h.b16 %v933
    %v1491 = vunpack.c.l.b16 %v934
    %v1492 = vunpack.c.h.b16 %v934
    %v1493 = vunpack.c.l.b16 %v935
    %v1494 = vunpack.c.h.b16 %v935
    %v1495 = vunpack.c.l.b16 %v936
    %v1496 = vunpack.c.h.b16 %v936
    %v1497 = vunpack.c.l.b16 %v937
    %v1498 = vunpack.c.h.b16 %v937
    %v1499 = vunpack.c.l.b16 %v938
    %v1500 = vunpack.c.h.b16 %v938
    %v1501 = vunpack.c.l.b16 %v939
    %v1502 = vunpack.c.h.b16 %v939
    %v1503 = vunpack.c.l.b16 %v940
    %v1504 = vunpack.c.h.b16 %v940
    %v1505 = vunpack.c.l.b16 %v941
    %v1506 = vunpack.c.h.b16 %v941
    %v1507 = vunpack.c.l.b16 %v942
    %v1508 = vunpack.c.h.b16 %v942
    %v1509 = vunpack.c.l.b16 %v943
    %v1510 = vunpack.c.h.b16 %v943
    %v1511 = vunpack.c.l.b16 %v944
    %v1512 = vunpack.c.h.b16 %v944
    %v1513 = vunpack.c.l.b16 %v945
    %v1514 = vunpack.c.h.b16 %v945
    %v1515 = vunpack.c.l.b16 %v946
    %v1516 = vunpack.c.h.b16 %v946
    %v1517 = vunpack.c.l.b16 %v947
    %v1518 = vunpack.c.h.b16 %v947
    %v1519 = vunpack.c.l.b16 %v948
    %v1520 = vunpack.c.h.b16 %v948
    %v1521 = vunpack.c.l.b16 %v949
    %v1522 = vunpack.c.h.b16 %v949
    %v1523 = vunpack.c.l.b16 %v950
    %v1524 = vunpack.c.h.b16 %v950
    %v1525 = vunpack.c.l.b16 %v951
    %v1526 = vunpack.c.h.b16 %v951
    %v1527 = vunpack.c.l.b16 %v952
    %v1528 = vunpack.c.h.b16 %v952
    %v1529 = vunpack.c.l.b16 %v953
    %v1530 = vunpack.c.h.b16 %v953
    %v1531 = vunpack.c.l.b16 %v954
    %v1532 = vunpack.c.h.b16 %v954
    %v1533 = vunpack.c.l.b16 %v955
    %v1534 = vunpack.c.h.b16 %v955
    %v1535 = vunpack.c.l.b16 %v956
    %v1536 = vunpack.c.h.b16 %v956
    %v1537 = vunpack.c.l.b16 %v957
    %v1538 = vunpack.c.h.b16 %v957
    %v1539 = vunpack.c.l.b16 %v958
    %v1540 = vunpack.c.h.b16 %v958
    %v1541 = vunpack.c.l.b16 %v959
    %v1542 = vunpack.c.h.b16 %v959
    %v1543 = vunpack.c.l.b16 %v960
    %v1544 = vunpack.c.h.b16 %v960
    %v1545 = vunpack.c.l.b16 %v961
    %v1546 = vunpack.c.h.b16 %v961
    %v1547 = vunpack.c.l.b16 %v962
    %v1548 = vunpack.c.h.b16 %v962
    %v1549 = vunpack.c.l.b16 %v963
    %v1550 = vunpack.c.h.b16 %v963
    %v1551 = vunpack.c.l.b16 %v964
    %v1552 = vunpack.c.h.b16 %v964
    %v1553 = vunpack.c.l.b16 %v965
    %v1554 = vunpack.c.h.b16 %v965
    %v1555 = vunpack.c.l.b16 %v966
    %v1556 = vunpack.c.h.b16 %v966
    %v1557 = vunpack.c.l.b16 %v967
    %v1558 = vunpack.c.h.b16 %v967
    %v1559 = vunpack.c.l.b16 %v968
    %v1560 = vunpack.c.h.b16 %v968
    %v1561 = vunpack.c.l.b16 %v969
    %v1562 = vunpack.c.h.b16 %v969
    %v1563 = vunpack.c.l.b16 %v970
    %v1564 = vunpack.c.h.b16 %v970
    %v1565 = vunpack.c.l.b16 %v971
    %v1566 = vunpack.c.h.b16 %v971
    %v1567 = vunpack.c.l.b16 %v972
    %v1568 = vunpack.c.h.b16 %v972
    %v1569 = vunpack.c.l.b16 %v973
    %v1570 = vunpack.c.h.b16 %v973
    %v1571 = vunpack.c.l.b16 %v974
    %v1572 = vunpack.c.h.b16 %v974
    %v1573 = vunpack.c.l.b16 %v975
    %v1574 = vunpack.c.h.b16 %v975
    %v1575 = vunpack.c.l.b16 %v976
    %v1576 = vunpack.c.h.b16 %v976
    %v1577 = vunpack.c.l.b16 %v977
    %v1578 = vunpack.c.h.b16 %v977
    %v1579 = vunpack.c.l.b16 %v978
    %v1580 = vunpack.c.h.b16 %v978
    %v1581 = vunpack.c.l.b16 %v979
    %v1582 = vunpack.c.h.b16 %v979
    %v1583 = vunpack.c.l.b16 %v980
    %v1584 = vunpack.c.h.b16 %v980
    %v1585 = vunpack.c.l.b16 %v981
    %v1586 = vunpack.c.h.b16 %v981
    %v1587 = vunpack.c.l.b16 %v982
    %v1588 = vunpack.c.h.b16 %v982
    %v1589 = vunpack.c.l.b16 %v983
    %v1590 = vunpack.c.h.b16 %v983
    %v1591 = vunpack.c.l.b16 %v984
    %v1592 = vunpack.c.h.b16 %v984
    %v1593 = vunpack.c.l.b16 %v985
    %v1594 = vunpack.c.h.b16 %v985
    %v1595 = vunpack.c.l.b16 %v986
    %v1596 = vunpack.c.h.b16 %v986
    %v1597 = vunpack.c.l.b16 %v987
    %v1598 = vunpack.c.h.b16 %v987
    %v1599 = vunpack.c.l.b16 %v988
    %v1600 = vunpack.c.h.b16 %v988
    %v1601 = vunpack.c.l.b16 %v989
    %v1602 = vunpack.c.h.b16 %v989
    %v1603 = vunpack.c.l.b16 %v990
    %v1604 = vunpack.c.h.b16 %v990
    %v1605 = vunpack.c.l.b16 %v991
    %v1606 = vunpack.c.h.b16 %v991
    %v1607 = vunpack.c.l.b16 %v992
    %v1608 = vunpack.c.h.b16 %v992
    %v1609 = vunpack.c.l.b16 %v993
    %v1610 = vunpack.c.h.b16 %v993
    %v1611 = vunpack.c.l.b16 %v994
    %v1612 = vunpack.c.h.b16 %v994
    %v1613 = vunpack.c.l.b16 %v995
    %v1614 = vunpack.c.h.b16 %v995
    %v1615 = vunpack.c.l.b16 %v996
    %v1616 = vunpack.c.h.b16 %v996
    %v1617 = vunpack.c.l.b16 %v997
    %v1618 = vunpack.c.h.b16 %v997
    %v1619 = vunpack.c.l.b16 %v998
    %v1620 = vunpack.c.h.b16 %v998
    %v1621 = vunpack.c.l.b16 %v999
    %v1622 = vunpack.c.h.b16 %v999
    %v1623 = vunpack.c.l.b16 %v1000
    %v1624 = vunpack.c.h.b16 %v1000
    %v1625 = vunpack.c.l.b16 %v1001
    %v1626 = vunpack.c.h.b16 %v1001
    %v1627 = vunpack.c.l.b16 %v1002
    %v1628 = vunpack.c.h.b16 %v1002
    %v1629 = vunpack.c.l.b16 %v1003
    %v1630 = vunpack.c.h.b16 %v1003
    %v1631 = vunpack.c.l.b16 %v1004
    %v1632 = vunpack.c.h.b16 %v1004
    %v1633 = vunpack.c.l.b16 %v1005
    %v1634 = vunpack.c.h.b16 %v1005
    %v1635 = vunpack.c.l.b16 %v1006
    %v1636 = vunpack.c.h.b16 %v1006
    %v1637 = vunpack.c.l.b16 %v1007
    %v1638 = vunpack.c.h.b16 %v1007
    %v1639 = vunpack.c.l.b16 %v1008
    %v1640 = vunpack.c.h.b16 %v1008
    %v1641 = vunpack.c.l.b16 %v1009
    %v1642 = vunpack.c.h.b16 %v1009
    %v1643 = vunpack.c.l.b16 %v1010
    %v1644 = vunpack.c.h.b16 %v1010
    %v1645 = vunpack.c.l.b16 %v1011
    %v1646 = vunpack.c.h.b16 %v1011
    %v1647 = vunpack.c.l.b16 %v1012
    %v1648 = vunpack.c.h.b16 %v1012
    %v1649 = vunpack.c.l.b16 %v1013
    %v1650 = vunpack.c.h.b16 %v1013
    %v1651 = vunpack.c.l.b16 %v1014
    %v1652 = vunpack.c.h.b16 %v1014
    %v1653 = vunpack.c.l.b16 %v1015
    %v1654 = vunpack.c.h.b16 %v1015
    %v1655 = vunpack.c.l.b16 %v1016
    %v1656 = vunpack.c.h.b16 %v1016
    %v1657 = vunpack.c.l.b16 %v1017
    %v1658 = vunpack.c.h.b16 %v1017
    %v1659 = vunpack.c.l.b16 %v1018
    %v1660 = vunpack.c.h.b16 %v1018
    %v1661 = vunpack.c.l.b16 %v1019
    %v1662 = vunpack.c.h.b16 %v1019
    %v1663 = vunpack.c.l.b16 %v1020
    %v1664 = vunpack.c.h.b16 %v1020
    %v1665 = vunpack.c.l.b16 %v1021
    %v1666 = vunpack.c.h.b16 %v1021
    %v1667 = vunpack.c.l.b16 %v1022
    %v1668 = vunpack.c.h.b16 %v1022
    %v1669 = vunpack.c.l.b16 %v1023
    %v1670 = vunpack.c.h.b16 %v1023
    %v1671 = vunpack.c.l.b16 %v1024
    %v1672 = vunpack.c.h.b16 %v1024
    %v1673 = vunpack.c.l.b16 %v1025
    %v1674 = vunpack.c.h.b16 %v1025
    %v1675 = vunpack.c.l.b16 %v1026
    %v1676 = vunpack.c.h.b16 %v1026
    %v1677 = vunpack.c.l.b16 %v1027
    %v1678 = vunpack.c.h.b16 %v1027
    %v1679 = vunpack.c.l.b16 %v1028
    %v1680 = vunpack.c.h.b16 %v1028
    %v1681 = vunpack.c.l.b16 %v1029
    %v1682 = vunpack.c.h.b16 %v1029
    %v1683 = vunpack.c.l.b16 %v1030
    %v1684 = vunpack.c.h.b16 %v1030
    %v1685 = vunpack.c.l.b16 %v1031
    %v1686 = vunpack.c.h.b16 %v1031
    %v1687 = vunpack.c.l.b16 %v1032
    %v1688 = vunpack.c.h.b16 %v1032
    %v1689 = vunpack.c.l.b16 %v1033
    %v1690 = vunpack.c.h.b16 %v1033
    %v1691 = vunpack.c.l.b16 %v1034
    %v1692 = vunpack.c.h.b16 %v1034
    %v1693 = vunpack.c.l.b16 %v1035
    %v1694 = vunpack.c.h.b16 %v1035
    %v1695 = vunpack.c.l.b16 %v1036
    %v1696 = vunpack.c.h.b16 %v1036
    %v1697 = vunpack.c.l.b16 %v1037
    %v1698 = vunpack.c.h.b16 %v1037
    %v1699 = vunpack.c.l.b16 %v1038
    %v1700 = vunpack.c.h.b16 %v1038
    %v1701 = vunpack.c.l.b16 %v1039
    %v1702 = vunpack.c.h.b16 %v1039
    %v1703 = vunpack.c.l.b16 %v1040
    %v1704 = vunpack.c.h.b16 %v1040
    %v1705 = vunpack.c.l.b16 %v1041
    %v1706 = vunpack.c.h.b16 %v1041
    %v1707 = vunpack.c.l.b16 %v1042
    %v1708 = vunpack.c.h.b16 %v1042
    %v1709 = vunpack.c.l.b16 %v1043
    %v1710 = vunpack.c.h.b16 %v1043
    %v1711 = vunpack.c.l.b16 %v1044
    %v1712 = vunpack.c.h.b16 %v1044
    %v1713 = vunpack.c.l.b16 %v1045
    %v1714 = vunpack.c.h.b16 %v1045
    %v1715 = vunpack.c.l.b16 %v1046
    %v1716 = vunpack.c.h.b16 %v1046
    %v1717 = vunpack.c.l.b16 %v1047
    %v1718 = vunpack.c.h.b16 %v1047
    %v1719 = vunpack.c.l.b16 %v1048
    %v1720 = vunpack.c.h.b16 %v1048
    %v1721 = vunpack.c.l.b16 %v1049
    %v1722 = vunpack.c.h.b16 %v1049
    %v1723 = vunpack.c.l.b16 %v1050
    %v1724 = vunpack.c.h.b16 %v1050
    %v1725 = vunpack.c.l.b16 %v1051
    %v1726 = vunpack.c.h.b16 %v1051
    %v1727 = vunpack.c.l.b16 %v1052
    %v1728 = vunpack.c.h.b16 %v1052
    %v1729 = vunpack.c.l.b16 %v1053
    %v1730 = vunpack.c.h.b16 %v1053
    %v1731 = vunpack.c.l.b16 %v1054
    %v1732 = vunpack.c.h.b16 %v1054
    %v1733 = vunpack.c.l.b16 %v1055
    %v1734 = vunpack.c.h.b16 %v1055
    %v1735 = vunpack.c.l.b16 %v1056
    %v1736 = vunpack.c.h.b16 %v1056
    %v1737 = vunpack.c.l.b16 %v1057
    %v1738 = vunpack.c.h.b16 %v1057
    %v1739 = vunpack.c.l.b16 %v1058
    %v1740 = vunpack.c.h.b16 %v1058
    %v1741 = vunpack.c.l.b16 %v1059
    %v1742 = vunpack.c.h.b16 %v1059
    %v1743 = vunpack.c.l.b16 %v1060
    %v1744 = vunpack.c.h.b16 %v1060
    %v1745 = vunpack.c.l.b16 %v1061
    %v1746 = vunpack.c.h.b16 %v1061
    %v1747 = vunpack.c.l.b16 %v1062
    %v1748 = vunpack.c.h.b16 %v1062
    %v1749 = vunpack.c.l.b16 %v1063
    %v1750 = vunpack.c.h.b16 %v1063
    %v1751 = vunpack.c.l.b16 %v1064
    %v1752 = vunpack.c.h.b16 %v1064
    %v1753 = vunpack.c.l.b16 %v1065
    %v1754 = vunpack.c.h.b16 %v1065
    %v1755 = vunpack.c.l.b16 %v1066
    %v1756 = vunpack.c.h.b16 %v1066
    %v1757 = vunpack.c.l.b16 %v1067
    %v1758 = vunpack.c.h.b16 %v1067
    %v1759 = vunpack.c.l.b16 %v1068
    %v1760 = vunpack.c.h.b16 %v1068
    %v1761 = vunpack.c.l.b16 %v1069
    %v1762 = vunpack.c.h.b16 %v1069
    %v1763 = vunpack.c.l.b16 %v1070
    %v1764 = vunpack.c.h.b16 %v1070
    %v1765 = vunpack.c.l.b16 %v1071
    %v1766 = vunpack.c.h.b16 %v1071
    %v1767 = vunpack.c.l.b16 %v1072
    %v1768 = vunpack.c.h.b16 %v1072
    %v1769 = vunpack.c.l.b16 %v1073
    %v1770 = vunpack.c.h.b16 %v1073
    %v1771 = vunpack.c.l.b16 %v1074
    %v1772 = vunpack.c.h.b16 %v1074
    %v1773 = vunpack.c.l.b16 %v1075
    %v1774 = vunpack.c.h.b16 %v1075
    %v1775 = vunpack.c.l.b16 %v1076
    %v1776 = vunpack.c.h.b16 %v1076
    %v1777 = vunpack.c.l.b16 %v1077
    %v1778 = vunpack.c.h.b16 %v1077
    %v1779 = vunpack.c.l.b16 %v1078
    %v1780 = vunpack.c.h.b16 %v1078
    %v1781 = vunpack.c.l.b16 %v1079
    %v1782 = vunpack.c.h.b16 %v1079
    %v1783 = vunpack.c.l.b16 %v1080
    %v1784 = vunpack.c.h.b16 %v1080
    %v1785 = vunpack.c.l.b16 %v1081
    %v1786 = vunpack.c.h.b16 %v1081
    %v1787 = vunpack.c.l.b16 %v1082
    %v1788 = vunpack.c.h.b16 %v1082
    %v1789 = vunpack.c.l.b16 %v1083
    %v1790 = vunpack.c.h.b16 %v1083
    %v1791 = vunpack.c.l.b16 %v1084
    %v1792 = vunpack.c.h.b16 %v1084
    %v1793 = vunpack.c.l.b16 %v1085
    %v1794 = vunpack.c.h.b16 %v1085
    %v1795 = vunpack.c.l.b16 %v1086
    %v1796 = vunpack.c.h.b16 %v1086
    %v1797 = vunpack.c.l.b16 %v1087
    %v1798 = vunpack.c.h.b16 %v1087
    %v1799 = vunpack.c.l.b16 %v1088
    %v1800 = vunpack.c.h.b16 %v1088
    %v1801 = vunpack.c.l.b16 %v1089
    %v1802 = vunpack.c.h.b16 %v1089
    %v1803 = vunpack.c.l.b16 %v1090
    %v1804 = vunpack.c.h.b16 %v1090
    %v1805 = vunpack.c.l.b16 %v1091
    %v1806 = vunpack.c.h.b16 %v1091
    %v1807 = vunpack.c.l.b16 %v1092
    %v1808 = vunpack.c.h.b16 %v1092
    %v1809 = vunpack.c.l.b16 %v1093
    %v1810 = vunpack.c.h.b16 %v1093
    %v1811 = vunpack.c.l.b16 %v1094
    %v1812 = vunpack.c.h.b16 %v1094
    %v1813 = vunpack.c.l.b16 %v1095
    %v1814 = vunpack.c.h.b16 %v1095
    %v1815 = vunpack.c.l.b16 %v1096
    %v1816 = vunpack.c.h.b16 %v1096
    %v1817 = vunpack.c.l.b16 %v1097
    %v1818 = vunpack.c.h.b16 %v1097
    %v1819 = vunpack.c.l.b16 %v1098
    %v1820 = vunpack.c.h.b16 %v1098
    %v1821 = vunpack.c.l.b16 %v1099
    %v1822 = vunpack.c.h.b16 %v1099
    %v1823 = vunpack.c.l.b16 %v1100
    %v1824 = vunpack.c.h.b16 %v1100
    %v1825 = vunpack.c.l.b16 %v1101
    %v1826 = vunpack.c.h.b16 %v1101
    %v1827 = vunpack.c.l.b16 %v1102
    %v1828 = vunpack.c.h.b16 %v1102
    %v1829 = vunpack.c.l.b16 %v1103
    %v1830 = vunpack.c.h.b16 %v1103
    %v1831 = vunpack.c.l.b16 %v1104
    %v1832 = vunpack.c.h.b16 %v1104
    %v1833 = vunpack.c.l.b16 %v1105
    %v1834 = vunpack.c.h.b16 %v1105
    %v1835 = vunpack.c.l.b16 %v1106
    %v1836 = vunpack.c.h.b16 %v1106
    %v1837 = vunpack.c.l.b16 %v1107
    %v1838 = vunpack.c.h.b16 %v1107
    %v1839 = vunpack.c.l.b16 %v1108
    %v1840 = vunpack.c.h.b16 %v1108
    %v1841 = vunpack.c.l.b16 %v1109
    %v1842 = vunpack.c.h.b16 %v1109
    %v1843 = vunpack.c.l.b16 %v1110
    %v1844 = vunpack.c.h.b16 %v1110
    %v1845 = vunpack.c.l.b16 %v1111
    %v1846 = vunpack.c.h.b16 %v1111
    %v1847 = vunpack.c.l.b16 %v1112
    %v1848 = vunpack.c.h.b16 %v1112
    %v1849 = vunpack.c.l.b16 %v1113
    %v1850 = vunpack.c.h.b16 %v1113
    %v1851 = vunpack.c.l.b16 %v1114
    %v1852 = vunpack.c.h.b16 %v1114
    %v1853 = vunpack.c.l.b16 %v1115
    %v1854 = vunpack.c.h.b16 %v1115
    %v1855 = vunpack.c.l.b16 %v1116
    %v1856 = vunpack.c.h.b16 %v1116
    %v1857 = vunpack.c.l.b16 %v1117
    %v1858 = vunpack.c.h.b16 %v1117
    %v1859 = vunpack.c.l.b16 %v1118
    %v1860 = vunpack.c.h.b16 %v1118
    %v1861 = vunpack.c.l.b16 %v1119
    %v1862 = vunpack.c.h.b16 %v1119
    %v1863 = vunpack.c.l.b16 %v1120
    %v1864 = vunpack.c.h.b16 %v1120
    %v1865 = vunpack.c.l.b16 %v1121
    %v1866 = vunpack.c.h.b16 %v1121
    %v1867 = vunpack.c.l.b16 %v1122
    %v1868 = vunpack.c.h.b16 %v1122
    %v1869 = vunpack.c.l.b16 %v1123
    %v1870 = vunpack.c.h.b16 %v1123
    %v1871 = vunpack.c.l.b16 %v1124
    %v1872 = vunpack.c.h.b16 %v1124
    %v1873 = vunpack.c.l.b16 %v1125
    %v1874 = vunpack.c.h.b16 %v1125
    %v1875 = vunpack.c.l.b16 %v1126
    %v1876 = vunpack.c.h.b16 %v1126
    %v1877 = vunpack.c.l.b16 %v1127
    %v1878 = vunpack.c.h.b16 %v1127
    %v1879 = vunpack.c.l.b16 %v1128
    %v1880 = vunpack.c.h.b16 %v1128
    %v1881 = vunpack.c.l.b16 %v1129
    %v1882 = vunpack.c.h.b16 %v1129
    %v1883 = vunpack.c.l.b16 %v1130
    %v1884 = vunpack.c.h.b16 %v1130
    %v1885 = vunpack.c.l.b16 %v1131
    %v1886 = vunpack.c.h.b16 %v1131
    %v1887 = vunpack.c.l.b16 %v1132
    %v1888 = vunpack.c.h.b16 %v1132
    %v1889 = vunpack.c.l.b16 %v1133
    %v1890 = vunpack.c.h.b16 %v1133
    %v1891 = vunpack.c.l.b16 %v1134
    %v1892 = vunpack.c.h.b16 %v1134
    %v1893 = vunpack.c.l.b16 %v1135
    %v1894 = vunpack.c.h.b16 %v1135
    %v1895 = vunpack.c.l.b16 %v1136
    %v1896 = vunpack.c.h.b16 %v1136
    %v1897 = vunpack.c.l.b16 %v1137
    %v1898 = vunpack.c.h.b16 %v1137
    %v1899 = vunpack.c.l.b16 %v1138
    %v1900 = vunpack.c.h.b16 %v1138
    %v1901 = vunpack.c.l.b16 %v1139
    %v1902 = vunpack.c.h.b16 %v1139
    %v1903 = vunpack.c.l.b16 %v1140
    %v1904 = vunpack.c.h.b16 %v1140
    %v1905 = vunpack.c.l.b16 %v1141
    %v1906 = vunpack.c.h.b16 %v1141
    %v1907 = vunpack.c.l.b16 %v1142
    %v1908 = vunpack.c.h.b16 %v1142
    %v1909 = vunpack.c.l.b16 %v1143
    %v1910 = vunpack.c.h.b16 %v1143
    %v1911 = vunpack.c.l.b16 %v1144
    %v1912 = vunpack.c.h.b16 %v1144
    %v1913 = vunpack.c.l.b16 %v1145
    %v1914 = vunpack.c.h.b16 %v1145
    %v1915 = vunpack.c.l.b16 %v1146
    %v1916 = vunpack.c.h.b16 %v1146
    %v1917 = vunpack.c.l.b16 %v1147
    %v1918 = vunpack.c.h.b16 %v1147
    %v1919 = vunpack.c.l.b16 %v1148
    %v1920 = vunpack.c.h.b16 %v1148
    %v1921 = vunpack.c.l.b16 %v1149
    %v1922 = vunpack.c.h.b16 %v1149
    %v1923 = vunpack.c.l.b16 %v1150
    %v1924 = vunpack.c.h.b16 %v1150
    %v1925 = vunpack.c.l.b16 %v1151
    %v1926 = vunpack.c.h.b16 %v1151
    %v1927 = vunpack.c.l.b16 %v1152
    %v1928 = vunpack.c.h.b16 %v1152
    %v1929 = vunpack.c.l.b16 %v1153
    %v1930 = vunpack.c.h.b16 %v1153
    %v1931 = vunpack.c.l.b16 %v1154
    %v1932 = vunpack.c.h.b16 %v1154
    %v1933 = vunpack.c.l.b16 %v1155
    %v1934 = vunpack.c.h.b16 %v1155
    %v1935 = vunpack.c.l.b16 %v1156
    %v1936 = vunpack.c.h.b16 %v1156
    %v1937 = vunpack.c.l.b16 %v1157
    %v1938 = vunpack.c.h.b16 %v1157
    %v1939 = vunpack.c.l.b16 %v1158
    %v1940 = vunpack.c.h.b16 %v1158
    %v1941 = vunpack.c.l.b16 %v1159
    %v1942 = vunpack.c.h.b16 %v1159
    %v1943 = vunpack.c.l.b16 %v1160
    %v1944 = vunpack.c.h.b16 %v1160
    %v1945 = vunpack.c.l.b16 %v1161
    %v1946 = vunpack.c.h.b16 %v1161
    %v1947 = vunpack.c.l.b16 %v1162
    %v1948 = vunpack.c.h.b16 %v1162
    %v1949 = vpack.c.b16 %v1445, %v1437
    %v1950 = vpack.c.b16 %v1446, %v1438
    %v1951 = vpack.c.b16 %v1447, %v1439
    %v1952 = vpack.c.b16 %v1448, %v1440
    %v1953 = vpack.c.b16 %v1449, %v1441
    %v1954 = vpack.c.b16 %v1450, %v1442
    %v1955 = vpack.c.b16 %v1451, %v1443
    %v1956 = vpack.c.b16 %v1452, %v1444
    %v1957 = vpack.c.b16 %v1461, %v1453
    %v1958 = vpack.c.b16 %v1462, %v1454
    %v1959 = vpack.c.b16 %v1463, %v1455
    %v1960 = vpack.c.b16 %v1464, %v1456
    %v1961 = vpack.c.b16 %v1465, %v1457
    %v1962 = vpack.c.b16 %v1466, %v1458
    %v1963 = vpack.c.b16 %v1467, %v1459
    %v1964 = vpack.c.b16 %v1468, %v1460
    %v1965 = vpack.c.b16 %v1477, %v1469
    %v1966 = vpack.c.b16 %v1478, %v1470
    %v1967 = vpack.c.b16 %v1479, %v1471
    %v1968 = vpack.c.b16 %v1480, %v1472
    %v1969 = vpack.c.b16 %v1481, %v1473
    %v1970 = vpack.c.b16 %v1482, %v1474
    %v1971 = vpack.c.b16 %v1483, %v1475
    %v1972 = vpack.c.b16 %v1484, %v1476
    %v1973 = vpack.c.b16 %v1493, %v1485
    %v1974 = vpack.c.b16 %v1494, %v1486
    %v1975 = vpack.c.b16 %v1495, %v1487
    %v1976 = vpack.c.b16 %v1496, %v1488
    %v1977 = vpack.c.b16 %v1497, %v1489
    %v1978 = vpack.c.b16 %v1498, %v1490
    %v1979 = vpack.c.b16 %v1499, %v1491
    %v1980 = vpack.c.b16 %v1500, %v1492
    %v1981 = vpack.c.b16 %v1509, %v1501
    %v1982 = vpack.c.b16 %v1510, %v1502
    %v1983 = vpack.c.b16 %v1511, %v1503
    %v1984 = vpack.c.b16 %v1512, %v1504
    %v1985 = vpack.c.b16 %v1513, %v1505
    %v1986 = vpack.c.b16 %v1514, %v1506
    %v1987 = vpack.c.b16 %v1515, %v1507
    %v1988 = vpack.c.b16 %v1516, %v1508
    %v1989 = vpack.c.b16 %v1525, %v1517
    %v1990 = vpack.c.b16 %v1526, %v1518
    %v1991 = vpack.c.b16 %v1527, %v1519
    %v1992 = vpack.c.b16 %v1528, %v1520
    %v1993 = vpack.c.b16 %v1529, %v1521
    %v1994 = vpack.c.b16 %v1530, %v1522
    %v1995 = vpack.c.b16 %v1531, %v1523
    %v1996 = vpack.c.b16 %v1532, %v1524
    %v1997 = vpack.c.b16 %v1541, %v1533
    %v1998 = vpack.c.b16 %v1542, %v1534
    %v1999 = vpack.c.b16 %v1543, %v1535
    %v2000 = vpack.c.b16 %v1544, %v1536
    %v2001 = vpack.c.b16 %v1545, %v1537
    %v2002 = vpack.c.b16 %v1546, %v1538
    %v2003 = vpack.c.b16 %v1547, %v1539
    %v2004 = vpack.c.b16 %v1548, %v1540
    %v2005 = vpack.c.b16 %v1557, %v1549
    %v2006 = vpack.c.b16 %v1558, %v1550
    %v2007 = vpack.c.b16 %v1559, %v1551
    %v2008 = vpack.c.b16 %v1560, %v1552
    %v2009 = vpack.c.b16 %v1561, %v1553
    %v2010 = vpack.c.b16 %v1562, %v1554
    %v2011 = vpack.c.b16 %v1563, %v1555
    %v2012 = vpack.c.b16 %v1564, %v1556
    %v2013 = vpack.c.b16 %v1573, %v1565
    %v2014 = vpack.c.b16 %v1574, %v1566
    %v2015 = vpack.c.b16 %v1575, %v1567
    %v2016 = vpack.c.b16 %v1576, %v1568
    %v2017 = vpack.c.b16 %v1577, %v1569
    %v2018 = vpack.c.b16 %v1578, %v1570
    %v2019 = vpack.c.b16 %v1579, %v1571
    %v2020 = vpack.c.b16 %v1580, %v1572
    %v2021 = vpack.c.b16 %v1589, %v1581
    %v2022 = vpack.c.b16 %v1590, %v1582
    %v2023 = vpack.c.b16 %v1591, %v1583
    %v2024 = vpack.c.b16 %v1592, %v1584
    %v2025 = vpack.c.b16 %v1593, %v1585
    %v2026 = vpack.c.b16 %v1594, %v1586
    %v2027 = vpack.c.b16 %v1595, %v1587
    %v2028 = vpack.c.b16 %v1596, %v1588
    %v2029 = vpack.c.b16 %v1605, %v1597
    %v2030 = vpack.c.b16 %v1606, %v1598
    %v2031 = vpack.c.b16 %v1607, %v1599
    %v2032 = vpack.c.b16 %v1608, %v1600
    %v2033 = vpack.c.b16 %v1609, %v1601
    %v2034 = vpack.c.b16 %v1610, %v1602
    %v2035 = vpack.c.b16 %v1611, %v1603
    %v2036 = vpack.c.b16 %v1612, %v1604
    %v2037 = vpack.c.b16 %v1621, %v1613
    %v2038 = vpack.c.b16 %v1622, %v1614
    %v2039 = vpack.c.b16 %v1623, %v1615
    %v2040 = vpack.c.b16 %v1624, %v1616
    %v2041 = vpack.c.b16 %v1625, %v1617
    %v2042 = vpack.c.b16 %v1626, %v1618
    %v2043 = vpack.c.b16 %v1627, %v1619
    %v2044 = vpack.c.b16 %v1628, %v1620
    %v2045 = vpack.c.b16 %v1637, %v1629
    %v2046 = vpack.c.b16 %v1638, %v1630
    %v2047 = vpack.c.b16 %v1639, %v1631
    %v2048 = vpack.c.b16 %v1640, %v1632
    %v2049 = vpack.c.b16 %v1641, %v1633
    %v2050 = vpack.c.b16 %v1642, %v1634
    %v2051 = vpack.c.b16 %v1643, %v1635
    %v2052 = vpack.c.b16 %v1644, %v1636
    %v2053 = vpack.c.b16 %v1653, %v1645
    %v2054 = vpack.c.b16 %v1654, %v1646
    %v2055 = vpack.c.b16 %v1655, %v1647
    %v2056 = vpack.c.b16 %v1656, %v1648
    %v2057 = vpack.c.b16 %v1657, %v1649
    %v2058 = vpack.c.b16 %v1658, %v1650
    %v2059 = vpack.c.b16 %v1659, %v1651
    %v2060 = vpack.c.b16 %v1660, %v1652
    %v2061 = vpack.c.b16 %v1669, %v1661
    %v2062 = vpack.c.b16 %v1670, %v1662
    %v2063 = vpack.c.b16 %v1671, %v1663
    %v2064 = vpack.c.b16 %v1672, %v1664
    %v2065 = vpack.c.b16 %v1673, %v1665
    %v2066 = vpack.c.b16 %v1674, %v1666
    %v2067 = vpack.c.b16 %v1675, %v1667
    %v2068 = vpack.c.b16 %v1676, %v1668
    %v2069 = vpack.c.b16 %v1685, %v1677
    %v2070 = vpack.c.b16 %v1686, %v1678
    %v2071 = vpack.c.b16 %v1687, %v1679
    %v2072 = vpack.c.b16 %v1688, %v1680
    %v2073 = vpack.c.b16 %v1689, %v1681
    %v2074 = vpack.c.b16 %v1690, %v1682
    %v2075 = vpack.c.b16 %v1691, %v1683
    %v2076 = vpack.c.b16 %v1692, %v1684
    %v2077 = vpack.c.b16 %v1701, %v1693
    %v2078 = vpack.c.b16 %v1702, %v1694
    %v2079 = vpack.c.b16 %v1703, %v1695
    %v2080 = vpack.c.b16 %v1704, %v1696
    %v2081 = vpack.c.b16 %v1705, %v1697
    %v2082 = vpack.c.b16 %v1706, %v1698
    %v2083 = vpack.c.b16 %v1707, %v1699
    %v2084 = vpack.c.b16 %v1708, %v1700
    %v2085 = vpack.c.b16 %v1717, %v1709
    %v2086 = vpack.c.b16 %v1718, %v1710
    %v2087 = vpack.c.b16 %v1719, %v1711
    %v2088 = vpack.c.b16 %v1720, %v1712
    %v2089 = vpack.c.b16 %v1721, %v1713
    %v2090 = vpack.c.b16 %v1722, %v1714
    %v2091 = vpack.c.b16 %v1723, %v1715
    %v2092 = vpack.c.b16 %v1724, %v1716
    %v2093 = vpack.c.b16 %v1733, %v1725
    %v2094 = vpack.c.b16 %v1734, %v1726
    %v2095 = vpack.c.b16 %v1735, %v1727
    %v2096 = vpack.c.b16 %v1736, %v1728
    %v2097 = vpack.c.b16 %v1737, %v1729
    %v2098 = vpack.c.b16 %v1738, %v1730
    %v2099 = vpack.c.b16 %v1739, %v1731
    %v2100 = vpack.c.b16 %v1740, %v1732
    %v2101 = vpack.c.b16 %v1749, %v1741
    %v2102 = vpack.c.b16 %v1750, %v1742
    %v2103 = vpack.c.b16 %v1751, %v1743
    %v2104 = vpack.c.b16 %v1752, %v1744
    %v2105 = vpack.c.b16 %v1753, %v1745
    %v2106 = vpack.c.b16 %v1754, %v1746
    %v2107 = vpack.c.b16 %v1755, %v1747
    %v2108 = vpack.c.b16 %v1756, %v1748
    %v2109 = vpack.c.b16 %v1765, %v1757
    %v2110 = vpack.c.b16 %v1766, %v1758
    %v2111 = vpack.c.b16 %v1767, %v1759
    %v2112 = vpack.c.b16 %v1768, %v1760
    %v2113 = vpack.c.b16 %v1769, %v1761
    %v2114 = vpack.c.b16 %v1770, %v1762
    %v2115 = vpack.c.b16 %v1771, %v1763
    %v2116 = vpack.c.b16 %v1772, %v1764
    %v2117 = vpack.c.b16 %v1781, %v1773
    %v2118 = vpack.c.b16 %v1782, %v1774
    %v2119 = vpack.c.b16 %v1783, %v1775
    %v2120 = vpack.c.b16 %v1784, %v1776
    %v2121 = vpack.c.b16 %v1785, %v1777
    %v2122 = vpack.c.b16 %v1786, %v1778
    %v2123 = vpack.c.b16 %v1787, %v1779
    %v2124 = vpack.c.b16 %v1788, %v1780
    %v2125 = vpack.c.b16 %v1797, %v1789
    %v2126 = vpack.c.b16 %v1798, %v1790
    %v2127 = vpack.c.b16 %v1799, %v1791
    %v2128 = vpack.c.b16 %v1800, %v1792
    %v2129 = vpack.c.b16 %v1801, %v1793
    %v2130 = vpack.c.b16 %v1802, %v1794
    %v2131 = vpack.c.b16 %v1803, %v1795
    %v2132 = vpack.c.b16 %v1804, %v1796
    %v2133 = vpack.c.b16 %v1813, %v1805
    %v2134 = vpack.c.b16 %v1814, %v1806
    %v2135 = vpack.c.b16 %v1815, %v1807
    %v2136 = vpack.c.b16 %v1816, %v1808
    %v2137 = vpack.c.b16 %v1817, %v1809
    %v2138 = vpack.c.b16 %v1818, %v1810
    %v2139 = vpack.c.b16 %v1819, %v1811
    %v2140 = vpack.c.b16 %v1820, %v1812
    %v2141 = vpack.c.b16 %v1829, %v1821
    %v2142 = vpack.c.b16 %v1830, %v1822
    %v2143 = vpack.c.b16 %v1831, %v1823
    %v2144 = vpack.c.b16 %v1832, %v1824
    %v2145 = vpack.c.b16 %v1833, %v1825
    %v2146 = vpack.c.b16 %v1834, %v1826
    %v2147 = vpack.c.b16 %v1835, %v1827
    %v2148 = vpack.c.b16 %v1836, %v1828
    %v2149 = vpack.c.b16 %v1845, %v1837
    %v2150 = vpack.c.b16 %v1846, %v1838
    %v2151 = vpack.c.b16 %v1847, %v1839
    %v2152 = vpack.c.b16 %v1848, %v1840
    %v2153 = vpack.c.b16 %v1849, %v1841
    %v2154 = vpack.c.b16 %v1850, %v1842
    %v2155 = vpack.c.b16 %v1851, %v1843
    %v2156 = vpack.c.b16 %v1852, %v1844
    %v2157 = vpack.c.b16 %v1861, %v1853
    %v2158 = vpack.c.b16 %v1862, %v1854
    %v2159 = vpack.c.b16 %v1863, %v1855
    %v2160 = vpack.c.b16 %v1864, %v1856
    %v2161 = vpack.c.b16 %v1865, %v1857
    %v2162 = vpack.c.b16 %v1866, %v1858
    %v2163 = vpack.c.b16 %v1867, %v1859
    %v2164 = vpack.c.b16 %v1868, %v1860
    %v2165 = vpack.c.b16 %v1877, %v1869
    %v2166 = vpack.c.b16 %v1878, %v1870
    %v2167 = vpack.c.b16 %v1879, %v1871
    %v2168 = vpack.c.b16 %v1880, %v1872
    %v2169 = vpack.c.b16 %v1881, %v1873
    %v2170 = vpack.c.b16 %v1882, %v1874
    %v2171 = vpack.c.b16 %v1883, %v1875
    %v2172 = vpack.c.b16 %v1884, %v1876
    %v2173 = vpack.c.b16 %v1893, %v1885
    %v2174 = vpack.c.b16 %v1894, %v1886
    %v2175 = vpack.c.b16 %v1895, %v1887
    %v2176 = vpack.c.b16 %v1896, %v1888
    %v2177 = vpack.c.b16 %v1897, %v1889
    %v2178 = vpack.c.b16 %v1898, %v1890
    %v2179 = vpack.c.b16 %v1899, %v1891
    %v2180 = vpack.c.b16 %v1900, %v1892
    %v2181 = vpack.c.b16 %v1909, %v1901
    %v2182 = vpack.c.b16 %v1910, %v1902
    %v2183 = vpack.c.b16 %v1911, %v1903
    %v2184 = vpack.c.b16 %v1912, %v1904
    %v2185 = vpack.c.b16 %v1913, %v1905
    %v2186 = vpack.c.b16 %v1914, %v1906
    %v2187 = vpack.c.b16 %v1915, %v1907
    %v2188 = vpack.c.b16 %v1916, %v1908
    %v2189 = vpack.c.b16 %v1925, %v1917
    %v2190 = vpack.c.b16 %v1926, %v1918
    %v2191 = vpack.c.b16 %v1927, %v1919
    %v2192 = vpack.c.b16 %v1928, %v1920
    %v2193 = vpack.c.b16 %v1929, %v1921
    %v2194 = vpack.c.b16 %v1930, %v1922
    %v2195 = vpack.c.b16 %v1931, %v1923
    %v2196 = vpack.c.b16 %v1932, %v1924
    %v2197 = vpack.c.b16 %v1941, %v1933
    %v2198 = vpack.c.b16 %v1942, %v1934
    %v2199 = vpack.c.b16 %v1943, %v1935
    %v2200 = vpack.c.b16 %v1944, %v1936
    %v2201 = vpack.c.b16 %v1945, %v1937
    %v2202 = vpack.c.b16 %v1946, %v1938
    %v2203 = vpack.c.b16 %v1947, %v1939
    %v2204 = vpack.c.b16 %v1948, %v1940
    %2461 = vmatpush.bf16.msra.mxu0 %v2005
    %2462 = vmatpush.bf16.msra.mxu0 %v1997
    %2463 = vmatpush.bf16.msra.mxu0 %v1989
    %2464 = vmatpush.bf16.msra.mxu0 %v1981
    %2465 = vmatpush.bf16.msra.mxu0 %v1973
    %2466 = vmatpush.bf16.msra.mxu0 %v1965
    %2467 = vmatpush.bf16.msra.mxu0 %v1957
    %2468 = vmatpush.bf16.msra.mxu0 %v1949
    %2469 = vmatmul.bf16.gmra.mxu0 %v903
    %v2470 = vpop.f32.mrf.mxu0
    %v2471 = vadd.f32 %v1165, %v2470
    %v2472 = vpop.f32.mrf.mxu0
    %2473 = vdwg.mxu0
    %2474 = vmatpush.bf16.msra.mxu0 %v2069
    %2475 = vmatpush.bf16.msra.mxu0 %v2061
    %2476 = vmatpush.bf16.msra.mxu0 %v2053
    %2477 = vmatpush.bf16.msra.mxu0 %v2045
    %2478 = vmatpush.bf16.msra.mxu0 %v2037
    %2479 = vmatpush.bf16.msra.mxu0 %v2029
    %2480 = vmatpush.bf16.msra.mxu0 %v2021
    %2481 = vmatpush.bf16.msra.mxu0 %v2013
    %2482 = vmatmul.bf16.gmra.mxu0 %v904
    %v2483 = vpop.f32.mrf.mxu0
    %v2484 = vadd.f32 %v2471, %v2483
    %v2485 = vpop.f32.mrf.mxu0
    %2486 = vdwg.mxu0
    %2487 = vmatpush.bf16.msra.mxu0 %v2133
    %2488 = vmatpush.bf16.msra.mxu0 %v2125
    %2489 = vmatpush.bf16.msra.mxu0 %v2117
    %2490 = vmatpush.bf16.msra.mxu0 %v2109
    %2491 = vmatpush.bf16.msra.mxu0 %v2101
    %2492 = vmatpush.bf16.msra.mxu0 %v2093
    %2493 = vmatpush.bf16.msra.mxu0 %v2085
    %2494 = vmatpush.bf16.msra.mxu0 %v2077
    %2495 = vmatmul.bf16.gmra.mxu0 %v905
    %v2496 = vpop.f32.mrf.mxu0
    %v2497 = vadd.f32 %v2484, %v2496
    %v2498 = vpop.f32.mrf.mxu0
    %2499 = vdwg.mxu0
    %2500 = vmatpush.bf16.msra.mxu0 %v2197
    %2501 = vmatpush.bf16.msra.mxu0 %v2189
    %2502 = vmatpush.bf16.msra.mxu0 %v2181
    %2503 = vmatpush.bf16.msra.mxu0 %v2173
    %2504 = vmatpush.bf16.msra.mxu0 %v2165
    %2505 = vmatpush.bf16.msra.mxu0 %v2157
    %2506 = vmatpush.bf16.msra.mxu0 %v2149
    %2507 = vmatpush.bf16.msra.mxu0 %v2141
    %2508 = vmatmul.bf16.gmra.mxu0 %v906
    %v2509 = vpop.f32.mrf.mxu0
    %v2510 = vadd.f32 %v2497, %v2509
    %v2511 = vpop.f32.mrf.mxu0
    %2512 = vdwg.mxu0
    %2513 = vmatpush.bf16.msra.mxu0 %v2006
    %2514 = vmatpush.bf16.msra.mxu0 %v1998
    %2515 = vmatpush.bf16.msra.mxu0 %v1990
    %2516 = vmatpush.bf16.msra.mxu0 %v1982
    %2517 = vmatpush.bf16.msra.mxu0 %v1974
    %2518 = vmatpush.bf16.msra.mxu0 %v1966
    %2519 = vmatpush.bf16.msra.mxu0 %v1958
    %2520 = vmatpush.bf16.msra.mxu0 %v1950
    %2521 = vmatmul.bf16.gmra.mxu0 %v903
    %v2522 = vpop.f32.mrf.mxu0
    %v2523 = vadd.f32 %v1166, %v2522
    %v2524 = vpop.f32.mrf.mxu0
    %2525 = vdwg.mxu0
    %2526 = vmatpush.bf16.msra.mxu0 %v2070
    %2527 = vmatpush.bf16.msra.mxu0 %v2062
    %2528 = vmatpush.bf16.msra.mxu0 %v2054
    %2529 = vmatpush.bf16.msra.mxu0 %v2046
    %2530 = vmatpush.bf16.msra.mxu0 %v2038
    %2531 = vmatpush.bf16.msra.mxu0 %v2030
    %2532 = vmatpush.bf16.msra.mxu0 %v2022
    %2533 = vmatpush.bf16.msra.mxu0 %v2014
    %2534 = vmatmul.bf16.gmra.mxu0 %v904
    %v2535 = vpop.f32.mrf.mxu0
    %v2536 = vadd.f32 %v2523, %v2535
    %v2537 = vpop.f32.mrf.mxu0
    %2538 = vdwg.mxu0
    %2539 = vmatpush.bf16.msra.mxu0 %v2134
    %2540 = vmatpush.bf16.msra.mxu0 %v2126
    %2541 = vmatpush.bf16.msra.mxu0 %v2118
    %2542 = vmatpush.bf16.msra.mxu0 %v2110
    %2543 = vmatpush.bf16.msra.mxu0 %v2102
    %2544 = vmatpush.bf16.msra.mxu0 %v2094
    %2545 = vmatpush.bf16.msra.mxu0 %v2086
    %2546 = vmatpush.bf16.msra.mxu0 %v2078
    %2547 = vmatmul.bf16.gmra.mxu0 %v905
    %v2548 = vpop.f32.mrf.mxu0
    %v2549 = vadd.f32 %v2536, %v2548
    %v2550 = vpop.f32.mrf.mxu0
    %2551 = vdwg.mxu0
    %2552 = vmatpush.bf16.msra.mxu0 %v2198
    %2553 = vmatpush.bf16.msra.mxu0 %v2190
    %2554 = vmatpush.bf16.msra.mxu0 %v2182
    %2555 = vmatpush.bf16.msra.mxu0 %v2174
    %2556 = vmatpush.bf16.msra.mxu0 %v2166
    %2557 = vmatpush.bf16.msra.mxu0 %v2158
    %2558 = vmatpush.bf16.msra.mxu0 %v2150
    %2559 = vmatpush.bf16.msra.mxu0 %v2142
    %2560 = vmatmul.bf16.gmra.mxu0 %v906
    %v2561 = vpop.f32.mrf.mxu0
    %v2562 = vadd.f32 %v2549, %v2561
    %v2563 = vpop.f32.mrf.mxu0
    %2564 = vdwg.mxu0
    %2565 = vmatpush.bf16.msra.mxu0 %v2007
    %2566 = vmatpush.bf16.msra.mxu0 %v1999
    %2567 = vmatpush.bf16.msra.mxu0 %v1991
    %2568 = vmatpush.bf16.msra.mxu0 %v1983
    %2569 = vmatpush.bf16.msra.mxu0 %v1975
    %2570 = vmatpush.bf16.msra.mxu0 %v1967
    %2571 = vmatpush.bf16.msra.mxu0 %v1959
    %2572 = vmatpush.bf16.msra.mxu0 %v1951
    %2573 = vmatmul.bf16.gmra.mxu0 %v903
    %v2574 = vpop.f32.mrf.mxu0
    %v2575 = vadd.f32 %v1167, %v2574
    %v2576 = vpop.f32.mrf.mxu0
    %2577 = vdwg.mxu0
    %2578 = vmatpush.bf16.msra.mxu0 %v2071
    %2579 = vmatpush.bf16.msra.mxu0 %v2063
    %2580 = vmatpush.bf16.msra.mxu0 %v2055
    %2581 = vmatpush.bf16.msra.mxu0 %v2047
    %2582 = vmatpush.bf16.msra.mxu0 %v2039
    %2583 = vmatpush.bf16.msra.mxu0 %v2031
    %2584 = vmatpush.bf16.msra.mxu0 %v2023
    %2585 = vmatpush.bf16.msra.mxu0 %v2015
    %2586 = vmatmul.bf16.gmra.mxu0 %v904
    %v2587 = vpop.f32.mrf.mxu0
    %v2588 = vadd.f32 %v2575, %v2587
    %v2589 = vpop.f32.mrf.mxu0
    %2590 = vdwg.mxu0
    %2591 = vmatpush.bf16.msra.mxu0 %v2135
    %2592 = vmatpush.bf16.msra.mxu0 %v2127
    %2593 = vmatpush.bf16.msra.mxu0 %v2119
    %2594 = vmatpush.bf16.msra.mxu0 %v2111
    %2595 = vmatpush.bf16.msra.mxu0 %v2103
    %2596 = vmatpush.bf16.msra.mxu0 %v2095
    %2597 = vmatpush.bf16.msra.mxu0 %v2087
    %2598 = vmatpush.bf16.msra.mxu0 %v2079
    %2599 = vmatmul.bf16.gmra.mxu0 %v905
    %v2600 = vpop.f32.mrf.mxu0
    %v2601 = vadd.f32 %v2588, %v2600
    %v2602 = vpop.f32.mrf.mxu0
    %2603 = vdwg.mxu0
    %2604 = vmatpush.bf16.msra.mxu0 %v2199
    %2605 = vmatpush.bf16.msra.mxu0 %v2191
    %2606 = vmatpush.bf16.msra.mxu0 %v2183
    %2607 = vmatpush.bf16.msra.mxu0 %v2175
    %2608 = vmatpush.bf16.msra.mxu0 %v2167
    %2609 = vmatpush.bf16.msra.mxu0 %v2159
    %2610 = vmatpush.bf16.msra.mxu0 %v2151
    %2611 = vmatpush.bf16.msra.mxu0 %v2143
    %2612 = vmatmul.bf16.gmra.mxu0 %v906
    %v2613 = vpop.f32.mrf.mxu0
    %v2614 = vadd.f32 %v2601, %v2613
    %v2615 = vpop.f32.mrf.mxu0
    %2616 = vdwg.mxu0
    %2617 = vmatpush.bf16.msra.mxu0 %v2008
    %2618 = vmatpush.bf16.msra.mxu0 %v2000
    %2619 = vmatpush.bf16.msra.mxu0 %v1992
    %2620 = vmatpush.bf16.msra.mxu0 %v1984
    %2621 = vmatpush.bf16.msra.mxu0 %v1976
    %2622 = vmatpush.bf16.msra.mxu0 %v1968
    %2623 = vmatpush.bf16.msra.mxu0 %v1960
    %2624 = vmatpush.bf16.msra.mxu0 %v1952
    %2625 = vmatmul.bf16.gmra.mxu0 %v903
    %v2626 = vpop.f32.mrf.mxu0
    %v2627 = vadd.f32 %v1168, %v2626
    %v2628 = vpop.f32.mrf.mxu0
    %2629 = vdwg.mxu0
    %2630 = vmatpush.bf16.msra.mxu0 %v2072
    %2631 = vmatpush.bf16.msra.mxu0 %v2064
    %2632 = vmatpush.bf16.msra.mxu0 %v2056
    %2633 = vmatpush.bf16.msra.mxu0 %v2048
    %2634 = vmatpush.bf16.msra.mxu0 %v2040
    %2635 = vmatpush.bf16.msra.mxu0 %v2032
    %2636 = vmatpush.bf16.msra.mxu0 %v2024
    %2637 = vmatpush.bf16.msra.mxu0 %v2016
    %2638 = vmatmul.bf16.gmra.mxu0 %v904
    %v2639 = vpop.f32.mrf.mxu0
    %v2640 = vadd.f32 %v2627, %v2639
    %v2641 = vpop.f32.mrf.mxu0
    %2642 = vdwg.mxu0
    %2643 = vmatpush.bf16.msra.mxu0 %v2136
    %2644 = vmatpush.bf16.msra.mxu0 %v2128
    %2645 = vmatpush.bf16.msra.mxu0 %v2120
    %2646 = vmatpush.bf16.msra.mxu0 %v2112
    %2647 = vmatpush.bf16.msra.mxu0 %v2104
    %2648 = vmatpush.bf16.msra.mxu0 %v2096
    %2649 = vmatpush.bf16.msra.mxu0 %v2088
    %2650 = vmatpush.bf16.msra.mxu0 %v2080
    %2651 = vmatmul.bf16.gmra.mxu0 %v905
    %v2652 = vpop.f32.mrf.mxu0
    %v2653 = vadd.f32 %v2640, %v2652
    %v2654 = vpop.f32.mrf.mxu0
    %2655 = vdwg.mxu0
    %2656 = vmatpush.bf16.msra.mxu0 %v2200
    %2657 = vmatpush.bf16.msra.mxu0 %v2192
    %2658 = vmatpush.bf16.msra.mxu0 %v2184
    %2659 = vmatpush.bf16.msra.mxu0 %v2176
    %2660 = vmatpush.bf16.msra.mxu0 %v2168
    %2661 = vmatpush.bf16.msra.mxu0 %v2160
    %2662 = vmatpush.bf16.msra.mxu0 %v2152
    %2663 = vmatpush.bf16.msra.mxu0 %v2144
    %2664 = vmatmul.bf16.gmra.mxu0 %v906
    %v2665 = vpop.f32.mrf.mxu0
    %v2666 = vadd.f32 %v2653, %v2665
    %v2667 = vpop.f32.mrf.mxu0
    %2668 = vdwg.mxu0
    %2669 = vmatpush.bf16.msra.mxu0 %v2009
    %2670 = vmatpush.bf16.msra.mxu0 %v2001
    %2671 = vmatpush.bf16.msra.mxu0 %v1993
    %2672 = vmatpush.bf16.msra.mxu0 %v1985
    %2673 = vmatpush.bf16.msra.mxu0 %v1977
    %2674 = vmatpush.bf16.msra.mxu0 %v1969
    %2675 = vmatpush.bf16.msra.mxu0 %v1961
    %2676 = vmatpush.bf16.msra.mxu0 %v1953
    %2677 = vmatmul.bf16.gmra.mxu0 %v903
    %v2678 = vpop.f32.mrf.mxu0
    %v2679 = vadd.f32 %v1169, %v2678
    %v2680 = vpop.f32.mrf.mxu0
    %2681 = vdwg.mxu0
    %2682 = vmatpush.bf16.msra.mxu0 %v2073
    %2683 = vmatpush.bf16.msra.mxu0 %v2065
    %2684 = vmatpush.bf16.msra.mxu0 %v2057
    %2685 = vmatpush.bf16.msra.mxu0 %v2049
    %2686 = vmatpush.bf16.msra.mxu0 %v2041
    %2687 = vmatpush.bf16.msra.mxu0 %v2033
    %2688 = vmatpush.bf16.msra.mxu0 %v2025
    %2689 = vmatpush.bf16.msra.mxu0 %v2017
    %2690 = vmatmul.bf16.gmra.mxu0 %v904
    %v2691 = vpop.f32.mrf.mxu0
    %v2692 = vadd.f32 %v2679, %v2691
    %v2693 = vpop.f32.mrf.mxu0
    %2694 = vdwg.mxu0
    %2695 = vmatpush.bf16.msra.mxu0 %v2137
    %2696 = vmatpush.bf16.msra.mxu0 %v2129
    %2697 = vmatpush.bf16.msra.mxu0 %v2121
    %2698 = vmatpush.bf16.msra.mxu0 %v2113
    %2699 = vmatpush.bf16.msra.mxu0 %v2105
    %2700 = vmatpush.bf16.msra.mxu0 %v2097
    %2701 = vmatpush.bf16.msra.mxu0 %v2089
    %2702 = vmatpush.bf16.msra.mxu0 %v2081
    %2703 = vmatmul.bf16.gmra.mxu0 %v905
    %v2704 = vpop.f32.mrf.mxu0
    %v2705 = vadd.f32 %v2692, %v2704
    %v2706 = vpop.f32.mrf.mxu0
    %2707 = vdwg.mxu0
    %2708 = vmatpush.bf16.msra.mxu0 %v2201
    %2709 = vmatpush.bf16.msra.mxu0 %v2193
    %2710 = vmatpush.bf16.msra.mxu0 %v2185
    %2711 = vmatpush.bf16.msra.mxu0 %v2177
    %2712 = vmatpush.bf16.msra.mxu0 %v2169
    %2713 = vmatpush.bf16.msra.mxu0 %v2161
    %2714 = vmatpush.bf16.msra.mxu0 %v2153
    %2715 = vmatpush.bf16.msra.mxu0 %v2145
    %2716 = vmatmul.bf16.gmra.mxu0 %v906
    %v2717 = vpop.f32.mrf.mxu0
    %v2718 = vadd.f32 %v2705, %v2717
    %v2719 = vpop.f32.mrf.mxu0
    %2720 = vdwg.mxu0
    %2721 = vmatpush.bf16.msra.mxu0 %v2010
    %2722 = vmatpush.bf16.msra.mxu0 %v2002
    %2723 = vmatpush.bf16.msra.mxu0 %v1994
    %2724 = vmatpush.bf16.msra.mxu0 %v1986
    %2725 = vmatpush.bf16.msra.mxu0 %v1978
    %2726 = vmatpush.bf16.msra.mxu0 %v1970
    %2727 = vmatpush.bf16.msra.mxu0 %v1962
    %2728 = vmatpush.bf16.msra.mxu0 %v1954
    %2729 = vmatmul.bf16.gmra.mxu0 %v903
    %v2730 = vpop.f32.mrf.mxu0
    %v2731 = vadd.f32 %v1170, %v2730
    %v2732 = vpop.f32.mrf.mxu0
    %2733 = vdwg.mxu0
    %2734 = vmatpush.bf16.msra.mxu0 %v2074
    %2735 = vmatpush.bf16.msra.mxu0 %v2066
    %2736 = vmatpush.bf16.msra.mxu0 %v2058
    %2737 = vmatpush.bf16.msra.mxu0 %v2050
    %2738 = vmatpush.bf16.msra.mxu0 %v2042
    %2739 = vmatpush.bf16.msra.mxu0 %v2034
    %2740 = vmatpush.bf16.msra.mxu0 %v2026
    %2741 = vmatpush.bf16.msra.mxu0 %v2018
    %2742 = vmatmul.bf16.gmra.mxu0 %v904
    %v2743 = vpop.f32.mrf.mxu0
    %v2744 = vadd.f32 %v2731, %v2743
    %v2745 = vpop.f32.mrf.mxu0
    %2746 = vdwg.mxu0
    %2747 = vmatpush.bf16.msra.mxu0 %v2138
    %2748 = vmatpush.bf16.msra.mxu0 %v2130
    %2749 = vmatpush.bf16.msra.mxu0 %v2122
    %2750 = vmatpush.bf16.msra.mxu0 %v2114
    %2751 = vmatpush.bf16.msra.mxu0 %v2106
    %2752 = vmatpush.bf16.msra.mxu0 %v2098
    %2753 = vmatpush.bf16.msra.mxu0 %v2090
    %2754 = vmatpush.bf16.msra.mxu0 %v2082
    %2755 = vmatmul.bf16.gmra.mxu0 %v905
    %v2756 = vpop.f32.mrf.mxu0
    %v2757 = vadd.f32 %v2744, %v2756
    %v2758 = vpop.f32.mrf.mxu0
    %2759 = vdwg.mxu0
    %2760 = vmatpush.bf16.msra.mxu0 %v2202
    %2761 = vmatpush.bf16.msra.mxu0 %v2194
    %2762 = vmatpush.bf16.msra.mxu0 %v2186
    %2763 = vmatpush.bf16.msra.mxu0 %v2178
    %2764 = vmatpush.bf16.msra.mxu0 %v2170
    %2765 = vmatpush.bf16.msra.mxu0 %v2162
    %2766 = vmatpush.bf16.msra.mxu0 %v2154
    %2767 = vmatpush.bf16.msra.mxu0 %v2146
    %2768 = vmatmul.bf16.gmra.mxu0 %v906
    %v2769 = vpop.f32.mrf.mxu0
    %v2770 = vadd.f32 %v2757, %v2769
    %v2771 = vpop.f32.mrf.mxu0
    %2772 = vdwg.mxu0
    %2773 = vmatpush.bf16.msra.mxu0 %v2011
    %2774 = vmatpush.bf16.msra.mxu0 %v2003
    %2775 = vmatpush.bf16.msra.mxu0 %v1995
    %2776 = vmatpush.bf16.msra.mxu0 %v1987
    %2777 = vmatpush.bf16.msra.mxu0 %v1979
    %2778 = vmatpush.bf16.msra.mxu0 %v1971
    %2779 = vmatpush.bf16.msra.mxu0 %v1963
    %2780 = vmatpush.bf16.msra.mxu0 %v1955
    %2781 = vmatmul.bf16.gmra.mxu0 %v903
    %v2782 = vpop.f32.mrf.mxu0
    %v2783 = vadd.f32 %v1171, %v2782
    %v2784 = vpop.f32.mrf.mxu0
    %2785 = vdwg.mxu0
    %2786 = vmatpush.bf16.msra.mxu0 %v2075
    %2787 = vmatpush.bf16.msra.mxu0 %v2067
    %2788 = vmatpush.bf16.msra.mxu0 %v2059
    %2789 = vmatpush.bf16.msra.mxu0 %v2051
    %2790 = vmatpush.bf16.msra.mxu0 %v2043
    %2791 = vmatpush.bf16.msra.mxu0 %v2035
    %2792 = vmatpush.bf16.msra.mxu0 %v2027
    %2793 = vmatpush.bf16.msra.mxu0 %v2019
    %2794 = vmatmul.bf16.gmra.mxu0 %v904
    %v2795 = vpop.f32.mrf.mxu0
    %v2796 = vadd.f32 %v2783, %v2795
    %v2797 = vpop.f32.mrf.mxu0
    %2798 = vdwg.mxu0
    %2799 = vmatpush.bf16.msra.mxu0 %v2139
    %2800 = vmatpush.bf16.msra.mxu0 %v2131
    %2801 = vmatpush.bf16.msra.mxu0 %v2123
    %2802 = vmatpush.bf16.msra.mxu0 %v2115
    %2803 = vmatpush.bf16.msra.mxu0 %v2107
    %2804 = vmatpush.bf16.msra.mxu0 %v2099
    %2805 = vmatpush.bf16.msra.mxu0 %v2091
    %2806 = vmatpush.bf16.msra.mxu0 %v2083
    %2807 = vmatmul.bf16.gmra.mxu0 %v905
    %v2808 = vpop.f32.mrf.mxu0
    %v2809 = vadd.f32 %v2796, %v2808
    %v2810 = vpop.f32.mrf.mxu0
    %2811 = vdwg.mxu0
    %2812 = vmatpush.bf16.msra.mxu0 %v2203
    %2813 = vmatpush.bf16.msra.mxu0 %v2195
    %2814 = vmatpush.bf16.msra.mxu0 %v2187
    %2815 = vmatpush.bf16.msra.mxu0 %v2179
    %2816 = vmatpush.bf16.msra.mxu0 %v2171
    %2817 = vmatpush.bf16.msra.mxu0 %v2163
    %2818 = vmatpush.bf16.msra.mxu0 %v2155
    %2819 = vmatpush.bf16.msra.mxu0 %v2147
    %2820 = vmatmul.bf16.gmra.mxu0 %v906
    %v2821 = vpop.f32.mrf.mxu0
    %v2822 = vadd.f32 %v2809, %v2821
    %v2823 = vpop.f32.mrf.mxu0
    %2824 = vdwg.mxu0
    %2825 = vmatpush.bf16.msra.mxu0 %v2012
    %2826 = vmatpush.bf16.msra.mxu0 %v2004
    %2827 = vmatpush.bf16.msra.mxu0 %v1996
    %2828 = vmatpush.bf16.msra.mxu0 %v1988
    %2829 = vmatpush.bf16.msra.mxu0 %v1980
    %2830 = vmatpush.bf16.msra.mxu0 %v1972
    %2831 = vmatpush.bf16.msra.mxu0 %v1964
    %2832 = vmatpush.bf16.msra.mxu0 %v1956
    %2833 = vmatmul.bf16.gmra.mxu0 %v903
    %v2834 = vpop.f32.mrf.mxu0
    %v2835 = vadd.f32 %v1172, %v2834
    %v2836 = vpop.f32.mrf.mxu0
    %2837 = vdwg.mxu0
    %2838 = vmatpush.bf16.msra.mxu0 %v2076
    %2839 = vmatpush.bf16.msra.mxu0 %v2068
    %2840 = vmatpush.bf16.msra.mxu0 %v2060
    %2841 = vmatpush.bf16.msra.mxu0 %v2052
    %2842 = vmatpush.bf16.msra.mxu0 %v2044
    %2843 = vmatpush.bf16.msra.mxu0 %v2036
    %2844 = vmatpush.bf16.msra.mxu0 %v2028
    %2845 = vmatpush.bf16.msra.mxu0 %v2020
    %2846 = vmatmul.bf16.gmra.mxu0 %v904
    %v2847 = vpop.f32.mrf.mxu0
    %v2848 = vadd.f32 %v2835, %v2847
    %v2849 = vpop.f32.mrf.mxu0
    %2850 = vdwg.mxu0
    %2851 = vmatpush.bf16.msra.mxu0 %v2140
    %2852 = vmatpush.bf16.msra.mxu0 %v2132
    %2853 = vmatpush.bf16.msra.mxu0 %v2124
    %2854 = vmatpush.bf16.msra.mxu0 %v2116
    %2855 = vmatpush.bf16.msra.mxu0 %v2108
    %2856 = vmatpush.bf16.msra.mxu0 %v2100
    %2857 = vmatpush.bf16.msra.mxu0 %v2092
    %2858 = vmatpush.bf16.msra.mxu0 %v2084
    %2859 = vmatmul.bf16.gmra.mxu0 %v905
    %v2860 = vpop.f32.mrf.mxu0
    %v2861 = vadd.f32 %v2848, %v2860
    %v2862 = vpop.f32.mrf.mxu0
    %2863 = vdwg.mxu0
    %2864 = vmatpush.bf16.msra.mxu0 %v2204
    %2865 = vmatpush.bf16.msra.mxu0 %v2196
    %2866 = vmatpush.bf16.msra.mxu0 %v2188
    %2867 = vmatpush.bf16.msra.mxu0 %v2180
    %2868 = vmatpush.bf16.msra.mxu0 %v2172
    %2869 = vmatpush.bf16.msra.mxu0 %v2164
    %2870 = vmatpush.bf16.msra.mxu0 %v2156
    %2871 = vmatpush.bf16.msra.mxu0 %v2148
    %2872 = vmatmul.bf16.gmra.mxu0 %v906
    %v2873 = vpop.f32.mrf.mxu0
    %v2874 = vadd.f32 %v2861, %v2873
    %v2875 = vpop.f32.mrf.mxu0
    %2876 = vdwg.mxu0
    %v2877 = vld [vmem:[#allocation15] sm:$0xff]
    %v2878 = vld [vmem:[#allocation15 + $0x8] sm:$0xff]
    %v2879 = vld [vmem:[#allocation15 + $0x10] sm:$0xff]
    %v2880 = vld [vmem:[#allocation15 + $0x18] sm:$0xff]
    %v2881 = vld [vmem:[#allocation15 + $0x20] sm:$0xff]
    %v2882 = vld [vmem:[#allocation15 + $0x28] sm:$0xff]
    %v2883 = vld [vmem:[#allocation15 + $0x30] sm:$0xff]
    %v2884 = vld [vmem:[#allocation15 + $0x38] sm:$0xff]
    %v2885 = vld [vmem:[#allocation15 + $0x40] sm:$0xff]
    %v2886 = vld [vmem:[#allocation15 + $0x48] sm:$0xff]
    %v2887 = vld [vmem:[#allocation15 + $0x50] sm:$0xff]
    %v2888 = vld [vmem:[#allocation15 + $0x58] sm:$0xff]
    %v2889 = vld [vmem:[#allocation15 + $0x60] sm:$0xff]
    %v2890 = vld [vmem:[#allocation15 + $0x68] sm:$0xff]
    %v2891 = vld [vmem:[#allocation15 + $0x70] sm:$0xff]
    %v2892 = vld [vmem:[#allocation15 + $0x78] sm:$0xff]
    %v2893 = vld [vmem:[#allocation15 + $0x80] sm:$0xff]
    %v2894 = vld [vmem:[#allocation15 + $0x88] sm:$0xff]
    %v2895 = vld [vmem:[#allocation15 + $0x90] sm:$0xff]
    %v2896 = vld [vmem:[#allocation15 + $0x98] sm:$0xff]
    %v2897 = vld [vmem:[#allocation15 + $0xa0] sm:$0xff]
    %v2898 = vld [vmem:[#allocation15 + $0xa8] sm:$0xff]
    %v2899 = vld [vmem:[#allocation15 + $0xb0] sm:$0xff]
    %v2900 = vld [vmem:[#allocation15 + $0xb8] sm:$0xff]
    %v2901 = vld [vmem:[#allocation15 + $0xc0] sm:$0xff]
    %v2902 = vld [vmem:[#allocation15 + $0xc8] sm:$0xff]
    %v2903 = vld [vmem:[#allocation15 + $0xd0] sm:$0xff]
    %v2904 = vld [vmem:[#allocation15 + $0xd8] sm:$0xff]
    %v2905 = vld [vmem:[#allocation15 + $0xe0] sm:$0xff]
    %v2906 = vld [vmem:[#allocation15 + $0xe8] sm:$0xff]
    %v2907 = vld [vmem:[#allocation15 + $0xf0] sm:$0xff]
    %v2908 = vld [vmem:[#allocation15 + $0xf8] sm:$0xff]
    %v2909 = vld [vmem:[#allocation15 + $0x100] sm:$0xff]
    %v2910 = vld [vmem:[#allocation15 + $0x108] sm:$0xff]
    %v2911 = vld [vmem:[#allocation15 + $0x110] sm:$0xff]
    %v2912 = vld [vmem:[#allocation15 + $0x118] sm:$0xff]
    %v2913 = vld [vmem:[#allocation15 + $0x120] sm:$0xff]
    %v2914 = vld [vmem:[#allocation15 + $0x128] sm:$0xff]
    %v2915 = vld [vmem:[#allocation15 + $0x130] sm:$0xff]
    %v2916 = vld [vmem:[#allocation15 + $0x138] sm:$0xff]
    %v2917 = vld [vmem:[#allocation15 + $0x140] sm:$0xff]
    %v2918 = vld [vmem:[#allocation15 + $0x148] sm:$0xff]
    %v2919 = vld [vmem:[#allocation15 + $0x150] sm:$0xff]
    %v2920 = vld [vmem:[#allocation15 + $0x158] sm:$0xff]
    %v2921 = vld [vmem:[#allocation15 + $0x160] sm:$0xff]
    %v2922 = vld [vmem:[#allocation15 + $0x168] sm:$0xff]
    %v2923 = vld [vmem:[#allocation15 + $0x170] sm:$0xff]
    %v2924 = vld [vmem:[#allocation15 + $0x178] sm:$0xff]
    %v2925 = vld [vmem:[#allocation15 + $0x180] sm:$0xff]
    %v2926 = vld [vmem:[#allocation15 + $0x188] sm:$0xff]
    %v2927 = vld [vmem:[#allocation15 + $0x190] sm:$0xff]
    %v2928 = vld [vmem:[#allocation15 + $0x198] sm:$0xff]
    %v2929 = vld [vmem:[#allocation15 + $0x1a0] sm:$0xff]
    %v2930 = vld [vmem:[#allocation15 + $0x1a8] sm:$0xff]
    %v2931 = vld [vmem:[#allocation15 + $0x1b0] sm:$0xff]
    %v2932 = vld [vmem:[#allocation15 + $0x1b8] sm:$0xff]
    %v2933 = vld [vmem:[#allocation15 + $0x1c0] sm:$0xff]
    %v2934 = vld [vmem:[#allocation15 + $0x1c8] sm:$0xff]
    %v2935 = vld [vmem:[#allocation15 + $0x1d0] sm:$0xff]
    %v2936 = vld [vmem:[#allocation15 + $0x1d8] sm:$0xff]
    %v2937 = vld [vmem:[#allocation15 + $0x1e0] sm:$0xff]
    %v2938 = vld [vmem:[#allocation15 + $0x1e8] sm:$0xff]
    %v2939 = vld [vmem:[#allocation15 + $0x1f0] sm:$0xff]
    %v2940 = vld [vmem:[#allocation15 + $0x1f8] sm:$0xff]
    %v2941 = vld [vmem:[#allocation15 + $0x200] sm:$0xff]
    %v2942 = vld [vmem:[#allocation15 + $0x208] sm:$0xff]
    %v2943 = vld [vmem:[#allocation15 + $0x210] sm:$0xff]
    %v2944 = vld [vmem:[#allocation15 + $0x218] sm:$0xff]
    %v2945 = vld [vmem:[#allocation15 + $0x220] sm:$0xff]
    %v2946 = vld [vmem:[#allocation15 + $0x228] sm:$0xff]
    %v2947 = vld [vmem:[#allocation15 + $0x230] sm:$0xff]
    %v2948 = vld [vmem:[#allocation15 + $0x238] sm:$0xff]
    %v2949 = vld [vmem:[#allocation15 + $0x240] sm:$0xff]
    %v2950 = vld [vmem:[#allocation15 + $0x248] sm:$0xff]
    %v2951 = vld [vmem:[#allocation15 + $0x250] sm:$0xff]
    %v2952 = vld [vmem:[#allocation15 + $0x258] sm:$0xff]
    %v2953 = vld [vmem:[#allocation15 + $0x260] sm:$0xff]
    %v2954 = vld [vmem:[#allocation15 + $0x268] sm:$0xff]
    %v2955 = vld [vmem:[#allocation15 + $0x270] sm:$0xff]
    %v2956 = vld [vmem:[#allocation15 + $0x278] sm:$0xff]
    %v2957 = vld [vmem:[#allocation15 + $0x280] sm:$0xff]
    %v2958 = vld [vmem:[#allocation15 + $0x288] sm:$0xff]
    %v2959 = vld [vmem:[#allocation15 + $0x290] sm:$0xff]
    %v2960 = vld [vmem:[#allocation15 + $0x298] sm:$0xff]
    %v2961 = vld [vmem:[#allocation15 + $0x2a0] sm:$0xff]
    %v2962 = vld [vmem:[#allocation15 + $0x2a8] sm:$0xff]
    %v2963 = vld [vmem:[#allocation15 + $0x2b0] sm:$0xff]
    %v2964 = vld [vmem:[#allocation15 + $0x2b8] sm:$0xff]
    %v2965 = vld [vmem:[#allocation15 + $0x2c0] sm:$0xff]
    %v2966 = vld [vmem:[#allocation15 + $0x2c8] sm:$0xff]
    %v2967 = vld [vmem:[#allocation15 + $0x2d0] sm:$0xff]
    %v2968 = vld [vmem:[#allocation15 + $0x2d8] sm:$0xff]
    %v2969 = vld [vmem:[#allocation15 + $0x2e0] sm:$0xff]
    %v2970 = vld [vmem:[#allocation15 + $0x2e8] sm:$0xff]
    %v2971 = vld [vmem:[#allocation15 + $0x2f0] sm:$0xff]
    %v2972 = vld [vmem:[#allocation15 + $0x2f8] sm:$0xff]
    %v2973 = vld [vmem:[#allocation15 + $0x300] sm:$0xff]
    %v2974 = vld [vmem:[#allocation15 + $0x308] sm:$0xff]
    %v2975 = vld [vmem:[#allocation15 + $0x310] sm:$0xff]
    %v2976 = vld [vmem:[#allocation15 + $0x318] sm:$0xff]
    %v2977 = vld [vmem:[#allocation15 + $0x320] sm:$0xff]
    %v2978 = vld [vmem:[#allocation15 + $0x328] sm:$0xff]
    %v2979 = vld [vmem:[#allocation15 + $0x330] sm:$0xff]
    %v2980 = vld [vmem:[#allocation15 + $0x338] sm:$0xff]
    %v2981 = vld [vmem:[#allocation15 + $0x340] sm:$0xff]
    %v2982 = vld [vmem:[#allocation15 + $0x348] sm:$0xff]
    %v2983 = vld [vmem:[#allocation15 + $0x350] sm:$0xff]
    %v2984 = vld [vmem:[#allocation15 + $0x358] sm:$0xff]
    %v2985 = vld [vmem:[#allocation15 + $0x360] sm:$0xff]
    %v2986 = vld [vmem:[#allocation15 + $0x368] sm:$0xff]
    %v2987 = vld [vmem:[#allocation15 + $0x370] sm:$0xff]
    %v2988 = vld [vmem:[#allocation15 + $0x378] sm:$0xff]
    %v2989 = vld [vmem:[#allocation15 + $0x380] sm:$0xff]
    %v2990 = vld [vmem:[#allocation15 + $0x388] sm:$0xff]
    %v2991 = vld [vmem:[#allocation15 + $0x390] sm:$0xff]
    %v2992 = vld [vmem:[#allocation15 + $0x398] sm:$0xff]
    %v2993 = vld [vmem:[#allocation15 + $0x3a0] sm:$0xff]
    %v2994 = vld [vmem:[#allocation15 + $0x3a8] sm:$0xff]
    %v2995 = vld [vmem:[#allocation15 + $0x3b0] sm:$0xff]
    %v2996 = vld [vmem:[#allocation15 + $0x3b8] sm:$0xff]
    %v2997 = vld [vmem:[#allocation15 + $0x3c0] sm:$0xff]
    %v2998 = vld [vmem:[#allocation15 + $0x3c8] sm:$0xff]
    %v2999 = vld [vmem:[#allocation15 + $0x3d0] sm:$0xff]
    %v3000 = vld [vmem:[#allocation15 + $0x3d8] sm:$0xff]
    %v3001 = vld [vmem:[#allocation15 + $0x3e0] sm:$0xff]
    %v3002 = vld [vmem:[#allocation15 + $0x3e8] sm:$0xff]
    %v3003 = vld [vmem:[#allocation15 + $0x3f0] sm:$0xff]
    %v3004 = vld [vmem:[#allocation15 + $0x3f8] sm:$0xff]
    %v3005 = vld [vmem:[#allocation16] sm:$0xff]
    %v3006 = vld [vmem:[#allocation16 + $0x8] sm:$0xff]
    %v3007 = vld [vmem:[#allocation16 + $0x10] sm:$0xff]
    %v3008 = vld [vmem:[#allocation16 + $0x18] sm:$0xff]
    %v3009 = vld [vmem:[#allocation16 + $0x20] sm:$0xff]
    %v3010 = vld [vmem:[#allocation16 + $0x28] sm:$0xff]
    %v3011 = vld [vmem:[#allocation16 + $0x30] sm:$0xff]
    %v3012 = vld [vmem:[#allocation16 + $0x38] sm:$0xff]
    %v3013 = vld [vmem:[#allocation16 + $0x40] sm:$0xff]
    %v3014 = vld [vmem:[#allocation16 + $0x48] sm:$0xff]
    %v3015 = vld [vmem:[#allocation16 + $0x50] sm:$0xff]
    %v3016 = vld [vmem:[#allocation16 + $0x58] sm:$0xff]
    %v3017 = vld [vmem:[#allocation16 + $0x60] sm:$0xff]
    %v3018 = vld [vmem:[#allocation16 + $0x68] sm:$0xff]
    %v3019 = vld [vmem:[#allocation16 + $0x70] sm:$0xff]
    %v3020 = vld [vmem:[#allocation16 + $0x78] sm:$0xff]
    %v3021 = vsel %vm419, %v2510, 0.0
    %v3022 = vrot.slane %v3021, 4
    %v3023 = vadd.f32 %v3021, %v3022
    %v3024 = vrot.slane %v3023, 2
    %v3025 = vadd.f32 %v3023, %v3024
    %v3026 = vrot.slane %v3025, 1
    %v3027 = vadd.f32 %v3025, %v3026
    %v3028 = vsel %vm419, %v2562, 0.0
    %v3029 = vrot.slane %v3028, 4
    %v3030 = vadd.f32 %v3028, %v3029
    %v3031 = vrot.slane %v3030, 2
    %v3032 = vadd.f32 %v3030, %v3031
    %v3033 = vrot.slane %v3032, 1
    %v3034 = vadd.f32 %v3032, %v3033
    %v3035 = vsel %vm419, %v2614, 0.0
    %v3036 = vrot.slane %v3035, 4
    %v3037 = vadd.f32 %v3035, %v3036
    %v3038 = vrot.slane %v3037, 2
    %v3039 = vadd.f32 %v3037, %v3038
    %v3040 = vrot.slane %v3039, 1
    %v3041 = vadd.f32 %v3039, %v3040
    %v3042 = vsel %vm419, %v2666, 0.0
    %v3043 = vrot.slane %v3042, 4
    %v3044 = vadd.f32 %v3042, %v3043
    %v3045 = vrot.slane %v3044, 2
    %v3046 = vadd.f32 %v3044, %v3045
    %v3047 = vrot.slane %v3046, 1
    %v3048 = vadd.f32 %v3046, %v3047
    %v3049 = vsel %vm419, %v2718, 0.0
    %v3050 = vrot.slane %v3049, 4
    %v3051 = vadd.f32 %v3049, %v3050
    %v3052 = vrot.slane %v3051, 2
    %v3053 = vadd.f32 %v3051, %v3052
    %v3054 = vrot.slane %v3053, 1
    %v3055 = vadd.f32 %v3053, %v3054
    %v3056 = vsel %vm419, %v2770, 0.0
    %v3057 = vrot.slane %v3056, 4
    %v3058 = vadd.f32 %v3056, %v3057
    %v3059 = vrot.slane %v3058, 2
    %v3060 = vadd.f32 %v3058, %v3059
    %v3061 = vrot.slane %v3060, 1
    %v3062 = vadd.f32 %v3060, %v3061
    %v3063 = vsel %vm419, %v2822, 0.0
    %v3064 = vrot.slane %v3063, 4
    %v3065 = vadd.f32 %v3063, %v3064
    %v3066 = vrot.slane %v3065, 2
    %v3067 = vadd.f32 %v3065, %v3066
    %v3068 = vrot.slane %v3067, 1
    %v3069 = vadd.f32 %v3067, %v3068
    %v3070 = vsel %vm419, %v2874, 0.0
    %v3071 = vrot.slane %v3070, 4
    %v3072 = vadd.f32 %v3070, %v3071
    %v3073 = vrot.slane %v3072, 2
    %v3074 = vadd.f32 %v3072, %v3073
    %v3075 = vrot.slane %v3074, 1
    %v3076 = vadd.f32 %v3074, %v3075
    %3077 = vmatpush.msra.mxu0 %v2892
    %3078 = vmatpush.msra.mxu0 %v2891
    %3079 = vmatpush.msra.mxu0 %v2890
    %3080 = vmatpush.msra.mxu0 %v2889
    %3081 = vmatpush.msra.mxu0 %v2888
    %3082 = vmatpush.msra.mxu0 %v2887
    %3083 = vmatpush.msra.mxu0 %v2886
    %3084 = vmatpush.msra.mxu0 %v2885
    %3085 = vmatpush.msra.mxu0 %v2884
    %3086 = vmatpush.msra.mxu0 %v2883
    %3087 = vmatpush.msra.mxu0 %v2882
    %3088 = vmatpush.msra.mxu0 %v2881
    %3089 = vmatpush.msra.mxu0 %v2880
    %3090 = vmatpush.msra.mxu0 %v2879
    %3091 = vmatpush.msra.mxu0 %v2878
    %3092 = vmatpush.msra.mxu0 %v2877
    %3093 = vmatmul.f32.gmra.mxu0 %v3027
    %v3094 = vpop.f32.mrf.mxu0
    %v3095 = vadd.f32 0.0, %v3094
    %3096 = vdwg.mxu0
    %3097 = vmatpush.msra.mxu0 %v2908
    %3098 = vmatpush.msra.mxu0 %v2907
    %3099 = vmatpush.msra.mxu0 %v2906
    %3100 = vmatpush.msra.mxu0 %v2905
    %3101 = vmatpush.msra.mxu0 %v2904
    %3102 = vmatpush.msra.mxu0 %v2903
    %3103 = vmatpush.msra.mxu0 %v2902
    %3104 = vmatpush.msra.mxu0 %v2901
    %3105 = vmatpush.msra.mxu0 %v2900
    %3106 = vmatpush.msra.mxu0 %v2899
    %3107 = vmatpush.msra.mxu0 %v2898
    %3108 = vmatpush.msra.mxu0 %v2897
    %3109 = vmatpush.msra.mxu0 %v2896
    %3110 = vmatpush.msra.mxu0 %v2895
    %3111 = vmatpush.msra.mxu0 %v2894
    %3112 = vmatpush.msra.mxu0 %v2893
    %3113 = vmatmul.f32.gmra.mxu0 %v3034
    %v3114 = vpop.f32.mrf.mxu0
    %v3115 = vadd.f32 %v3095, %v3114
    %3116 = vdwg.mxu0
    %3117 = vmatpush.msra.mxu0 %v2924
    %3118 = vmatpush.msra.mxu0 %v2923
    %3119 = vmatpush.msra.mxu0 %v2922
    %3120 = vmatpush.msra.mxu0 %v2921
    %3121 = vmatpush.msra.mxu0 %v2920
    %3122 = vmatpush.msra.mxu0 %v2919
    %3123 = vmatpush.msra.mxu0 %v2918
    %3124 = vmatpush.msra.mxu0 %v2917
    %3125 = vmatpush.msra.mxu0 %v2916
    %3126 = vmatpush.msra.mxu0 %v2915
    %3127 = vmatpush.msra.mxu0 %v2914
    %3128 = vmatpush.msra.mxu0 %v2913
    %3129 = vmatpush.msra.mxu0 %v2912
    %3130 = vmatpush.msra.mxu0 %v2911
    %3131 = vmatpush.msra.mxu0 %v2910
    %3132 = vmatpush.msra.mxu0 %v2909
    %3133 = vmatmul.f32.gmra.mxu0 %v3041
    %v3134 = vpop.f32.mrf.mxu0
    %v3135 = vadd.f32 %v3115, %v3134
    %3136 = vdwg.mxu0
    %3137 = vmatpush.msra.mxu0 %v2940
    %3138 = vmatpush.msra.mxu0 %v2939
    %3139 = vmatpush.msra.mxu0 %v2938
    %3140 = vmatpush.msra.mxu0 %v2937
    %3141 = vmatpush.msra.mxu0 %v2936
    %3142 = vmatpush.msra.mxu0 %v2935
    %3143 = vmatpush.msra.mxu0 %v2934
    %3144 = vmatpush.msra.mxu0 %v2933
    %3145 = vmatpush.msra.mxu0 %v2932
    %3146 = vmatpush.msra.mxu0 %v2931
    %3147 = vmatpush.msra.mxu0 %v2930
    %3148 = vmatpush.msra.mxu0 %v2929
    %3149 = vmatpush.msra.mxu0 %v2928
    %3150 = vmatpush.msra.mxu0 %v2927
    %3151 = vmatpush.msra.mxu0 %v2926
    %3152 = vmatpush.msra.mxu0 %v2925
    %3153 = vmatmul.f32.gmra.mxu0 %v3048
    %v3154 = vpop.f32.mrf.mxu0
    %v3155 = vadd.f32 %v3135, %v3154
    %3156 = vdwg.mxu0
    %3157 = vmatpush.msra.mxu0 %v2956
    %3158 = vmatpush.msra.mxu0 %v2955
    %3159 = vmatpush.msra.mxu0 %v2954
    %3160 = vmatpush.msra.mxu0 %v2953
    %3161 = vmatpush.msra.mxu0 %v2952
    %3162 = vmatpush.msra.mxu0 %v2951
    %3163 = vmatpush.msra.mxu0 %v2950
    %3164 = vmatpush.msra.mxu0 %v2949
    %3165 = vmatpush.msra.mxu0 %v2948
    %3166 = vmatpush.msra.mxu0 %v2947
    %3167 = vmatpush.msra.mxu0 %v2946
    %3168 = vmatpush.msra.mxu0 %v2945
    %3169 = vmatpush.msra.mxu0 %v2944
    %3170 = vmatpush.msra.mxu0 %v2943
    %3171 = vmatpush.msra.mxu0 %v2942
    %3172 = vmatpush.msra.mxu0 %v2941
    %3173 = vmatmul.f32.gmra.mxu0 %v3055
    %v3174 = vpop.f32.mrf.mxu0
    %v3175 = vadd.f32 %v3155, %v3174
    %3176 = vdwg.mxu0
    %3177 = vmatpush.msra.mxu0 %v2972
    %3178 = vmatpush.msra.mxu0 %v2971
    %3179 = vmatpush.msra.mxu0 %v2970
    %3180 = vmatpush.msra.mxu0 %v2969
    %3181 = vmatpush.msra.mxu0 %v2968
    %3182 = vmatpush.msra.mxu0 %v2967
    %3183 = vmatpush.msra.mxu0 %v2966
    %3184 = vmatpush.msra.mxu0 %v2965
    %3185 = vmatpush.msra.mxu0 %v2964
    %3186 = vmatpush.msra.mxu0 %v2963
    %3187 = vmatpush.msra.mxu0 %v2962
    %3188 = vmatpush.msra.mxu0 %v2961
    %3189 = vmatpush.msra.mxu0 %v2960
    %3190 = vmatpush.msra.mxu0 %v2959
    %3191 = vmatpush.msra.mxu0 %v2958
    %3192 = vmatpush.msra.mxu0 %v2957
    %3193 = vmatmul.f32.gmra.mxu0 %v3062
    %v3194 = vpop.f32.mrf.mxu0
    %v3195 = vadd.f32 %v3175, %v3194
    %3196 = vdwg.mxu0
    %3197 = vmatpush.msra.mxu0 %v2988
    %3198 = vmatpush.msra.mxu0 %v2987
    %3199 = vmatpush.msra.mxu0 %v2986
    %3200 = vmatpush.msra.mxu0 %v2985
    %3201 = vmatpush.msra.mxu0 %v2984
    %3202 = vmatpush.msra.mxu0 %v2983
    %3203 = vmatpush.msra.mxu0 %v2982
    %3204 = vmatpush.msra.mxu0 %v2981
    %3205 = vmatpush.msra.mxu0 %v2980
    %3206 = vmatpush.msra.mxu0 %v2979
    %3207 = vmatpush.msra.mxu0 %v2978
    %3208 = vmatpush.msra.mxu0 %v2977
    %3209 = vmatpush.msra.mxu0 %v2976
    %3210 = vmatpush.msra.mxu0 %v2975
    %3211 = vmatpush.msra.mxu0 %v2974
    %3212 = vmatpush.msra.mxu0 %v2973
    %3213 = vmatmul.f32.gmra.mxu0 %v3069
    %v3214 = vpop.f32.mrf.mxu0
    %v3215 = vadd.f32 %v3195, %v3214
    %3216 = vdwg.mxu0
    %3217 = vmatpush.msra.mxu0 %v3004
    %3218 = vmatpush.msra.mxu0 %v3003
    %3219 = vmatpush.msra.mxu0 %v3002
    %3220 = vmatpush.msra.mxu0 %v3001
    %3221 = vmatpush.msra.mxu0 %v3000
    %3222 = vmatpush.msra.mxu0 %v2999
    %3223 = vmatpush.msra.mxu0 %v2998
    %3224 = vmatpush.msra.mxu0 %v2997
    %3225 = vmatpush.msra.mxu0 %v2996
    %3226 = vmatpush.msra.mxu0 %v2995
    %3227 = vmatpush.msra.mxu0 %v2994
    %3228 = vmatpush.msra.mxu0 %v2993
    %3229 = vmatpush.msra.mxu0 %v2992
    %3230 = vmatpush.msra.mxu0 %v2991
    %3231 = vmatpush.msra.mxu0 %v2990
    %3232 = vmatpush.msra.mxu0 %v2989
    %3233 = vmatmul.f32.gmra.mxu0 %v3076
    %v3234 = vpop.f32.mrf.mxu0
    %v3235 = vadd.f32 %v3215, %v3234
    %3236 = vdwg.mxu0
    %v3237 = vmul.f32 %v3235, 0.0078125
    %vm3238 = vcmask 130048
    %v3240 = vsel %vm3238, %v3237, 0
    %3242 = vmatpush.msra.mxu0 0.0
    %3243 = vmatpush.msra.mxu0 0.0
    %3244 = vmatpush.msra.mxu0 0.0
    %3245 = vmatpush.msra.mxu0 0.0
    %3246 = vmatpush.msra.mxu0 0.0
    %3247 = vmatpush.msra.mxu0 0.0
    %3248 = vmatpush.msra.mxu0 0.0
    %3249 = vmatpush.msra.mxu0 0.0
    %3250 = vmatpush.msra.mxu0 0.0
    %3251 = vmatpush.msra.mxu0 0.0
    %3252 = vmatpush.msra.mxu0 0.0
    %3253 = vmatpush.msra.mxu0 0.0
    %3254 = vmatpush.msra.mxu0 0.0
    %3255 = vmatpush.msra.mxu0 0.0
    %3256 = vmatpush.msra.mxu0 %v3013
    %3257 = vmatpush.msra.mxu0 %v3005
    %3258 = vmatmul.f32.gmra.mxu0 %v3240
    %v3259 = vpop.f32.mrf.mxu0
    %v3260 = vadd.f32 0.0, %v3259
    %3261 = vdwg.mxu0
    %3262 = vmatpush.msra.mxu0 0.0
    %3263 = vmatpush.msra.mxu0 0.0
    %3264 = vmatpush.msra.mxu0 0.0
    %3265 = vmatpush.msra.mxu0 0.0
    %3266 = vmatpush.msra.mxu0 0.0
    %3267 = vmatpush.msra.mxu0 0.0
    %3268 = vmatpush.msra.mxu0 0.0
    %3269 = vmatpush.msra.mxu0 0.0
    %3270 = vmatpush.msra.mxu0 0.0
    %3271 = vmatpush.msra.mxu0 0.0
    %3272 = vmatpush.msra.mxu0 0.0
    %3273 = vmatpush.msra.mxu0 0.0
    %3274 = vmatpush.msra.mxu0 0.0
    %3275 = vmatpush.msra.mxu0 0.0
    %3276 = vmatpush.msra.mxu0 %v3014
    %3277 = vmatpush.msra.mxu0 %v3006
    %3278 = vmatmul.f32.gmra.mxu0 %v3240
    %v3279 = vpop.f32.mrf.mxu0
    %v3280 = vadd.f32 0.0, %v3279
    %3281 = vdwg.mxu0
    %3282 = vmatpush.msra.mxu0 0.0
    %3283 = vmatpush.msra.mxu0 0.0
    %3284 = vmatpush.msra.mxu0 0.0
    %3285 = vmatpush.msra.mxu0 0.0
    %3286 = vmatpush.msra.mxu0 0.0
    %3287 = vmatpush.msra.mxu0 0.0
    %3288 = vmatpush.msra.mxu0 0.0
    %3289 = vmatpush.msra.mxu0 0.0
    %3290 = vmatpush.msra.mxu0 0.0
    %3291 = vmatpush.msra.mxu0 0.0
    %3292 = vmatpush.msra.mxu0 0.0
    %3293 = vmatpush.msra.mxu0 0.0
    %3294 = vmatpush.msra.mxu0 0.0
    %3295 = vmatpush.msra.mxu0 0.0
    %3296 = vmatpush.msra.mxu0 %v3015
    %3297 = vmatpush.msra.mxu0 %v3007
    %3298 = vmatmul.f32.gmra.mxu0 %v3240
    %v3299 = vpop.f32.mrf.mxu0
    %v3300 = vadd.f32 0.0, %v3299
    %3301 = vdwg.mxu0
    %3302 = vmatpush.msra.mxu0 0.0
    %3303 = vmatpush.msra.mxu0 0.0
    %3304 = vmatpush.msra.mxu0 0.0
    %3305 = vmatpush.msra.mxu0 0.0
    %3306 = vmatpush.msra.mxu0 0.0
    %3307 = vmatpush.msra.mxu0 0.0
    %3308 = vmatpush.msra.mxu0 0.0
    %3309 = vmatpush.msra.mxu0 0.0
    %3310 = vmatpush.msra.mxu0 0.0
    %3311 = vmatpush.msra.mxu0 0.0
    %3312 = vmatpush.msra.mxu0 0.0
    %3313 = vmatpush.msra.mxu0 0.0
    %3314 = vmatpush.msra.mxu0 0.0
    %3315 = vmatpush.msra.mxu0 0.0
    %3316 = vmatpush.msra.mxu0 %v3016
    %3317 = vmatpush.msra.mxu0 %v3008
    %3318 = vmatmul.f32.gmra.mxu0 %v3240
    %v3319 = vpop.f32.mrf.mxu0
    %v3320 = vadd.f32 0.0, %v3319
    %3321 = vdwg.mxu0
    %3322 = vmatpush.msra.mxu0 0.0
    %3323 = vmatpush.msra.mxu0 0.0
    %3324 = vmatpush.msra.mxu0 0.0
    %3325 = vmatpush.msra.mxu0 0.0
    %3326 = vmatpush.msra.mxu0 0.0
    %3327 = vmatpush.msra.mxu0 0.0
    %3328 = vmatpush.msra.mxu0 0.0
    %3329 = vmatpush.msra.mxu0 0.0
    %3330 = vmatpush.msra.mxu0 0.0
    %3331 = vmatpush.msra.mxu0 0.0
    %3332 = vmatpush.msra.mxu0 0.0
    %3333 = vmatpush.msra.mxu0 0.0
    %3334 = vmatpush.msra.mxu0 0.0
    %3335 = vmatpush.msra.mxu0 0.0
    %3336 = vmatpush.msra.mxu0 %v3017
    %3337 = vmatpush.msra.mxu0 %v3009
    %3338 = vmatmul.f32.gmra.mxu0 %v3240
    %v3339 = vpop.f32.mrf.mxu0
    %v3340 = vadd.f32 0.0, %v3339
    %3341 = vdwg.mxu0
    %3342 = vmatpush.msra.mxu0 0.0
    %3343 = vmatpush.msra.mxu0 0.0
    %3344 = vmatpush.msra.mxu0 0.0
    %3345 = vmatpush.msra.mxu0 0.0
    %3346 = vmatpush.msra.mxu0 0.0
    %3347 = vmatpush.msra.mxu0 0.0
    %3348 = vmatpush.msra.mxu0 0.0
    %3349 = vmatpush.msra.mxu0 0.0
    %3350 = vmatpush.msra.mxu0 0.0
    %3351 = vmatpush.msra.mxu0 0.0
    %3352 = vmatpush.msra.mxu0 0.0
    %3353 = vmatpush.msra.mxu0 0.0
    %3354 = vmatpush.msra.mxu0 0.0
    %3355 = vmatpush.msra.mxu0 0.0
    %3356 = vmatpush.msra.mxu0 %v3018
    %3357 = vmatpush.msra.mxu0 %v3010
    %3358 = vmatmul.f32.gmra.mxu0 %v3240
    %v3359 = vpop.f32.mrf.mxu0
    %v3360 = vadd.f32 0.0, %v3359
    %3361 = vdwg.mxu0
    %3362 = vmatpush.msra.mxu0 0.0
    %3363 = vmatpush.msra.mxu0 0.0
    %3364 = vmatpush.msra.mxu0 0.0
    %3365 = vmatpush.msra.mxu0 0.0
    %3366 = vmatpush.msra.mxu0 0.0
    %3367 = vmatpush.msra.mxu0 0.0
    %3368 = vmatpush.msra.mxu0 0.0
    %3369 = vmatpush.msra.mxu0 0.0
    %3370 = vmatpush.msra.mxu0 0.0
    %3371 = vmatpush.msra.mxu0 0.0
    %3372 = vmatpush.msra.mxu0 0.0
    %3373 = vmatpush.msra.mxu0 0.0
    %3374 = vmatpush.msra.mxu0 0.0
    %3375 = vmatpush.msra.mxu0 0.0
    %3376 = vmatpush.msra.mxu0 %v3019
    %3377 = vmatpush.msra.mxu0 %v3011
    %3378 = vmatmul.f32.gmra.mxu0 %v3240
    %v3379 = vpop.f32.mrf.mxu0
    %v3380 = vadd.f32 0.0, %v3379
    %3381 = vdwg.mxu0
    %3382 = vmatpush.msra.mxu0 0.0
    %3383 = vmatpush.msra.mxu0 0.0
    %3384 = vmatpush.msra.mxu0 0.0
    %3385 = vmatpush.msra.mxu0 0.0
    %3386 = vmatpush.msra.mxu0 0.0
    %3387 = vmatpush.msra.mxu0 0.0
    %3388 = vmatpush.msra.mxu0 0.0
    %3389 = vmatpush.msra.mxu0 0.0
    %3390 = vmatpush.msra.mxu0 0.0
    %3391 = vmatpush.msra.mxu0 0.0
    %3392 = vmatpush.msra.mxu0 0.0
    %3393 = vmatpush.msra.mxu0 0.0
    %3394 = vmatpush.msra.mxu0 0.0
    %3395 = vmatpush.msra.mxu0 0.0
    %3396 = vmatpush.msra.mxu0 %v3020
    %3397 = vmatpush.msra.mxu0 %v3012
    %3398 = vmatmul.f32.gmra.mxu0 %v3240
    %v3399 = vpop.f32.mrf.mxu0
    %v3400 = vadd.f32 0.0, %v3399
    %3401 = vdwg.mxu0
    %v3402 = vperm.slane %v3260, 0
    %v3403 = vperm.slane %v3280, 0
    %v3404 = vperm.slane %v3300, 0
    %v3405 = vperm.slane %v3320, 0
    %v3406 = vperm.slane %v3340, 0
    %v3407 = vperm.slane %v3360, 0
    %v3408 = vperm.slane %v3380, 0
    %v3409 = vperm.slane %v3400, 0
    %v3410 = vsub.f32 %v2510, %v3402
    %v3411 = vsub.f32 %v2562, %v3403
    %v3412 = vsub.f32 %v2614, %v3404
    %v3413 = vsub.f32 %v2666, %v3405
    %v3414 = vsub.f32 %v2718, %v3406
    %v3415 = vsub.f32 %v2770, %v3407
    %v3416 = vsub.f32 %v2822, %v3408
    %v3417 = vsub.f32 %v2874, %v3409
    %v3418 = vmul.f32 %v3410, %v3410
    %v3419 = vmul.f32 %v3411, %v3411
    %v3420 = vmul.f32 %v3412, %v3412
    %v3421 = vmul.f32 %v3413, %v3413
    %v3422 = vmul.f32 %v3414, %v3414
    %v3423 = vmul.f32 %v3415, %v3415
    %v3424 = vmul.f32 %v3416, %v3416
    %v3425 = vmul.f32 %v3417, %v3417
    %v3426 = vsel %vm419, %v3418, 0.0
    %v3427 = vrot.slane %v3426, 4
    %v3428 = vadd.f32 %v3426, %v3427
    %v3429 = vrot.slane %v3428, 2
    %v3430 = vadd.f32 %v3428, %v3429
    %v3431 = vrot.slane %v3430, 1
    %v3432 = vadd.f32 %v3430, %v3431
    %v3433 = vsel %vm419, %v3419, 0.0
    %v3434 = vrot.slane %v3433, 4
    %v3435 = vadd.f32 %v3433, %v3434
    %v3436 = vrot.slane %v3435, 2
    %v3437 = vadd.f32 %v3435, %v3436
    %v3438 = vrot.slane %v3437, 1
    %v3439 = vadd.f32 %v3437, %v3438
    %v3440 = vsel %vm419, %v3420, 0.0
    %v3441 = vrot.slane %v3440, 4
    %v3442 = vadd.f32 %v3440, %v3441
    %v3443 = vrot.slane %v3442, 2
    %v3444 = vadd.f32 %v3442, %v3443
    %v3445 = vrot.slane %v3444, 1
    %v3446 = vadd.f32 %v3444, %v3445
    %v3447 = vsel %vm419, %v3421, 0.0
    %v3448 = vrot.slane %v3447, 4
    %v3449 = vadd.f32 %v3447, %v3448
    %v3450 = vrot.slane %v3449, 2
    %v3451 = vadd.f32 %v3449, %v3450
    %v3452 = vrot.slane %v3451, 1
    %v3453 = vadd.f32 %v3451, %v3452
    %v3454 = vsel %vm419, %v3422, 0.0
    %v3455 = vrot.slane %v3454, 4
    %v3456 = vadd.f32 %v3454, %v3455
    %v3457 = vrot.slane %v3456, 2
    %v3458 = vadd.f32 %v3456, %v3457
    %v3459 = vrot.slane %v3458, 1
    %v3460 = vadd.f32 %v3458, %v3459
    %v3461 = vsel %vm419, %v3423, 0.0
    %v3462 = vrot.slane %v3461, 4
    %v3463 = vadd.f32 %v3461, %v3462
    %v3464 = vrot.slane %v3463, 2
    %v3465 = vadd.f32 %v3463, %v3464
    %v3466 = vrot.slane %v3465, 1
    %v3467 = vadd.f32 %v3465, %v3466
    %v3468 = vsel %vm419, %v3424, 0.0
    %v3469 = vrot.slane %v3468, 4
    %v3470 = vadd.f32 %v3468, %v3469
    %v3471 = vrot.slane %v3470, 2
    %v3472 = vadd.f32 %v3470, %v3471
    %v3473 = vrot.slane %v3472, 1
    %v3474 = vadd.f32 %v3472, %v3473
    %v3475 = vsel %vm419, %v3425, 0.0
    %v3476 = vrot.slane %v3475, 4
    %v3477 = vadd.f32 %v3475, %v3476
    %v3478 = vrot.slane %v3477, 2
    %v3479 = vadd.f32 %v3477, %v3478
    %v3480 = vrot.slane %v3479, 1
    %v3481 = vadd.f32 %v3479, %v3480
    %3482 = vmatpush.msra.mxu0 %v2892
    %3483 = vmatpush.msra.mxu0 %v2891
    %3484 = vmatpush.msra.mxu0 %v2890
    %3485 = vmatpush.msra.mxu0 %v2889
    %3486 = vmatpush.msra.mxu0 %v2888
    %3487 = vmatpush.msra.mxu0 %v2887
    %3488 = vmatpush.msra.mxu0 %v2886
    %3489 = vmatpush.msra.mxu0 %v2885
    %3490 = vmatpush.msra.mxu0 %v2884
    %3491 = vmatpush.msra.mxu0 %v2883
    %3492 = vmatpush.msra.mxu0 %v2882
    %3493 = vmatpush.msra.mxu0 %v2881
    %3494 = vmatpush.msra.mxu0 %v2880
    %3495 = vmatpush.msra.mxu0 %v2879
    %3496 = vmatpush.msra.mxu0 %v2878
    %3497 = vmatpush.msra.mxu0 %v2877
    %3498 = vmatmul.f32.gmra.mxu0 %v3432
    %v3499 = vpop.f32.mrf.mxu0
    %v3500 = vadd.f32 0.0, %v3499
    %3501 = vdwg.mxu0
    %3502 = vmatpush.msra.mxu0 %v2908
    %3503 = vmatpush.msra.mxu0 %v2907
    %3504 = vmatpush.msra.mxu0 %v2906
    %3505 = vmatpush.msra.mxu0 %v2905
    %3506 = vmatpush.msra.mxu0 %v2904
    %3507 = vmatpush.msra.mxu0 %v2903
    %3508 = vmatpush.msra.mxu0 %v2902
    %3509 = vmatpush.msra.mxu0 %v2901
    %3510 = vmatpush.msra.mxu0 %v2900
    %3511 = vmatpush.msra.mxu0 %v2899
    %3512 = vmatpush.msra.mxu0 %v2898
    %3513 = vmatpush.msra.mxu0 %v2897
    %3514 = vmatpush.msra.mxu0 %v2896
    %3515 = vmatpush.msra.mxu0 %v2895
    %3516 = vmatpush.msra.mxu0 %v2894
    %3517 = vmatpush.msra.mxu0 %v2893
    %3518 = vmatmul.f32.gmra.mxu0 %v3439
    %v3519 = vpop.f32.mrf.mxu0
    %v3520 = vadd.f32 %v3500, %v3519
    %3521 = vdwg.mxu0
    %3522 = vmatpush.msra.mxu0 %v2924
    %3523 = vmatpush.msra.mxu0 %v2923
    %3524 = vmatpush.msra.mxu0 %v2922
    %3525 = vmatpush.msra.mxu0 %v2921
    %3526 = vmatpush.msra.mxu0 %v2920
    %3527 = vmatpush.msra.mxu0 %v2919
    %3528 = vmatpush.msra.mxu0 %v2918
    %3529 = vmatpush.msra.mxu0 %v2917
    %3530 = vmatpush.msra.mxu0 %v2916
    %3531 = vmatpush.msra.mxu0 %v2915
    %3532 = vmatpush.msra.mxu0 %v2914
    %3533 = vmatpush.msra.mxu0 %v2913
    %3534 = vmatpush.msra.mxu0 %v2912
    %3535 = vmatpush.msra.mxu0 %v2911
    %3536 = vmatpush.msra.mxu0 %v2910
    %3537 = vmatpush.msra.mxu0 %v2909
    %3538 = vmatmul.f32.gmra.mxu0 %v3446
    %v3539 = vpop.f32.mrf.mxu0
    %v3540 = vadd.f32 %v3520, %v3539
    %3541 = vdwg.mxu0
    %3542 = vmatpush.msra.mxu0 %v2940
    %3543 = vmatpush.msra.mxu0 %v2939
    %3544 = vmatpush.msra.mxu0 %v2938
    %3545 = vmatpush.msra.mxu0 %v2937
    %3546 = vmatpush.msra.mxu0 %v2936
    %3547 = vmatpush.msra.mxu0 %v2935
    %3548 = vmatpush.msra.mxu0 %v2934
    %3549 = vmatpush.msra.mxu0 %v2933
    %3550 = vmatpush.msra.mxu0 %v2932
    %3551 = vmatpush.msra.mxu0 %v2931
    %3552 = vmatpush.msra.mxu0 %v2930
    %3553 = vmatpush.msra.mxu0 %v2929
    %3554 = vmatpush.msra.mxu0 %v2928
    %3555 = vmatpush.msra.mxu0 %v2927
    %3556 = vmatpush.msra.mxu0 %v2926
    %3557 = vmatpush.msra.mxu0 %v2925
    %3558 = vmatmul.f32.gmra.mxu0 %v3453
    %v3559 = vpop.f32.mrf.mxu0
    %v3560 = vadd.f32 %v3540, %v3559
    %3561 = vdwg.mxu0
    %3562 = vmatpush.msra.mxu0 %v2956
    %3563 = vmatpush.msra.mxu0 %v2955
    %3564 = vmatpush.msra.mxu0 %v2954
    %3565 = vmatpush.msra.mxu0 %v2953
    %3566 = vmatpush.msra.mxu0 %v2952
    %3567 = vmatpush.msra.mxu0 %v2951
    %3568 = vmatpush.msra.mxu0 %v2950
    %3569 = vmatpush.msra.mxu0 %v2949
    %3570 = vmatpush.msra.mxu0 %v2948
    %3571 = vmatpush.msra.mxu0 %v2947
    %3572 = vmatpush.msra.mxu0 %v2946
    %3573 = vmatpush.msra.mxu0 %v2945
    %3574 = vmatpush.msra.mxu0 %v2944
    %3575 = vmatpush.msra.mxu0 %v2943
    %3576 = vmatpush.msra.mxu0 %v2942
    %3577 = vmatpush.msra.mxu0 %v2941
    %3578 = vmatmul.f32.gmra.mxu0 %v3460
    %v3579 = vpop.f32.mrf.mxu0
    %v3580 = vadd.f32 %v3560, %v3579
    %3581 = vdwg.mxu0
    %3582 = vmatpush.msra.mxu0 %v2972
    %3583 = vmatpush.msra.mxu0 %v2971
    %3584 = vmatpush.msra.mxu0 %v2970
    %3585 = vmatpush.msra.mxu0 %v2969
    %3586 = vmatpush.msra.mxu0 %v2968
    %3587 = vmatpush.msra.mxu0 %v2967
    %3588 = vmatpush.msra.mxu0 %v2966
    %3589 = vmatpush.msra.mxu0 %v2965
    %3590 = vmatpush.msra.mxu0 %v2964
    %3591 = vmatpush.msra.mxu0 %v2963
    %3592 = vmatpush.msra.mxu0 %v2962
    %3593 = vmatpush.msra.mxu0 %v2961
    %3594 = vmatpush.msra.mxu0 %v2960
    %3595 = vmatpush.msra.mxu0 %v2959
    %3596 = vmatpush.msra.mxu0 %v2958
    %3597 = vmatpush.msra.mxu0 %v2957
    %3598 = vmatmul.f32.gmra.mxu0 %v3467
    %v3599 = vpop.f32.mrf.mxu0
    %v3600 = vadd.f32 %v3580, %v3599
    %3601 = vdwg.mxu0
    %3602 = vmatpush.msra.mxu0 %v2988
    %3603 = vmatpush.msra.mxu0 %v2987
    %3604 = vmatpush.msra.mxu0 %v2986
    %3605 = vmatpush.msra.mxu0 %v2985
    %3606 = vmatpush.msra.mxu0 %v2984
    %3607 = vmatpush.msra.mxu0 %v2983
    %3608 = vmatpush.msra.mxu0 %v2982
    %3609 = vmatpush.msra.mxu0 %v2981
    %3610 = vmatpush.msra.mxu0 %v2980
    %3611 = vmatpush.msra.mxu0 %v2979
    %3612 = vmatpush.msra.mxu0 %v2978
    %3613 = vmatpush.msra.mxu0 %v2977
    %3614 = vmatpush.msra.mxu0 %v2976
    %3615 = vmatpush.msra.mxu0 %v2975
    %3616 = vmatpush.msra.mxu0 %v2974
    %3617 = vmatpush.msra.mxu0 %v2973
    %3618 = vmatmul.f32.gmra.mxu0 %v3474
    %v3619 = vpop.f32.mrf.mxu0
    %v3620 = vadd.f32 %v3600, %v3619
    %3621 = vdwg.mxu0
    %3622 = vmatpush.msra.mxu0 %v3004
    %3623 = vmatpush.msra.mxu0 %v3003
    %3624 = vmatpush.msra.mxu0 %v3002
    %3625 = vmatpush.msra.mxu0 %v3001
    %3626 = vmatpush.msra.mxu0 %v3000
    %3627 = vmatpush.msra.mxu0 %v2999
    %3628 = vmatpush.msra.mxu0 %v2998
    %3629 = vmatpush.msra.mxu0 %v2997
    %3630 = vmatpush.msra.mxu0 %v2996
    %3631 = vmatpush.msra.mxu0 %v2995
    %3632 = vmatpush.msra.mxu0 %v2994
    %3633 = vmatpush.msra.mxu0 %v2993
    %3634 = vmatpush.msra.mxu0 %v2992
    %3635 = vmatpush.msra.mxu0 %v2991
    %3636 = vmatpush.msra.mxu0 %v2990
    %3637 = vmatpush.msra.mxu0 %v2989
    %3638 = vmatmul.f32.gmra.mxu0 %v3481
    %v3639 = vpop.f32.mrf.mxu0
    %v3640 = vadd.f32 %v3620, %v3639
    %3641 = vdwg.mxu0
    %v3642 = vmul.f32 %v3640, 0.0078125
    %v3643 = vld [vmem:[#allocation13] sm:$0xff]
    %v3645 = vsel %vm3238, %v3642, 0
    %3647 = vmatpush.msra.mxu0 0.0
    %3648 = vmatpush.msra.mxu0 0.0
    %3649 = vmatpush.msra.mxu0 0.0
    %3650 = vmatpush.msra.mxu0 0.0
    %3651 = vmatpush.msra.mxu0 0.0
    %3652 = vmatpush.msra.mxu0 0.0
    %3653 = vmatpush.msra.mxu0 0.0
    %3654 = vmatpush.msra.mxu0 0.0
    %3655 = vmatpush.msra.mxu0 0.0
    %3656 = vmatpush.msra.mxu0 0.0
    %3657 = vmatpush.msra.mxu0 0.0
    %3658 = vmatpush.msra.mxu0 0.0
    %3659 = vmatpush.msra.mxu0 0.0
    %3660 = vmatpush.msra.mxu0 0.0
    %3661 = vmatpush.msra.mxu0 %v3013
    %3662 = vmatpush.msra.mxu0 %v3005
    %3663 = vmatmul.f32.gmra.mxu0 %v3645
    %v3664 = vpop.f32.mrf.mxu0
    %v3665 = vadd.f32 1e-05, %v3664
    %3666 = vdwg.mxu0
    %3667 = vmatpush.msra.mxu0 0.0
    %3668 = vmatpush.msra.mxu0 0.0
    %3669 = vmatpush.msra.mxu0 0.0
    %3670 = vmatpush.msra.mxu0 0.0
    %3671 = vmatpush.msra.mxu0 0.0
    %3672 = vmatpush.msra.mxu0 0.0
    %3673 = vmatpush.msra.mxu0 0.0
    %3674 = vmatpush.msra.mxu0 0.0
    %3675 = vmatpush.msra.mxu0 0.0
    %3676 = vmatpush.msra.mxu0 0.0
    %3677 = vmatpush.msra.mxu0 0.0
    %3678 = vmatpush.msra.mxu0 0.0
    %3679 = vmatpush.msra.mxu0 0.0
    %3680 = vmatpush.msra.mxu0 0.0
    %3681 = vmatpush.msra.mxu0 %v3014
    %3682 = vmatpush.msra.mxu0 %v3006
    %3683 = vmatmul.f32.gmra.mxu0 %v3645
    %v3684 = vpop.f32.mrf.mxu0
    %v3685 = vadd.f32 1e-05, %v3684
    %3686 = vdwg.mxu0
    %3687 = vmatpush.msra.mxu0 0.0
    %3688 = vmatpush.msra.mxu0 0.0
    %3689 = vmatpush.msra.mxu0 0.0
    %3690 = vmatpush.msra.mxu0 0.0
    %3691 = vmatpush.msra.mxu0 0.0
    %3692 = vmatpush.msra.mxu0 0.0
    %3693 = vmatpush.msra.mxu0 0.0
    %3694 = vmatpush.msra.mxu0 0.0
    %3695 = vmatpush.msra.mxu0 0.0
    %3696 = vmatpush.msra.mxu0 0.0
    %3697 = vmatpush.msra.mxu0 0.0
    %3698 = vmatpush.msra.mxu0 0.0
    %3699 = vmatpush.msra.mxu0 0.0
    %3700 = vmatpush.msra.mxu0 0.0
    %3701 = vmatpush.msra.mxu0 %v3015
    %3702 = vmatpush.msra.mxu0 %v3007
    %3703 = vmatmul.f32.gmra.mxu0 %v3645
    %v3704 = vpop.f32.mrf.mxu0
    %v3705 = vadd.f32 1e-05, %v3704
    %3706 = vdwg.mxu0
    %3707 = vmatpush.msra.mxu0 0.0
    %3708 = vmatpush.msra.mxu0 0.0
    %3709 = vmatpush.msra.mxu0 0.0
    %3710 = vmatpush.msra.mxu0 0.0
    %3711 = vmatpush.msra.mxu0 0.0
    %3712 = vmatpush.msra.mxu0 0.0
    %3713 = vmatpush.msra.mxu0 0.0
    %3714 = vmatpush.msra.mxu0 0.0
    %3715 = vmatpush.msra.mxu0 0.0
    %3716 = vmatpush.msra.mxu0 0.0
    %3717 = vmatpush.msra.mxu0 0.0
    %3718 = vmatpush.msra.mxu0 0.0
    %3719 = vmatpush.msra.mxu0 0.0
    %3720 = vmatpush.msra.mxu0 0.0
    %3721 = vmatpush.msra.mxu0 %v3016
    %3722 = vmatpush.msra.mxu0 %v3008
    %3723 = vmatmul.f32.gmra.mxu0 %v3645
    %v3724 = vpop.f32.mrf.mxu0
    %v3725 = vadd.f32 1e-05, %v3724
    %3726 = vdwg.mxu0
    %3727 = vmatpush.msra.mxu0 0.0
    %3728 = vmatpush.msra.mxu0 0.0
    %3729 = vmatpush.msra.mxu0 0.0
    %3730 = vmatpush.msra.mxu0 0.0
    %3731 = vmatpush.msra.mxu0 0.0
    %3732 = vmatpush.msra.mxu0 0.0
    %3733 = vmatpush.msra.mxu0 0.0
    %3734 = vmatpush.msra.mxu0 0.0
    %3735 = vmatpush.msra.mxu0 0.0
    %3736 = vmatpush.msra.mxu0 0.0
    %3737 = vmatpush.msra.mxu0 0.0
    %3738 = vmatpush.msra.mxu0 0.0
    %3739 = vmatpush.msra.mxu0 0.0
    %3740 = vmatpush.msra.mxu0 0.0
    %3741 = vmatpush.msra.mxu0 %v3017
    %3742 = vmatpush.msra.mxu0 %v3009
    %3743 = vmatmul.f32.gmra.mxu0 %v3645
    %v3744 = vpop.f32.mrf.mxu0
    %v3745 = vadd.f32 1e-05, %v3744
    %3746 = vdwg.mxu0
    %3747 = vmatpush.msra.mxu0 0.0
    %3748 = vmatpush.msra.mxu0 0.0
    %3749 = vmatpush.msra.mxu0 0.0
    %3750 = vmatpush.msra.mxu0 0.0
    %3751 = vmatpush.msra.mxu0 0.0
    %3752 = vmatpush.msra.mxu0 0.0
    %3753 = vmatpush.msra.mxu0 0.0
    %3754 = vmatpush.msra.mxu0 0.0
    %3755 = vmatpush.msra.mxu0 0.0
    %3756 = vmatpush.msra.mxu0 0.0
    %3757 = vmatpush.msra.mxu0 0.0
    %3758 = vmatpush.msra.mxu0 0.0
    %3759 = vmatpush.msra.mxu0 0.0
    %3760 = vmatpush.msra.mxu0 0.0
    %3761 = vmatpush.msra.mxu0 %v3018
    %3762 = vmatpush.msra.mxu0 %v3010
    %3763 = vmatmul.f32.gmra.mxu0 %v3645
    %v3764 = vpop.f32.mrf.mxu0
    %v3765 = vadd.f32 1e-05, %v3764
    %3766 = vdwg.mxu0
    %3767 = vmatpush.msra.mxu0 0.0
    %3768 = vmatpush.msra.mxu0 0.0
    %3769 = vmatpush.msra.mxu0 0.0
    %3770 = vmatpush.msra.mxu0 0.0
    %3771 = vmatpush.msra.mxu0 0.0
    %3772 = vmatpush.msra.mxu0 0.0
    %3773 = vmatpush.msra.mxu0 0.0
    %3774 = vmatpush.msra.mxu0 0.0
    %3775 = vmatpush.msra.mxu0 0.0
    %3776 = vmatpush.msra.mxu0 0.0
    %3777 = vmatpush.msra.mxu0 0.0
    %3778 = vmatpush.msra.mxu0 0.0
    %3779 = vmatpush.msra.mxu0 0.0
    %3780 = vmatpush.msra.mxu0 0.0
    %3781 = vmatpush.msra.mxu0 %v3019
    %3782 = vmatpush.msra.mxu0 %v3011
    %3783 = vmatmul.f32.gmra.mxu0 %v3645
    %v3784 = vpop.f32.mrf.mxu0
    %v3785 = vadd.f32 1e-05, %v3784
    %3786 = vdwg.mxu0
    %3787 = vmatpush.msra.mxu0 0.0
    %3788 = vmatpush.msra.mxu0 0.0
    %3789 = vmatpush.msra.mxu0 0.0
    %3790 = vmatpush.msra.mxu0 0.0
    %3791 = vmatpush.msra.mxu0 0.0
    %3792 = vmatpush.msra.mxu0 0.0
    %3793 = vmatpush.msra.mxu0 0.0
    %3794 = vmatpush.msra.mxu0 0.0
    %3795 = vmatpush.msra.mxu0 0.0
    %3796 = vmatpush.msra.mxu0 0.0
    %3797 = vmatpush.msra.mxu0 0.0
    %3798 = vmatpush.msra.mxu0 0.0
    %3799 = vmatpush.msra.mxu0 0.0
    %3800 = vmatpush.msra.mxu0 0.0
    %3801 = vmatpush.msra.mxu0 %v3020
    %3802 = vmatpush.msra.mxu0 %v3012
    %3803 = vmatmul.f32.gmra.mxu0 %v3645
    %v3804 = vpop.f32.mrf.mxu0
    %v3805 = vadd.f32 1e-05, %v3804
    %3806 = vdwg.mxu0
    %v3807 = vrsqrt.pop %v3665
    %v3808 = vmul.f32 %v3807, %v3665
    %v3809 = vmul.f32 %v3808, %v3807
    %v3810 = vmul.f32 0.5, %v3809
    %v3811 = vsub.f32 1.5, %v3810
    %v3812 = vmul.f32 %v3807, %v3811
    %vm3813 = vweird.f32 %v3665
    %vm3814 = vweird.f32 %v3807
    %vm3815 = vmor %vm3813, %vm3814
    %v3816 = vsel %vm3815, %v3807, %v3812
    %v3817 = vrsqrt.pop %v3685
    %v3818 = vmul.f32 %v3817, %v3685
    %v3819 = vmul.f32 %v3818, %v3817
    %v3820 = vmul.f32 0.5, %v3819
    %v3821 = vsub.f32 1.5, %v3820
    %v3822 = vmul.f32 %v3817, %v3821
    %vm3823 = vweird.f32 %v3685
    %vm3824 = vweird.f32 %v3817
    %vm3825 = vmor %vm3823, %vm3824
    %v3826 = vsel %vm3825, %v3817, %v3822
    %v3827 = vrsqrt.pop %v3705
    %v3828 = vmul.f32 %v3827, %v3705
    %v3829 = vmul.f32 %v3828, %v3827
    %v3830 = vmul.f32 0.5, %v3829
    %v3831 = vsub.f32 1.5, %v3830
    %v3832 = vmul.f32 %v3827, %v3831
    %vm3833 = vweird.f32 %v3705
    %vm3834 = vweird.f32 %v3827
    %vm3835 = vmor %vm3833, %vm3834
    %v3836 = vsel %vm3835, %v3827, %v3832
    %v3837 = vrsqrt.pop %v3725
    %v3838 = vmul.f32 %v3837, %v3725
    %v3839 = vmul.f32 %v3838, %v3837
    %v3840 = vmul.f32 0.5, %v3839
    %v3841 = vsub.f32 1.5, %v3840
    %v3842 = vmul.f32 %v3837, %v3841
    %vm3843 = vweird.f32 %v3725
    %vm3844 = vweird.f32 %v3837
    %vm3845 = vmor %vm3843, %vm3844
    %v3846 = vsel %vm3845, %v3837, %v3842
    %v3847 = vrsqrt.pop %v3745
    %v3848 = vmul.f32 %v3847, %v3745
    %v3849 = vmul.f32 %v3848, %v3847
    %v3850 = vmul.f32 0.5, %v3849
    %v3851 = vsub.f32 1.5, %v3850
    %v3852 = vmul.f32 %v3847, %v3851
    %vm3853 = vweird.f32 %v3745
    %vm3854 = vweird.f32 %v3847
    %vm3855 = vmor %vm3853, %vm3854
    %v3856 = vsel %vm3855, %v3847, %v3852
    %v3857 = vrsqrt.pop %v3765
    %v3858 = vmul.f32 %v3857, %v3765
    %v3859 = vmul.f32 %v3858, %v3857
    %v3860 = vmul.f32 0.5, %v3859
    %v3861 = vsub.f32 1.5, %v3860
    %v3862 = vmul.f32 %v3857, %v3861
    %vm3863 = vweird.f32 %v3765
    %vm3864 = vweird.f32 %v3857
    %vm3865 = vmor %vm3863, %vm3864
    %v3866 = vsel %vm3865, %v3857, %v3862
    %v3867 = vrsqrt.pop %v3785
    %v3868 = vmul.f32 %v3867, %v3785
    %v3869 = vmul.f32 %v3868, %v3867
    %v3870 = vmul.f32 0.5, %v3869
    %v3871 = vsub.f32 1.5, %v3870
    %v3872 = vmul.f32 %v3867, %v3871
    %vm3873 = vweird.f32 %v3785
    %vm3874 = vweird.f32 %v3867
    %vm3875 = vmor %vm3873, %vm3874
    %v3876 = vsel %vm3875, %v3867, %v3872
    %v3877 = vrsqrt.pop %v3805
    %v3878 = vmul.f32 %v3877, %v3805
    %v3879 = vmul.f32 %v3878, %v3877
    %v3880 = vmul.f32 0.5, %v3879
    %v3881 = vsub.f32 1.5, %v3880
    %v3882 = vmul.f32 %v3877, %v3881
    %vm3883 = vweird.f32 %v3805
    %vm3884 = vweird.f32 %v3877
    %vm3885 = vmor %vm3883, %vm3884
    %v3886 = vsel %vm3885, %v3877, %v3882
    %v3895 = vrot.slane %v3826, 7
    %v3896 = vrot.slane %v3836, 6
    %v3897 = vrot.slane %v3846, 5
    %v3898 = vrot.slane %v3856, 4
    %v3899 = vrot.slane %v3866, 3
    %v3900 = vrot.slane %v3876, 2
    %v3901 = vrot.slane %v3886, 1
    %v3902 = vsel %vm865, %v3816, %v3895
    %v3903 = vsel %vm867, %v3896, %v3897
    %v3904 = vsel %vm419, %v3902, %v3903
    %vm3905 = vcmask 1044484
    %v3906 = vsel %vm3905, %v3898, %v3899
    %vm3907 = vcmask 1046534
    %v3908 = vsel %vm3907, %v3900, %v3901
    %vm3909 = vcmask 1045508
    %v3910 = vsel %vm3909, %v3906, %v3908
    %vm3911 = vcmask 1043456
    %v3912 = vsel %vm3911, %v3904, %v3910
    %v3914 = vmul.f32 %v3643, %v3912
    %v3916 = vperm.slane %v3914, 0
    %v3917 = vperm.slane %v3914, 1
    %v3918 = vperm.slane %v3914, 2
    %v3919 = vperm.slane %v3914, 3
    %v3920 = vperm.slane %v3914, 4
    %v3921 = vperm.slane %v3914, 5
    %v3922 = vperm.slane %v3914, 6
    %v3923 = vperm.slane %v3914, 7
    %v3932 = vmul.f32 %v3410, %v3916
    %v3933 = vmul.f32 %v3411, %v3917
    %v3934 = vmul.f32 %v3412, %v3918
    %v3935 = vmul.f32 %v3413, %v3919
    %v3936 = vmul.f32 %v3414, %v3920
    %v3937 = vmul.f32 %v3415, %v3921
    %v3938 = vmul.f32 %v3416, %v3922
    %v3939 = vmul.f32 %v3417, %v3923
    %v3940 = vld [vmem:[%s10] sm:$0xff]
    %v3942 = vperm.slane %v3940, 0
    %v3943 = vperm.slane %v3940, 1
    %v3944 = vperm.slane %v3940, 2
    %v3945 = vperm.slane %v3940, 3
    %v3946 = vperm.slane %v3940, 4
    %v3947 = vperm.slane %v3940, 5
    %v3948 = vperm.slane %v3940, 6
    %v3949 = vperm.slane %v3940, 7
    %v3958 = vadd.f32 %v3932, %v3942
    %v3959 = vadd.f32 %v3933, %v3943
    %v3960 = vadd.f32 %v3934, %v3944
    %v3961 = vadd.f32 %v3935, %v3945
    %v3962 = vadd.f32 %v3936, %v3946
    %v3963 = vadd.f32 %v3937, %v3947
    %v3964 = vadd.f32 %v3938, %v3948
    %v3965 = vadd.f32 %v3939, %v3949
    %v3966 = vmax.f32 %v3958, 0.0
    %v3967 = vmax.f32 %v3959, 0.0
    %v3968 = vmax.f32 %v3960, 0.0
    %v3969 = vmax.f32 %v3961, 0.0
    %v3970 = vmax.f32 %v3962, 0.0
    %v3971 = vmax.f32 %v3963, 0.0
    %v3972 = vmax.f32 %v3964, 0.0
    %v3973 = vmax.f32 %v3965, 0.0
    %v3974 = vpack.c.bf16 %v3966, %v3966
    %v3975 = vpack.c.bf16 %v3967, %v3967
    %v3976 = vpack.c.bf16 %v3968, %v3968
    %v3977 = vpack.c.bf16 %v3969, %v3969
    %v3978 = vpack.c.bf16 %v3970, %v3970
    %v3979 = vpack.c.bf16 %v3971, %v3971
    %v3980 = vpack.c.bf16 %v3972, %v3972
    %v3981 = vpack.c.bf16 %v3973, %v3973
    %v3982 = vld [vmem:[#allocation18] sm:$0xff]
    %v3983 = vld [vmem:[#allocation18 + $0x8] sm:$0xff]
    %v3984 = vld [vmem:[#allocation18 + $0x10] sm:$0xff]
    %v3985 = vld [vmem:[#allocation18 + $0x18] sm:$0xff]
    %v3986 = vld [vmem:[#allocation18 + $0x20] sm:$0xff]
    %v3987 = vld [vmem:[#allocation18 + $0x28] sm:$0xff]
    %v3988 = vld [vmem:[#allocation18 + $0x30] sm:$0xff]
    %v3989 = vld [vmem:[#allocation18 + $0x38] sm:$0xff]
    %v3990 = vld [vmem:[#allocation18 + $0x40] sm:$0xff]
    %v3991 = vld [vmem:[#allocation18 + $0x48] sm:$0xff]
    %v3992 = vld [vmem:[#allocation18 + $0x50] sm:$0xff]
    %v3993 = vld [vmem:[#allocation18 + $0x58] sm:$0xff]
    %v3994 = vld [vmem:[#allocation18 + $0x60] sm:$0xff]
    %v3995 = vld [vmem:[#allocation18 + $0x68] sm:$0xff]
    %v3996 = vld [vmem:[#allocation18 + $0x70] sm:$0xff]
    %v3997 = vld [vmem:[#allocation18 + $0x78] sm:$0xff]
    %v3998 = vld [vmem:[#allocation18 + $0x80] sm:$0xff]
    %v3999 = vld [vmem:[#allocation18 + $0x88] sm:$0xff]
    %v4000 = vld [vmem:[#allocation18 + $0x90] sm:$0xff]
    %v4001 = vld [vmem:[#allocation18 + $0x98] sm:$0xff]
    %v4002 = vld [vmem:[#allocation18 + $0xa0] sm:$0xff]
    %v4003 = vld [vmem:[#allocation18 + $0xa8] sm:$0xff]
    %v4004 = vld [vmem:[#allocation18 + $0xb0] sm:$0xff]
    %v4005 = vld [vmem:[#allocation18 + $0xb8] sm:$0xff]
    %v4006 = vld [vmem:[#allocation18 + $0xc0] sm:$0xff]
    %v4007 = vld [vmem:[#allocation18 + $0xc8] sm:$0xff]
    %v4008 = vld [vmem:[#allocation18 + $0xd0] sm:$0xff]
    %v4009 = vld [vmem:[#allocation18 + $0xd8] sm:$0xff]
    %v4010 = vld [vmem:[#allocation18 + $0xe0] sm:$0xff]
    %v4011 = vld [vmem:[#allocation18 + $0xe8] sm:$0xff]
    %v4012 = vld [vmem:[#allocation18 + $0xf0] sm:$0xff]
    %v4013 = vld [vmem:[#allocation18 + $0xf8] sm:$0xff]
    %v4014 = vld [vmem:[#allocation18 + $0x100] sm:$0xff]
    %v4015 = vld [vmem:[#allocation18 + $0x108] sm:$0xff]
    %v4016 = vld [vmem:[#allocation18 + $0x110] sm:$0xff]
    %v4017 = vld [vmem:[#allocation18 + $0x118] sm:$0xff]
    %v4018 = vld [vmem:[#allocation18 + $0x120] sm:$0xff]
    %v4019 = vld [vmem:[#allocation18 + $0x128] sm:$0xff]
    %v4020 = vld [vmem:[#allocation18 + $0x130] sm:$0xff]
    %v4021 = vld [vmem:[#allocation18 + $0x138] sm:$0xff]
    %v4022 = vld [vmem:[#allocation18 + $0x140] sm:$0xff]
    %v4023 = vld [vmem:[#allocation18 + $0x148] sm:$0xff]
    %v4024 = vld [vmem:[#allocation18 + $0x150] sm:$0xff]
    %v4025 = vld [vmem:[#allocation18 + $0x158] sm:$0xff]
    %v4026 = vld [vmem:[#allocation18 + $0x160] sm:$0xff]
    %v4027 = vld [vmem:[#allocation18 + $0x168] sm:$0xff]
    %v4028 = vld [vmem:[#allocation18 + $0x170] sm:$0xff]
    %v4029 = vld [vmem:[#allocation18 + $0x178] sm:$0xff]
    %v4030 = vld [vmem:[#allocation18 + $0x180] sm:$0xff]
    %v4031 = vld [vmem:[#allocation18 + $0x188] sm:$0xff]
    %v4032 = vld [vmem:[#allocation18 + $0x190] sm:$0xff]
    %v4033 = vld [vmem:[#allocation18 + $0x198] sm:$0xff]
    %v4034 = vld [vmem:[#allocation18 + $0x1a0] sm:$0xff]
    %v4035 = vld [vmem:[#allocation18 + $0x1a8] sm:$0xff]
    %v4036 = vld [vmem:[#allocation18 + $0x1b0] sm:$0xff]
    %v4037 = vld [vmem:[#allocation18 + $0x1b8] sm:$0xff]
    %v4038 = vld [vmem:[#allocation18 + $0x1c0] sm:$0xff]
    %v4039 = vld [vmem:[#allocation18 + $0x1c8] sm:$0xff]
    %v4040 = vld [vmem:[#allocation18 + $0x1d0] sm:$0xff]
    %v4041 = vld [vmem:[#allocation18 + $0x1d8] sm:$0xff]
    %v4042 = vld [vmem:[#allocation18 + $0x1e0] sm:$0xff]
    %v4043 = vld [vmem:[#allocation18 + $0x1e8] sm:$0xff]
    %v4044 = vld [vmem:[#allocation18 + $0x1f0] sm:$0xff]
    %v4045 = vld [vmem:[#allocation18 + $0x1f8] sm:$0xff]
    %v4046 = vld [vmem:[#allocation18 + $0x200] sm:$0xff]
    %v4047 = vld [vmem:[#allocation18 + $0x208] sm:$0xff]
    %v4048 = vld [vmem:[#allocation18 + $0x210] sm:$0xff]
    %v4049 = vld [vmem:[#allocation18 + $0x218] sm:$0xff]
    %v4050 = vld [vmem:[#allocation18 + $0x220] sm:$0xff]
    %v4051 = vld [vmem:[#allocation18 + $0x228] sm:$0xff]
    %v4052 = vld [vmem:[#allocation18 + $0x230] sm:$0xff]
    %v4053 = vld [vmem:[#allocation18 + $0x238] sm:$0xff]
    %v4054 = vld [vmem:[#allocation18 + $0x240] sm:$0xff]
    %v4055 = vld [vmem:[#allocation18 + $0x248] sm:$0xff]
    %v4056 = vld [vmem:[#allocation18 + $0x250] sm:$0xff]
    %v4057 = vld [vmem:[#allocation18 + $0x258] sm:$0xff]
    %v4058 = vld [vmem:[#allocation18 + $0x260] sm:$0xff]
    %v4059 = vld [vmem:[#allocation18 + $0x268] sm:$0xff]
    %v4060 = vld [vmem:[#allocation18 + $0x270] sm:$0xff]
    %v4061 = vld [vmem:[#allocation18 + $0x278] sm:$0xff]
    %v4062 = vld [vmem:[#allocation18 + $0x280] sm:$0xff]
    %v4063 = vld [vmem:[#allocation18 + $0x288] sm:$0xff]
    %v4064 = vld [vmem:[#allocation18 + $0x290] sm:$0xff]
    %v4065 = vld [vmem:[#allocation18 + $0x298] sm:$0xff]
    %v4066 = vld [vmem:[#allocation18 + $0x2a0] sm:$0xff]
    %v4067 = vld [vmem:[#allocation18 + $0x2a8] sm:$0xff]
    %v4068 = vld [vmem:[#allocation18 + $0x2b0] sm:$0xff]
    %v4069 = vld [vmem:[#allocation18 + $0x2b8] sm:$0xff]
    %v4070 = vld [vmem:[#allocation18 + $0x2c0] sm:$0xff]
    %v4071 = vld [vmem:[#allocation18 + $0x2c8] sm:$0xff]
    %v4072 = vld [vmem:[#allocation18 + $0x2d0] sm:$0xff]
    %v4073 = vld [vmem:[#allocation18 + $0x2d8] sm:$0xff]
    %v4074 = vld [vmem:[#allocation18 + $0x2e0] sm:$0xff]
    %v4075 = vld [vmem:[#allocation18 + $0x2e8] sm:$0xff]
    %v4076 = vld [vmem:[#allocation18 + $0x2f0] sm:$0xff]
    %v4077 = vld [vmem:[#allocation18 + $0x2f8] sm:$0xff]
    %v4078 = vld [vmem:[#allocation18 + $0x300] sm:$0xff]
    %v4079 = vld [vmem:[#allocation18 + $0x308] sm:$0xff]
    %v4080 = vld [vmem:[#allocation18 + $0x310] sm:$0xff]
    %v4081 = vld [vmem:[#allocation18 + $0x318] sm:$0xff]
    %v4082 = vld [vmem:[#allocation18 + $0x320] sm:$0xff]
    %v4083 = vld [vmem:[#allocation18 + $0x328] sm:$0xff]
    %v4084 = vld [vmem:[#allocation18 + $0x330] sm:$0xff]
    %v4085 = vld [vmem:[#allocation18 + $0x338] sm:$0xff]
    %v4086 = vld [vmem:[#allocation18 + $0x340] sm:$0xff]
    %v4087 = vld [vmem:[#allocation18 + $0x348] sm:$0xff]
    %v4088 = vld [vmem:[#allocation18 + $0x350] sm:$0xff]
    %v4089 = vld [vmem:[#allocation18 + $0x358] sm:$0xff]
    %v4090 = vld [vmem:[#allocation18 + $0x360] sm:$0xff]
    %v4091 = vld [vmem:[#allocation18 + $0x368] sm:$0xff]
    %v4092 = vld [vmem:[#allocation18 + $0x370] sm:$0xff]
    %v4093 = vld [vmem:[#allocation18 + $0x378] sm:$0xff]
    %v4094 = vld [vmem:[#allocation18 + $0x380] sm:$0xff]
    %v4095 = vld [vmem:[#allocation18 + $0x388] sm:$0xff]
    %v4096 = vld [vmem:[#allocation18 + $0x390] sm:$0xff]
    %v4097 = vld [vmem:[#allocation18 + $0x398] sm:$0xff]
    %v4098 = vld [vmem:[#allocation18 + $0x3a0] sm:$0xff]
    %v4099 = vld [vmem:[#allocation18 + $0x3a8] sm:$0xff]
    %v4100 = vld [vmem:[#allocation18 + $0x3b0] sm:$0xff]
    %v4101 = vld [vmem:[#allocation18 + $0x3b8] sm:$0xff]
    %v4102 = vld [vmem:[#allocation18 + $0x3c0] sm:$0xff]
    %v4103 = vld [vmem:[#allocation18 + $0x3c8] sm:$0xff]
    %v4104 = vld [vmem:[#allocation18 + $0x3d0] sm:$0xff]
    %v4105 = vld [vmem:[#allocation18 + $0x3d8] sm:$0xff]
    %v4106 = vld [vmem:[#allocation18 + $0x3e0] sm:$0xff]
    %v4107 = vld [vmem:[#allocation18 + $0x3e8] sm:$0xff]
    %v4108 = vld [vmem:[#allocation18 + $0x3f0] sm:$0xff]
    %v4109 = vld [vmem:[#allocation18 + $0x3f8] sm:$0xff]
    %v4110 = vld [vmem:[%s14] sm:$0x3]
    %v4112 = vperm.slane %v4110, 0
    %v4113 = vperm.slane %v4110, 1
    %v4244 = vunpack.c.l.b16 %v3982
    %v4245 = vunpack.c.h.b16 %v3982
    %v4246 = vunpack.c.l.b16 %v3983
    %v4247 = vunpack.c.h.b16 %v3983
    %v4248 = vunpack.c.l.b16 %v3984
    %v4249 = vunpack.c.h.b16 %v3984
    %v4250 = vunpack.c.l.b16 %v3985
    %v4251 = vunpack.c.h.b16 %v3985
    %v4252 = vunpack.c.l.b16 %v3986
    %v4253 = vunpack.c.h.b16 %v3986
    %v4254 = vunpack.c.l.b16 %v3987
    %v4255 = vunpack.c.h.b16 %v3987
    %v4256 = vunpack.c.l.b16 %v3988
    %v4257 = vunpack.c.h.b16 %v3988
    %v4258 = vunpack.c.l.b16 %v3989
    %v4259 = vunpack.c.h.b16 %v3989
    %v4260 = vunpack.c.l.b16 %v3990
    %v4261 = vunpack.c.h.b16 %v3990
    %v4262 = vunpack.c.l.b16 %v3991
    %v4263 = vunpack.c.h.b16 %v3991
    %v4264 = vunpack.c.l.b16 %v3992
    %v4265 = vunpack.c.h.b16 %v3992
    %v4266 = vunpack.c.l.b16 %v3993
    %v4267 = vunpack.c.h.b16 %v3993
    %v4268 = vunpack.c.l.b16 %v3994
    %v4269 = vunpack.c.h.b16 %v3994
    %v4270 = vunpack.c.l.b16 %v3995
    %v4271 = vunpack.c.h.b16 %v3995
    %v4272 = vunpack.c.l.b16 %v3996
    %v4273 = vunpack.c.h.b16 %v3996
    %v4274 = vunpack.c.l.b16 %v3997
    %v4275 = vunpack.c.h.b16 %v3997
    %v4276 = vunpack.c.l.b16 %v3998
    %v4277 = vunpack.c.h.b16 %v3998
    %v4278 = vunpack.c.l.b16 %v3999
    %v4279 = vunpack.c.h.b16 %v3999
    %v4280 = vunpack.c.l.b16 %v4000
    %v4281 = vunpack.c.h.b16 %v4000
    %v4282 = vunpack.c.l.b16 %v4001
    %v4283 = vunpack.c.h.b16 %v4001
    %v4284 = vunpack.c.l.b16 %v4002
    %v4285 = vunpack.c.h.b16 %v4002
    %v4286 = vunpack.c.l.b16 %v4003
    %v4287 = vunpack.c.h.b16 %v4003
    %v4288 = vunpack.c.l.b16 %v4004
    %v4289 = vunpack.c.h.b16 %v4004
    %v4290 = vunpack.c.l.b16 %v4005
    %v4291 = vunpack.c.h.b16 %v4005
    %v4292 = vunpack.c.l.b16 %v4006
    %v4293 = vunpack.c.h.b16 %v4006
    %v4294 = vunpack.c.l.b16 %v4007
    %v4295 = vunpack.c.h.b16 %v4007
    %v4296 = vunpack.c.l.b16 %v4008
    %v4297 = vunpack.c.h.b16 %v4008
    %v4298 = vunpack.c.l.b16 %v4009
    %v4299 = vunpack.c.h.b16 %v4009
    %v4300 = vunpack.c.l.b16 %v4010
    %v4301 = vunpack.c.h.b16 %v4010
    %v4302 = vunpack.c.l.b16 %v4011
    %v4303 = vunpack.c.h.b16 %v4011
    %v4304 = vunpack.c.l.b16 %v4012
    %v4305 = vunpack.c.h.b16 %v4012
    %v4306 = vunpack.c.l.b16 %v4013
    %v4307 = vunpack.c.h.b16 %v4013
    %v4308 = vunpack.c.l.b16 %v4014
    %v4309 = vunpack.c.h.b16 %v4014
    %v4310 = vunpack.c.l.b16 %v4015
    %v4311 = vunpack.c.h.b16 %v4015
    %v4312 = vunpack.c.l.b16 %v4016
    %v4313 = vunpack.c.h.b16 %v4016
    %v4314 = vunpack.c.l.b16 %v4017
    %v4315 = vunpack.c.h.b16 %v4017
    %v4316 = vunpack.c.l.b16 %v4018
    %v4317 = vunpack.c.h.b16 %v4018
    %v4318 = vunpack.c.l.b16 %v4019
    %v4319 = vunpack.c.h.b16 %v4019
    %v4320 = vunpack.c.l.b16 %v4020
    %v4321 = vunpack.c.h.b16 %v4020
    %v4322 = vunpack.c.l.b16 %v4021
    %v4323 = vunpack.c.h.b16 %v4021
    %v4324 = vunpack.c.l.b16 %v4022
    %v4325 = vunpack.c.h.b16 %v4022
    %v4326 = vunpack.c.l.b16 %v4023
    %v4327 = vunpack.c.h.b16 %v4023
    %v4328 = vunpack.c.l.b16 %v4024
    %v4329 = vunpack.c.h.b16 %v4024
    %v4330 = vunpack.c.l.b16 %v4025
    %v4331 = vunpack.c.h.b16 %v4025
    %v4332 = vunpack.c.l.b16 %v4026
    %v4333 = vunpack.c.h.b16 %v4026
    %v4334 = vunpack.c.l.b16 %v4027
    %v4335 = vunpack.c.h.b16 %v4027
    %v4336 = vunpack.c.l.b16 %v4028
    %v4337 = vunpack.c.h.b16 %v4028
    %v4338 = vunpack.c.l.b16 %v4029
    %v4339 = vunpack.c.h.b16 %v4029
    %v4340 = vunpack.c.l.b16 %v4030
    %v4341 = vunpack.c.h.b16 %v4030
    %v4342 = vunpack.c.l.b16 %v4031
    %v4343 = vunpack.c.h.b16 %v4031
    %v4344 = vunpack.c.l.b16 %v4032
    %v4345 = vunpack.c.h.b16 %v4032
    %v4346 = vunpack.c.l.b16 %v4033
    %v4347 = vunpack.c.h.b16 %v4033
    %v4348 = vunpack.c.l.b16 %v4034
    %v4349 = vunpack.c.h.b16 %v4034
    %v4350 = vunpack.c.l.b16 %v4035
    %v4351 = vunpack.c.h.b16 %v4035
    %v4352 = vunpack.c.l.b16 %v4036
    %v4353 = vunpack.c.h.b16 %v4036
    %v4354 = vunpack.c.l.b16 %v4037
    %v4355 = vunpack.c.h.b16 %v4037
    %v4356 = vunpack.c.l.b16 %v4038
    %v4357 = vunpack.c.h.b16 %v4038
    %v4358 = vunpack.c.l.b16 %v4039
    %v4359 = vunpack.c.h.b16 %v4039
    %v4360 = vunpack.c.l.b16 %v4040
    %v4361 = vunpack.c.h.b16 %v4040
    %v4362 = vunpack.c.l.b16 %v4041
    %v4363 = vunpack.c.h.b16 %v4041
    %v4364 = vunpack.c.l.b16 %v4042
    %v4365 = vunpack.c.h.b16 %v4042
    %v4366 = vunpack.c.l.b16 %v4043
    %v4367 = vunpack.c.h.b16 %v4043
    %v4368 = vunpack.c.l.b16 %v4044
    %v4369 = vunpack.c.h.b16 %v4044
    %v4370 = vunpack.c.l.b16 %v4045
    %v4371 = vunpack.c.h.b16 %v4045
    %v4372 = vunpack.c.l.b16 %v4046
    %v4373 = vunpack.c.h.b16 %v4046
    %v4374 = vunpack.c.l.b16 %v4047
    %v4375 = vunpack.c.h.b16 %v4047
    %v4376 = vunpack.c.l.b16 %v4048
    %v4377 = vunpack.c.h.b16 %v4048
    %v4378 = vunpack.c.l.b16 %v4049
    %v4379 = vunpack.c.h.b16 %v4049
    %v4380 = vunpack.c.l.b16 %v4050
    %v4381 = vunpack.c.h.b16 %v4050
    %v4382 = vunpack.c.l.b16 %v4051
    %v4383 = vunpack.c.h.b16 %v4051
    %v4384 = vunpack.c.l.b16 %v4052
    %v4385 = vunpack.c.h.b16 %v4052
    %v4386 = vunpack.c.l.b16 %v4053
    %v4387 = vunpack.c.h.b16 %v4053
    %v4388 = vunpack.c.l.b16 %v4054
    %v4389 = vunpack.c.h.b16 %v4054
    %v4390 = vunpack.c.l.b16 %v4055
    %v4391 = vunpack.c.h.b16 %v4055
    %v4392 = vunpack.c.l.b16 %v4056
    %v4393 = vunpack.c.h.b16 %v4056
    %v4394 = vunpack.c.l.b16 %v4057
    %v4395 = vunpack.c.h.b16 %v4057
    %v4396 = vunpack.c.l.b16 %v4058
    %v4397 = vunpack.c.h.b16 %v4058
    %v4398 = vunpack.c.l.b16 %v4059
    %v4399 = vunpack.c.h.b16 %v4059
    %v4400 = vunpack.c.l.b16 %v4060
    %v4401 = vunpack.c.h.b16 %v4060
    %v4402 = vunpack.c.l.b16 %v4061
    %v4403 = vunpack.c.h.b16 %v4061
    %v4404 = vunpack.c.l.b16 %v4062
    %v4405 = vunpack.c.h.b16 %v4062
    %v4406 = vunpack.c.l.b16 %v4063
    %v4407 = vunpack.c.h.b16 %v4063
    %v4408 = vunpack.c.l.b16 %v4064
    %v4409 = vunpack.c.h.b16 %v4064
    %v4410 = vunpack.c.l.b16 %v4065
    %v4411 = vunpack.c.h.b16 %v4065
    %v4412 = vunpack.c.l.b16 %v4066
    %v4413 = vunpack.c.h.b16 %v4066
    %v4414 = vunpack.c.l.b16 %v4067
    %v4415 = vunpack.c.h.b16 %v4067
    %v4416 = vunpack.c.l.b16 %v4068
    %v4417 = vunpack.c.h.b16 %v4068
    %v4418 = vunpack.c.l.b16 %v4069
    %v4419 = vunpack.c.h.b16 %v4069
    %v4420 = vunpack.c.l.b16 %v4070
    %v4421 = vunpack.c.h.b16 %v4070
    %v4422 = vunpack.c.l.b16 %v4071
    %v4423 = vunpack.c.h.b16 %v4071
    %v4424 = vunpack.c.l.b16 %v4072
    %v4425 = vunpack.c.h.b16 %v4072
    %v4426 = vunpack.c.l.b16 %v4073
    %v4427 = vunpack.c.h.b16 %v4073
    %v4428 = vunpack.c.l.b16 %v4074
    %v4429 = vunpack.c.h.b16 %v4074
    %v4430 = vunpack.c.l.b16 %v4075
    %v4431 = vunpack.c.h.b16 %v4075
    %v4432 = vunpack.c.l.b16 %v4076
    %v4433 = vunpack.c.h.b16 %v4076
    %v4434 = vunpack.c.l.b16 %v4077
    %v4435 = vunpack.c.h.b16 %v4077
    %v4436 = vunpack.c.l.b16 %v4078
    %v4437 = vunpack.c.h.b16 %v4078
    %v4438 = vunpack.c.l.b16 %v4079
    %v4439 = vunpack.c.h.b16 %v4079
    %v4440 = vunpack.c.l.b16 %v4080
    %v4441 = vunpack.c.h.b16 %v4080
    %v4442 = vunpack.c.l.b16 %v4081
    %v4443 = vunpack.c.h.b16 %v4081
    %v4444 = vunpack.c.l.b16 %v4082
    %v4445 = vunpack.c.h.b16 %v4082
    %v4446 = vunpack.c.l.b16 %v4083
    %v4447 = vunpack.c.h.b16 %v4083
    %v4448 = vunpack.c.l.b16 %v4084
    %v4449 = vunpack.c.h.b16 %v4084
    %v4450 = vunpack.c.l.b16 %v4085
    %v4451 = vunpack.c.h.b16 %v4085
    %v4452 = vunpack.c.l.b16 %v4086
    %v4453 = vunpack.c.h.b16 %v4086
    %v4454 = vunpack.c.l.b16 %v4087
    %v4455 = vunpack.c.h.b16 %v4087
    %v4456 = vunpack.c.l.b16 %v4088
    %v4457 = vunpack.c.h.b16 %v4088
    %v4458 = vunpack.c.l.b16 %v4089
    %v4459 = vunpack.c.h.b16 %v4089
    %v4460 = vunpack.c.l.b16 %v4090
    %v4461 = vunpack.c.h.b16 %v4090
    %v4462 = vunpack.c.l.b16 %v4091
    %v4463 = vunpack.c.h.b16 %v4091
    %v4464 = vunpack.c.l.b16 %v4092
    %v4465 = vunpack.c.h.b16 %v4092
    %v4466 = vunpack.c.l.b16 %v4093
    %v4467 = vunpack.c.h.b16 %v4093
    %v4468 = vunpack.c.l.b16 %v4094
    %v4469 = vunpack.c.h.b16 %v4094
    %v4470 = vunpack.c.l.b16 %v4095
    %v4471 = vunpack.c.h.b16 %v4095
    %v4472 = vunpack.c.l.b16 %v4096
    %v4473 = vunpack.c.h.b16 %v4096
    %v4474 = vunpack.c.l.b16 %v4097
    %v4475 = vunpack.c.h.b16 %v4097
    %v4476 = vunpack.c.l.b16 %v4098
    %v4477 = vunpack.c.h.b16 %v4098
    %v4478 = vunpack.c.l.b16 %v4099
    %v4479 = vunpack.c.h.b16 %v4099
    %v4480 = vunpack.c.l.b16 %v4100
    %v4481 = vunpack.c.h.b16 %v4100
    %v4482 = vunpack.c.l.b16 %v4101
    %v4483 = vunpack.c.h.b16 %v4101
    %v4484 = vunpack.c.l.b16 %v4102
    %v4485 = vunpack.c.h.b16 %v4102
    %v4486 = vunpack.c.l.b16 %v4103
    %v4487 = vunpack.c.h.b16 %v4103
    %v4488 = vunpack.c.l.b16 %v4104
    %v4489 = vunpack.c.h.b16 %v4104
    %v4490 = vunpack.c.l.b16 %v4105
    %v4491 = vunpack.c.h.b16 %v4105
    %v4492 = vunpack.c.l.b16 %v4106
    %v4493 = vunpack.c.h.b16 %v4106
    %v4494 = vunpack.c.l.b16 %v4107
    %v4495 = vunpack.c.h.b16 %v4107
    %v4496 = vunpack.c.l.b16 %v4108
    %v4497 = vunpack.c.h.b16 %v4108
    %v4498 = vunpack.c.l.b16 %v4109
    %v4499 = vunpack.c.h.b16 %v4109
    %v4500 = vpack.c.b16 %v4246, %v4244
    %v4501 = vpack.c.b16 %v4247, %v4245
    %v4502 = vpack.c.b16 %v4250, %v4248
    %v4503 = vpack.c.b16 %v4251, %v4249
    %v4504 = vpack.c.b16 %v4254, %v4252
    %v4505 = vpack.c.b16 %v4255, %v4253
    %v4506 = vpack.c.b16 %v4258, %v4256
    %v4507 = vpack.c.b16 %v4259, %v4257
    %v4508 = vpack.c.b16 %v4262, %v4260
    %v4509 = vpack.c.b16 %v4263, %v4261
    %v4510 = vpack.c.b16 %v4266, %v4264
    %v4511 = vpack.c.b16 %v4267, %v4265
    %v4512 = vpack.c.b16 %v4270, %v4268
    %v4513 = vpack.c.b16 %v4271, %v4269
    %v4514 = vpack.c.b16 %v4274, %v4272
    %v4515 = vpack.c.b16 %v4275, %v4273
    %v4516 = vpack.c.b16 %v4278, %v4276
    %v4517 = vpack.c.b16 %v4279, %v4277
    %v4518 = vpack.c.b16 %v4282, %v4280
    %v4519 = vpack.c.b16 %v4283, %v4281
    %v4520 = vpack.c.b16 %v4286, %v4284
    %v4521 = vpack.c.b16 %v4287, %v4285
    %v4522 = vpack.c.b16 %v4290, %v4288
    %v4523 = vpack.c.b16 %v4291, %v4289
    %v4524 = vpack.c.b16 %v4294, %v4292
    %v4525 = vpack.c.b16 %v4295, %v4293
    %v4526 = vpack.c.b16 %v4298, %v4296
    %v4527 = vpack.c.b16 %v4299, %v4297
    %v4528 = vpack.c.b16 %v4302, %v4300
    %v4529 = vpack.c.b16 %v4303, %v4301
    %v4530 = vpack.c.b16 %v4306, %v4304
    %v4531 = vpack.c.b16 %v4307, %v4305
    %v4532 = vpack.c.b16 %v4310, %v4308
    %v4533 = vpack.c.b16 %v4311, %v4309
    %v4534 = vpack.c.b16 %v4314, %v4312
    %v4535 = vpack.c.b16 %v4315, %v4313
    %v4536 = vpack.c.b16 %v4318, %v4316
    %v4537 = vpack.c.b16 %v4319, %v4317
    %v4538 = vpack.c.b16 %v4322, %v4320
    %v4539 = vpack.c.b16 %v4323, %v4321
    %v4540 = vpack.c.b16 %v4326, %v4324
    %v4541 = vpack.c.b16 %v4327, %v4325
    %v4542 = vpack.c.b16 %v4330, %v4328
    %v4543 = vpack.c.b16 %v4331, %v4329
    %v4544 = vpack.c.b16 %v4334, %v4332
    %v4545 = vpack.c.b16 %v4335, %v4333
    %v4546 = vpack.c.b16 %v4338, %v4336
    %v4547 = vpack.c.b16 %v4339, %v4337
    %v4548 = vpack.c.b16 %v4342, %v4340
    %v4549 = vpack.c.b16 %v4343, %v4341
    %v4550 = vpack.c.b16 %v4346, %v4344
    %v4551 = vpack.c.b16 %v4347, %v4345
    %v4552 = vpack.c.b16 %v4350, %v4348
    %v4553 = vpack.c.b16 %v4351, %v4349
    %v4554 = vpack.c.b16 %v4354, %v4352
    %v4555 = vpack.c.b16 %v4355, %v4353
    %v4556 = vpack.c.b16 %v4358, %v4356
    %v4557 = vpack.c.b16 %v4359, %v4357
    %v4558 = vpack.c.b16 %v4362, %v4360
    %v4559 = vpack.c.b16 %v4363, %v4361
    %v4560 = vpack.c.b16 %v4366, %v4364
    %v4561 = vpack.c.b16 %v4367, %v4365
    %v4562 = vpack.c.b16 %v4370, %v4368
    %v4563 = vpack.c.b16 %v4371, %v4369
    %v4564 = vpack.c.b16 %v4374, %v4372
    %v4565 = vpack.c.b16 %v4375, %v4373
    %v4566 = vpack.c.b16 %v4378, %v4376
    %v4567 = vpack.c.b16 %v4379, %v4377
    %v4568 = vpack.c.b16 %v4382, %v4380
    %v4569 = vpack.c.b16 %v4383, %v4381
    %v4570 = vpack.c.b16 %v4386, %v4384
    %v4571 = vpack.c.b16 %v4387, %v4385
    %v4572 = vpack.c.b16 %v4390, %v4388
    %v4573 = vpack.c.b16 %v4391, %v4389
    %v4574 = vpack.c.b16 %v4394, %v4392
    %v4575 = vpack.c.b16 %v4395, %v4393
    %v4576 = vpack.c.b16 %v4398, %v4396
    %v4577 = vpack.c.b16 %v4399, %v4397
    %v4578 = vpack.c.b16 %v4402, %v4400
    %v4579 = vpack.c.b16 %v4403, %v4401
    %v4580 = vpack.c.b16 %v4406, %v4404
    %v4581 = vpack.c.b16 %v4407, %v4405
    %v4582 = vpack.c.b16 %v4410, %v4408
    %v4583 = vpack.c.b16 %v4411, %v4409
    %v4584 = vpack.c.b16 %v4414, %v4412
    %v4585 = vpack.c.b16 %v4415, %v4413
    %v4586 = vpack.c.b16 %v4418, %v4416
    %v4587 = vpack.c.b16 %v4419, %v4417
    %v4588 = vpack.c.b16 %v4422, %v4420
    %v4589 = vpack.c.b16 %v4423, %v4421
    %v4590 = vpack.c.b16 %v4426, %v4424
    %v4591 = vpack.c.b16 %v4427, %v4425
    %v4592 = vpack.c.b16 %v4430, %v4428
    %v4593 = vpack.c.b16 %v4431, %v4429
    %v4594 = vpack.c.b16 %v4434, %v4432
    %v4595 = vpack.c.b16 %v4435, %v4433
    %v4596 = vpack.c.b16 %v4438, %v4436
    %v4597 = vpack.c.b16 %v4439, %v4437
    %v4598 = vpack.c.b16 %v4442, %v4440
    %v4599 = vpack.c.b16 %v4443, %v4441
    %v4600 = vpack.c.b16 %v4446, %v4444
    %v4601 = vpack.c.b16 %v4447, %v4445
    %v4602 = vpack.c.b16 %v4450, %v4448
    %v4603 = vpack.c.b16 %v4451, %v4449
    %v4604 = vpack.c.b16 %v4454, %v4452
    %v4605 = vpack.c.b16 %v4455, %v4453
    %v4606 = vpack.c.b16 %v4458, %v4456
    %v4607 = vpack.c.b16 %v4459, %v4457
    %v4608 = vpack.c.b16 %v4462, %v4460
    %v4609 = vpack.c.b16 %v4463, %v4461
    %v4610 = vpack.c.b16 %v4466, %v4464
    %v4611 = vpack.c.b16 %v4467, %v4465
    %v4612 = vpack.c.b16 %v4470, %v4468
    %v4613 = vpack.c.b16 %v4471, %v4469
    %v4614 = vpack.c.b16 %v4474, %v4472
    %v4615 = vpack.c.b16 %v4475, %v4473
    %v4616 = vpack.c.b16 %v4478, %v4476
    %v4617 = vpack.c.b16 %v4479, %v4477
    %v4618 = vpack.c.b16 %v4482, %v4480
    %v4619 = vpack.c.b16 %v4483, %v4481
    %v4620 = vpack.c.b16 %v4486, %v4484
    %v4621 = vpack.c.b16 %v4487, %v4485
    %v4622 = vpack.c.b16 %v4490, %v4488
    %v4623 = vpack.c.b16 %v4491, %v4489
    %v4624 = vpack.c.b16 %v4494, %v4492
    %v4625 = vpack.c.b16 %v4495, %v4493
    %v4626 = vpack.c.b16 %v4498, %v4496
    %v4627 = vpack.c.b16 %v4499, %v4497
    %4756 = vmatpush.bf16.msra.mxu0 %v4514
    %4757 = vmatpush.bf16.msra.mxu0 %v4512
    %4758 = vmatpush.bf16.msra.mxu0 %v4510
    %4759 = vmatpush.bf16.msra.mxu0 %v4508
    %4760 = vmatpush.bf16.msra.mxu0 %v4506
    %4761 = vmatpush.bf16.msra.mxu0 %v4504
    %4762 = vmatpush.bf16.msra.mxu0 %v4502
    %4763 = vmatpush.bf16.msra.mxu0 %v4500
    %4764 = vmatmul.bf16.gmra.mxu0 %v3974
    %v4765 = vpop.f32.mrf.mxu0
    %v4766 = vadd.f32 %v4112, %v4765
    %v4767 = vpop.f32.mrf.mxu0
    %4768 = vdwg.mxu0
    %4769 = vmatpush.bf16.msra.mxu0 %v4530
    %4770 = vmatpush.bf16.msra.mxu0 %v4528
    %4771 = vmatpush.bf16.msra.mxu0 %v4526
    %4772 = vmatpush.bf16.msra.mxu0 %v4524
    %4773 = vmatpush.bf16.msra.mxu0 %v4522
    %4774 = vmatpush.bf16.msra.mxu0 %v4520
    %4775 = vmatpush.bf16.msra.mxu0 %v4518
    %4776 = vmatpush.bf16.msra.mxu0 %v4516
    %4777 = vmatmul.bf16.gmra.mxu0 %v3975
    %v4778 = vpop.f32.mrf.mxu0
    %v4779 = vadd.f32 %v4766, %v4778
    %v4780 = vpop.f32.mrf.mxu0
    %4781 = vdwg.mxu0
    %4782 = vmatpush.bf16.msra.mxu0 %v4546
    %4783 = vmatpush.bf16.msra.mxu0 %v4544
    %4784 = vmatpush.bf16.msra.mxu0 %v4542
    %4785 = vmatpush.bf16.msra.mxu0 %v4540
    %4786 = vmatpush.bf16.msra.mxu0 %v4538
    %4787 = vmatpush.bf16.msra.mxu0 %v4536
    %4788 = vmatpush.bf16.msra.mxu0 %v4534
    %4789 = vmatpush.bf16.msra.mxu0 %v4532
    %4790 = vmatmul.bf16.gmra.mxu0 %v3976
    %v4791 = vpop.f32.mrf.mxu0
    %v4792 = vadd.f32 %v4779, %v4791
    %v4793 = vpop.f32.mrf.mxu0
    %4794 = vdwg.mxu0
    %4795 = vmatpush.bf16.msra.mxu0 %v4562
    %4796 = vmatpush.bf16.msra.mxu0 %v4560
    %4797 = vmatpush.bf16.msra.mxu0 %v4558
    %4798 = vmatpush.bf16.msra.mxu0 %v4556
    %4799 = vmatpush.bf16.msra.mxu0 %v4554
    %4800 = vmatpush.bf16.msra.mxu0 %v4552
    %4801 = vmatpush.bf16.msra.mxu0 %v4550
    %4802 = vmatpush.bf16.msra.mxu0 %v4548
    %4803 = vmatmul.bf16.gmra.mxu0 %v3977
    %v4804 = vpop.f32.mrf.mxu0
    %v4805 = vadd.f32 %v4792, %v4804
    %v4806 = vpop.f32.mrf.mxu0
    %4807 = vdwg.mxu0
    %4808 = vmatpush.bf16.msra.mxu0 %v4578
    %4809 = vmatpush.bf16.msra.mxu0 %v4576
    %4810 = vmatpush.bf16.msra.mxu0 %v4574
    %4811 = vmatpush.bf16.msra.mxu0 %v4572
    %4812 = vmatpush.bf16.msra.mxu0 %v4570
    %4813 = vmatpush.bf16.msra.mxu0 %v4568
    %4814 = vmatpush.bf16.msra.mxu0 %v4566
    %4815 = vmatpush.bf16.msra.mxu0 %v4564
    %4816 = vmatmul.bf16.gmra.mxu0 %v3978
    %v4817 = vpop.f32.mrf.mxu0
    %v4818 = vadd.f32 %v4805, %v4817
    %v4819 = vpop.f32.mrf.mxu0
    %4820 = vdwg.mxu0
    %4821 = vmatpush.bf16.msra.mxu0 %v4594
    %4822 = vmatpush.bf16.msra.mxu0 %v4592
    %4823 = vmatpush.bf16.msra.mxu0 %v4590
    %4824 = vmatpush.bf16.msra.mxu0 %v4588
    %4825 = vmatpush.bf16.msra.mxu0 %v4586
    %4826 = vmatpush.bf16.msra.mxu0 %v4584
    %4827 = vmatpush.bf16.msra.mxu0 %v4582
    %4828 = vmatpush.bf16.msra.mxu0 %v4580
    %4829 = vmatmul.bf16.gmra.mxu0 %v3979
    %v4830 = vpop.f32.mrf.mxu0
    %v4831 = vadd.f32 %v4818, %v4830
    %v4832 = vpop.f32.mrf.mxu0
    %4833 = vdwg.mxu0
    %4834 = vmatpush.bf16.msra.mxu0 %v4610
    %4835 = vmatpush.bf16.msra.mxu0 %v4608
    %4836 = vmatpush.bf16.msra.mxu0 %v4606
    %4837 = vmatpush.bf16.msra.mxu0 %v4604
    %4838 = vmatpush.bf16.msra.mxu0 %v4602
    %4839 = vmatpush.bf16.msra.mxu0 %v4600
    %4840 = vmatpush.bf16.msra.mxu0 %v4598
    %4841 = vmatpush.bf16.msra.mxu0 %v4596
    %4842 = vmatmul.bf16.gmra.mxu0 %v3980
    %v4843 = vpop.f32.mrf.mxu0
    %v4844 = vadd.f32 %v4831, %v4843
    %v4845 = vpop.f32.mrf.mxu0
    %4846 = vdwg.mxu0
    %4847 = vmatpush.bf16.msra.mxu0 %v4626
    %4848 = vmatpush.bf16.msra.mxu0 %v4624
    %4849 = vmatpush.bf16.msra.mxu0 %v4622
    %4850 = vmatpush.bf16.msra.mxu0 %v4620
    %4851 = vmatpush.bf16.msra.mxu0 %v4618
    %4852 = vmatpush.bf16.msra.mxu0 %v4616
    %4853 = vmatpush.bf16.msra.mxu0 %v4614
    %4854 = vmatpush.bf16.msra.mxu0 %v4612
    %4855 = vmatmul.bf16.gmra.mxu0 %v3981
    %v4856 = vpop.f32.mrf.mxu0
    %v4857 = vadd.f32 %v4844, %v4856
    %v4858 = vpop.f32.mrf.mxu0
    %4859 = vdwg.mxu0
    %4860 = vmatpush.bf16.msra.mxu0 %v4515
    %4861 = vmatpush.bf16.msra.mxu0 %v4513
    %4862 = vmatpush.bf16.msra.mxu0 %v4511
    %4863 = vmatpush.bf16.msra.mxu0 %v4509
    %4864 = vmatpush.bf16.msra.mxu0 %v4507
    %4865 = vmatpush.bf16.msra.mxu0 %v4505
    %4866 = vmatpush.bf16.msra.mxu0 %v4503
    %4867 = vmatpush.bf16.msra.mxu0 %v4501
    %4868 = vmatmul.bf16.gmra.mxu0 %v3974
    %v4869 = vpop.f32.mrf.mxu0
    %v4870 = vadd.f32 %v4113, %v4869
    %v4871 = vpop.f32.mrf.mxu0
    %4872 = vdwg.mxu0
    %4873 = vmatpush.bf16.msra.mxu0 %v4531
    %4874 = vmatpush.bf16.msra.mxu0 %v4529
    %4875 = vmatpush.bf16.msra.mxu0 %v4527
    %4876 = vmatpush.bf16.msra.mxu0 %v4525
    %4877 = vmatpush.bf16.msra.mxu0 %v4523
    %4878 = vmatpush.bf16.msra.mxu0 %v4521
    %4879 = vmatpush.bf16.msra.mxu0 %v4519
    %4880 = vmatpush.bf16.msra.mxu0 %v4517
    %4881 = vmatmul.bf16.gmra.mxu0 %v3975
    %v4882 = vpop.f32.mrf.mxu0
    %v4883 = vadd.f32 %v4870, %v4882
    %v4884 = vpop.f32.mrf.mxu0
    %4885 = vdwg.mxu0
    %4886 = vmatpush.bf16.msra.mxu0 %v4547
    %4887 = vmatpush.bf16.msra.mxu0 %v4545
    %4888 = vmatpush.bf16.msra.mxu0 %v4543
    %4889 = vmatpush.bf16.msra.mxu0 %v4541
    %4890 = vmatpush.bf16.msra.mxu0 %v4539
    %4891 = vmatpush.bf16.msra.mxu0 %v4537
    %4892 = vmatpush.bf16.msra.mxu0 %v4535
    %4893 = vmatpush.bf16.msra.mxu0 %v4533
    %4894 = vmatmul.bf16.gmra.mxu0 %v3976
    %v4895 = vpop.f32.mrf.mxu0
    %v4896 = vadd.f32 %v4883, %v4895
    %v4897 = vpop.f32.mrf.mxu0
    %4898 = vdwg.mxu0
    %4899 = vmatpush.bf16.msra.mxu0 %v4563
    %4900 = vmatpush.bf16.msra.mxu0 %v4561
    %4901 = vmatpush.bf16.msra.mxu0 %v4559
    %4902 = vmatpush.bf16.msra.mxu0 %v4557
    %4903 = vmatpush.bf16.msra.mxu0 %v4555
    %4904 = vmatpush.bf16.msra.mxu0 %v4553
    %4905 = vmatpush.bf16.msra.mxu0 %v4551
    %4906 = vmatpush.bf16.msra.mxu0 %v4549
    %4907 = vmatmul.bf16.gmra.mxu0 %v3977
    %v4908 = vpop.f32.mrf.mxu0
    %v4909 = vadd.f32 %v4896, %v4908
    %v4910 = vpop.f32.mrf.mxu0
    %4911 = vdwg.mxu0
    %4912 = vmatpush.bf16.msra.mxu0 %v4579
    %4913 = vmatpush.bf16.msra.mxu0 %v4577
    %4914 = vmatpush.bf16.msra.mxu0 %v4575
    %4915 = vmatpush.bf16.msra.mxu0 %v4573
    %4916 = vmatpush.bf16.msra.mxu0 %v4571
    %4917 = vmatpush.bf16.msra.mxu0 %v4569
    %4918 = vmatpush.bf16.msra.mxu0 %v4567
    %4919 = vmatpush.bf16.msra.mxu0 %v4565
    %4920 = vmatmul.bf16.gmra.mxu0 %v3978
    %v4921 = vpop.f32.mrf.mxu0
    %v4922 = vadd.f32 %v4909, %v4921
    %v4923 = vpop.f32.mrf.mxu0
    %4924 = vdwg.mxu0
    %4925 = vmatpush.bf16.msra.mxu0 %v4595
    %4926 = vmatpush.bf16.msra.mxu0 %v4593
    %4927 = vmatpush.bf16.msra.mxu0 %v4591
    %4928 = vmatpush.bf16.msra.mxu0 %v4589
    %4929 = vmatpush.bf16.msra.mxu0 %v4587
    %4930 = vmatpush.bf16.msra.mxu0 %v4585
    %4931 = vmatpush.bf16.msra.mxu0 %v4583
    %4932 = vmatpush.bf16.msra.mxu0 %v4581
    %4933 = vmatmul.bf16.gmra.mxu0 %v3979
    %v4934 = vpop.f32.mrf.mxu0
    %v4935 = vadd.f32 %v4922, %v4934
    %v4936 = vpop.f32.mrf.mxu0
    %4937 = vdwg.mxu0
    %4938 = vmatpush.bf16.msra.mxu0 %v4611
    %4939 = vmatpush.bf16.msra.mxu0 %v4609
    %4940 = vmatpush.bf16.msra.mxu0 %v4607
    %4941 = vmatpush.bf16.msra.mxu0 %v4605
    %4942 = vmatpush.bf16.msra.mxu0 %v4603
    %4943 = vmatpush.bf16.msra.mxu0 %v4601
    %4944 = vmatpush.bf16.msra.mxu0 %v4599
    %4945 = vmatpush.bf16.msra.mxu0 %v4597
    %4946 = vmatmul.bf16.gmra.mxu0 %v3980
    %v4947 = vpop.f32.mrf.mxu0
    %v4948 = vadd.f32 %v4935, %v4947
    %v4949 = vpop.f32.mrf.mxu0
    %4950 = vdwg.mxu0
    %4951 = vmatpush.bf16.msra.mxu0 %v4627
    %4952 = vmatpush.bf16.msra.mxu0 %v4625
    %4953 = vmatpush.bf16.msra.mxu0 %v4623
    %4954 = vmatpush.bf16.msra.mxu0 %v4621
    %4955 = vmatpush.bf16.msra.mxu0 %v4619
    %4956 = vmatpush.bf16.msra.mxu0 %v4617
    %4957 = vmatpush.bf16.msra.mxu0 %v4615
    %4958 = vmatpush.bf16.msra.mxu0 %v4613
    %4959 = vmatmul.bf16.gmra.mxu0 %v3981
    %v4960 = vpop.f32.mrf.mxu0
    %v4961 = vadd.f32 %v4948, %v4960
    %v4962 = vpop.f32.mrf.mxu0
    %4963 = vdwg.mxu0
    %v4964 = vtanh.pop %v4857
    %v4965 = vtanh.pop %v4961
    %v4968 = vrot.slane %v4965, 6
    %v4969 = vsel %vm419, %v4964, %v4968
    %4971 = vst [vmem:[%s15] sm:$0xf] %v4969
    // Predicated region
    $region106: #{forward.1} parent=1 // pred_check
      _
    $region107: #{forward.1} parent=1 // pred_check_branch
      %4973 = sbr.rel (0) target = $region109
    $region108: #{forward.1} parent=1 // pred_region
      _
    $region109: #{forward.1} parent=1 // pred_fallthru
      _
    // Predicated region
    $region110: #{forward.1} parent=1 // pred_check
      _
    $region111: #{forward.1} parent=1 // pred_check_branch
      %4975 = sbr.rel (0) target = $region113
    $region112: #{forward.1} parent=1 // pred_region
      _
    $region113: #{forward.1} parent=1 // pred_fallthru
      _
    %4976 = vsyncpa [#allocation3], 1
    %4977 = vsyncpa [#allocation5], 1
    %4978 = vsyncpa [#allocation8], 1
    %4979 = vsyncpa [#allocation11], 1
    %4980 = vsyncpa [#allocation14], 1
    %4981 = vsyncpa [#allocation17], 1

</llo_original>
